<compile_context>
chip_gen: v7x
topology: tpu7x:2x2x1
jax: 0.10.0
libtpu: 0.0.40
codegen_flags: <defaults>
</compile_context>

<pallas_src>
import math

import jax
import jax.numpy as jnp
from jax.experimental import pallas as pl
from jax.experimental.pallas import tpu as pltpu


CONFIG = {
    'conditional': False,
    'num_classes': 10,
    'latent_dim': 8,
    'enc_conv_channels': [1, 8, 16],
    'enc_conv_kernel_size': [3, 3],
    'enc_conv_stride': [2, 2],
    'enc_fc_layers': [144, 32, 8],
    'dec_fc_layers': [8, 32, 144],
    'dec_tconv_channels': [16, 8, 1],
    'dec_tconv_kernel_size': [3, 3],
    'dec_tconv_stride': [2, 2],
    'enc_conv_act': 'leaky',
    'enc_fc_mean_act': 'none',
    'enc_fc_log_var_act': 'none',
    'dec_fc_act': 'leaky',
    'dec_tconv_act': 'tanh',
}
# TODO(synk): conditional=True path (label one-hot channel maps / latent concat) not implemented.

_BN_EPS = 1e-5          # nn.BatchNorm2d default
_LEAKY_SLOPE = 0.01     # nn.LeakyReLU default
_LANE = 128


def _round_up(n, m=_LANE):
    return ((n + m - 1) // m) * m


# ----------------------------- in-kernel helpers -----------------------------

def _apply_act(y, act):
    if act == 'leaky':
        return jnp.where(y > 0, y, _LEAKY_SLOPE * y)
    if act == 'tanh':
        return jnp.tanh(y)
    return y                                   # 'none' -> Identity


def _conv_bn_act(a, m, b_ref, pool_ref, bcast_ref, act, cdt):
    """Unrolled (t)conv (bf16 operator matmul, f32 accumulate) + bias +
    BatchNorm2d (training-mode batch stats, gamma=1, beta=0) + activation.

    a: (N, in_pad); output columns are channel-major (c, oh, ow) + zero padding.
    """
    h = jnp.dot(a.astype(cdt), m, preferred_element_type=jnp.float32) + b_ref[...]
    # Fused stats pass: stack E[h], E[h^2] (over batch) into a (2, W) slab and
    # push both through ONE pool matmul + ONE bcast matmul (per-channel stats
    # over batch*spatial).  var = E[x^2] - E[x]^2.
    m1 = jnp.mean(h, axis=0, keepdims=True)            # (1, W)
    m2 = jnp.mean(h * h, axis=0, keepdims=True)        # (1, W)
    row = jax.lax.broadcasted_iota(jnp.int32, (2, h.shape[1]), 0)
    col_stats = jnp.where(row == 0, m1, m2)            # (2, W), VPU-only stack
    full = jnp.dot(
        jnp.dot(col_stats, pool_ref[...], preferred_element_type=jnp.float32),
        bcast_ref[...], preferred_element_type=jnp.float32)        # (2, W)
    mean_full = full[0:1, :]
    var_full = full[1:2, :] - mean_full * mean_full
    return _apply_act((h - mean_full) * jax.lax.rsqrt(var_full + _BN_EPS), act)


def _fc(a, w_ref, b_ref, act, cdt):
    return _apply_act(
        jnp.dot(a.astype(cdt), w_ref[...], preferred_element_type=jnp.float32)
        + b_ref[...], act)


def _make_vae_kernel(meta):
    n_conv, n_head = meta['n_conv'], meta['n_head_fc']
    n_dec, n_tconv = meta['n_dec_fc'], meta['n_tconv']
    act_conv, act_head, act_decfc, act_tconv = meta['acts']
    latent = meta['latent_dim']
    cdt = meta['compute_dtype']
    hbm_flags = list(meta['conv_m_in_hbm']) + list(meta['tconv_m_in_hbm'])
    n_prefetch = sum(hbm_flags)

    def kernel(*refs):
        expected = (2 + 4 * n_conv + 2 * n_head + 2 * n_dec + 4 * n_tconv
                    + 2 + n_prefetch + (1 if n_prefetch else 0))
        assert len(refs) == expected, (len(refs), expected)
        it = iter(refs)
        take = lambda k: tuple(next(it) for _ in range(k))

        x_ref, noise_ref = take(2)
        conv_packs = [take(4) for _ in range(n_conv)]
        head_packs = [take(2) for _ in range(n_head)]
        dec_packs = [take(2) for _ in range(n_dec)]
        tconv_packs = [take(4) for _ in range(n_tconv)]
        img_ref, mulv_ref = take(2)
        bufs = list(take(n_prefetch))
        sem = next(it) if n_prefetch else None

        # Kick off HBM->VMEM prefetches for all later-layer operator matrices so
        # their DMA streams in behind the earlier layers' compute.
        copies = {}
        pf = 0
        all_packs = list(conv_packs) + list(tconv_packs)
        for gi, (pack, in_hbm) in enumerate(zip(all_packs, hbm_flags)):
            if in_hbm:
                cp = pltpu.make_async_copy(pack[0], bufs[pf], sem.at[pf])
                cp.start()
                copies[gi] = (cp, bufs[pf])
                pf += 1

        def operator_matrix(gi, pack):
            if gi in copies:
                cp, buf = copies[gi]
                cp.wait()
                return buf[...]
            return pack[0][...]

        # ---- encoder convs (conv + BN + act fused) ----
        a = x_ref[...]
        for li in range(n_conv):
            pk = conv_packs[li]
            a = _conv_bn_act(a, operator_matrix(li, pk), pk[1], pk[2], pk[3],
                             act_conv, cdt)

        # ---- fused mean|log_var head ([W_mu | W_lv], then block-diagonal) ----
        for (w, b) in head_packs:
            a = _fc(a, w, b, act_head, cdt)
        mulv_ref[...] = a                         # cols [0:L)=mu, [L:2L)=log_var
        mu = a[:, 0:latent]
        lv = a[:, latent:2 * latent]

        # ---- reparameterize: std = exp(log_var) ** 0.5 ----
        z = mu + jnp.exp(0.5 * lv) * noise_ref[...]

        # ---- decoder FCs + transposed convs ----
        d = z
        for (w, b) in dec_packs:
            d = _fc(d, w, b, act_decfc, cdt)
        for li in range(n_tconv):
            pk = tconv_packs[li]
            d = _conv_bn_act(d, operator_matrix(n_conv + li, pk), pk[1], pk[2], pk[3],
                             act_tconv, cdt)
        img_ref[...] = d

    return kernel


# ------------------------ init-time conv helpers (host) ----------------------

def _conv2d_nobias(x, w, stride, pet=None):
    """PyTorch Conv2d (valid padding), w: (Cout, Cin, kh, kw)."""
    return jax.lax.conv_general_dilated(
        x, w, window_strides=(stride, stride), padding='VALID',
        dimension_numbers=('NCHW', 'OIHW', 'NCHW'), preferred_element_type=pet)


def _tconv2d_nobias(x, w, stride, pet=None):
    """PyTorch ConvTranspose2d (padding=0, output_padding=0), w: (Cin, Cout, kh, kw)."""
    kh, kw = w.shape[2], w.shape[3]
    w_conv = jnp.flip(w, axis=(2, 3)).transpose(1, 0, 2, 3)      # (Cout, Cin, kh, kw)
    return jax.lax.conv_general_dilated(
        x, w_conv, window_strides=(1, 1),
        padding=((kh - 1, kh - 1), (kw - 1, kw - 1)),
        lhs_dilation=(stride, stride),
        dimension_numbers=('NCHW', 'OIHW', 'NCHW'), preferred_element_type=pet)


def _linear_operator_matrix(apply_fn, in_chw):
    """Dense M s.t. x.reshape(N,-1) @ M == apply_fn(x).reshape(N,-1), via identity probes."""
    c, h, w = in_chw
    k = c * h * w
    probes = jnp.eye(k, dtype=jnp.float32).reshape(k, c, h, w)
    out = apply_fn(probes)                                       # (k, Cout, OH, OW)
    cout, oh, ow = out.shape[1], out.shape[2], out.shape[3]
    return out.reshape(k, cout * oh * ow), (cout, oh, ow)


def _block_diag(a, b):
    out = jnp.zeros((a.shape[0] + b.shape[0], a.shape[1] + b.shape[1]), a.dtype)
    out = out.at[:a.shape[0], :a.shape[1]].set(a)
    out = out.at[a.shape[0]:, a.shape[1]:].set(b)
    return out


# ------------------------------- parameters ----------------------------------

def init_params(config, key):
    """Raw PyTorch-layout parameters (conv OIHW, tconv IOHW, FC (in,out))."""
    params = {'enc_conv': [], 'enc_mean_fc': [], 'enc_logvar_fc': [],
              'dec_fc': [], 'dec_tconv': []}

    def nxt():
        nonlocal key
        key, sub = jax.random.split(key)
        return sub

    cc = config['enc_conv_channels']
    for i, k in enumerate(config['enc_conv_kernel_size']):
        w = 0.1 * jax.random.normal(nxt(), (cc[i + 1], cc[i], k, k), jnp.float32)
        b = 0.05 * jax.random.normal(nxt(), (cc[i + 1],), jnp.float32)
        params['enc_conv'].append((w, b))

    def fc_stack(layers):
        stack = []
        for i in range(len(layers) - 1):
            w = 0.1 * jax.random.normal(nxt(), (layers[i], layers[i + 1]), jnp.float32)
            b = 0.05 * jax.random.normal(nxt(), (layers[i + 1],), jnp.float32)
            stack.append((w, b))
        return stack

    params['enc_mean_fc'] = fc_stack(config['enc_fc_layers'])
    params['enc_logvar_fc'] = fc_stack(config['enc_fc_layers'])
    params['dec_fc'] = fc_stack(config['dec_fc_layers'])

    tc = config['dec_tconv_channels']
    for i, k in enumerate(config['dec_tconv_kernel_size']):
        w = 0.1 * jax.random.normal(nxt(), (tc[i], tc[i + 1], k, k), jnp.float32)  # (Cin,Cout,kh,kw)
        b = 0.05 * jax.random.normal(nxt(), (tc[i + 1],), jnp.float32)
        params['dec_tconv'].append((w, b))
    return params


def pack_params(params, config, input_hw, compute_dtype=jnp.bfloat16):
    """One-time packing (hoisted off the forward path): fold every conv/tconv
    into a dense operator matrix (bf16, lane-padded), fuse the mean/log_var FC
    heads, broadcast biases over spatial, and precompute the BN pooling /
    broadcast matrices.  Returns (flat operand tuple in kernel order, meta)."""
    assert not config['conditional'], "conditional path not implemented"
    cdt = jnp.dtype(compute_dtype)
    latent = config['latent_dim']

    operands, operand_spaces, prefetch_shapes = [], [], []
    conv_m_in_hbm, tconv_m_in_hbm = [], []
    mm_flops_per_row = 0
    fixed_flops = 0
    transc_per_row = 0

    def add_conv_like(weight_bias, stride, chw, in_pad, transposed, m_in_hbm):
        nonlocal mm_flops_per_row, fixed_flops, transc_per_row
        w, b = weight_bias
        fn = (lambda xx: _tconv2d_nobias(xx, w, stride)) if transposed \
            else (lambda xx: _conv2d_nobias(xx, w, stride))
        m, out_chw = _linear_operator_matrix(fn, chw)            # (Cin*H*W, Cout*S)
        cout, oh, ow = out_chw
        s = oh * ow
        cols = cout * s
        cols_pad = _round_up(cols)
        m = jnp.pad(m, ((0, in_pad - m.shape[0]), (0, cols_pad - cols))).astype(cdt)
        bias = jnp.pad(jnp.repeat(b, s), (0, cols_pad - cols))[None, :].astype(jnp.float32)
        eye = jnp.eye(cout, dtype=jnp.float32)
        pool = jnp.pad(jnp.repeat(eye, s, axis=0) / s,
                       ((0, cols_pad - cols), (0, 0)))           # (cols_pad, Cout)
        bcast = jnp.pad(jnp.repeat(eye, s, axis=1),
                        ((0, 0), (0, cols_pad - cols)))          # (Cout, cols_pad)
        operands.extend([m, bias, pool, bcast])
        operand_spaces.extend(['hbm' if m_in_hbm else 'vmem', 'vmem', 'vmem', 'vmem'])
        if m_in_hbm:
            prefetch_shapes.append(tuple(m.shape))
        mm_flops_per_row += 2 * m.shape[0] * m.shape[1]
        fixed_flops += 2 * 2 * cols_pad * cout * 2               # pool + bcast matmuls
        transc_per_row += cols_pad
        return out_chw, cols_pad

    def add_fc(w, b, rows_pad):
        nonlocal mm_flops_per_row
        cols = w.shape[1]
        cols_pad = _round_up(cols)
        wf = jnp.pad(w, ((0, rows_pad - w.shape[0]), (0, cols_pad - cols))).astype(cdt)
        bf = jnp.pad(b, (0, cols_pad - cols))[None, :].astype(jnp.float32)
        operands.extend([wf, bf])
        operand_spaces.extend(['vmem', 'vmem'])
        mm_flops_per_row += 2 * wf.shape[0] * wf.shape[1]
        return cols_pad

    # ---- encoder convs ----
    h0, w0 = input_hw
    chw = (config['enc_conv_channels'][0], h0, w0)
    in_cols = chw[0] * chw[1] * chw[2]
    in_cols_padded = _round_up(in_cols)
    in_pad = in_cols_padded
    for li, (wb, st) in enumerate(zip(params['enc_conv'], config['enc_conv_stride'])):
        m_in_hbm = li > 0        # first conv's pack gates kernel start; the rest are prefetched
        conv_m_in_hbm.append(m_in_hbm)
        chw, in_pad = add_conv_like(wb, st, chw, in_pad, transposed=False, m_in_hbm=m_in_hbm)
    enc_flat = chw[0] * chw[1] * chw[2]
    assert enc_flat == config['enc_fc_layers'][0], (enc_flat, config['enc_fc_layers'][0])

    # ---- fused mean | log_var FC head ----
    assert config['enc_fc_mean_act'] == config['enc_fc_log_var_act'], \
        "fused head requires identical mean / log_var activations"
    # TODO(synk): support differing mean/log_var head activations (apply per column block).
    head_pad = in_pad
    for j, ((w_mu, b_mu), (w_lv, b_lv)) in enumerate(
            zip(params['enc_mean_fc'], params['enc_logvar_fc'])):
        wf = jnp.concatenate([w_mu, w_lv], axis=1) if j == 0 else _block_diag(w_mu, w_lv)
        bf = jnp.concatenate([b_mu, b_lv], axis=0)
        head_pad = add_fc(wf, bf, head_pad)
    mulv_cols_padded = head_pad

    # ---- decoder FCs ----
    dec_pad = latent                             # z enters at exactly `latent` columns
    for (w, b) in params['dec_fc']:
        dec_pad = add_fc(w, b, dec_pad)

    # ---- decoder transposed convs ----
    c0 = config['dec_tconv_channels'][0]
    spatial = int(round(math.sqrt(config['dec_fc_layers'][-1] / c0)))
    chw = (c0, spatial, spatial)
    in_pad = dec_pad
    for wb, st in zip(params['dec_tconv'], config['dec_tconv_stride']):
        tconv_m_in_hbm.append(True)              # decoder convs run late -> DMA fully hidden
        chw, in_pad = add_conv_like(wb, st, chw, in_pad, transposed=True, m_in_hbm=True)

    meta = {
        'n_conv': len(params['enc_conv']),
        'n_head_fc': len(params['enc_mean_fc']),
        'n_dec_fc': len(params['dec_fc']),
        'n_tconv': len(params['dec_tconv']),
        'acts': (config['enc_conv_act'], config['enc_fc_mean_act'],
                 config['dec_fc_act'], config['dec_tconv_act']),
        'conv_m_in_hbm': conv_m_in_hbm,
        'tconv_m_in_hbm': tconv_m_in_hbm,
        'prefetch_shapes': prefetch_shapes,
        'operand_spaces': operand_spaces,
        'compute_dtype': cdt,
        'latent_dim': latent,
        'out_chw': chw,
        'img_cols_padded': in_pad,
        'mulv_cols_padded': mulv_cols_padded,
        'in_cols': in_cols,
        'in_cols_padded': in_cols_padded,
        'mm_flops_per_row': int(mm_flops_per_row),
        'fixed_flops': int(fixed_flops),
        'transc_per_row': int(latent + transc_per_row),
        'param_bytes': int(sum(int(op.size) * op.dtype.itemsize for op in operands)),
    }
    return tuple(operands), meta


# ------------------------------ fused forward ---------------------------------

def build_vae_forward(meta):
    kernel = _make_vae_kernel(meta)
    out_c, out_h, out_w = meta['out_chw']
    img_cols = out_c * out_h * out_w
    img_pad = meta['img_cols_padded']
    mulv_pad = meta['mulv_cols_padded']
    latent = meta['latent_dim']
    cdt = meta['compute_dtype']
    in_cols, in_pad = meta['in_cols'], meta['in_cols_padded']

    vmem = pl.BlockSpec(memory_space=pltpu.MemorySpace.VMEM)
    hbm = pl.BlockSpec(memory_space=pl.ANY)
    op_specs = [hbm if s == 'hbm' else vmem for s in meta['operand_spaces']]

    scratch = [pltpu.VMEM(shape, cdt) for shape in meta['prefetch_shapes']]
    if scratch:
        scratch.append(pltpu.SemaphoreType.DMA((len(meta['prefetch_shapes']),)))

    @jax.jit
    def forward(packed_ops, x, noise):
        n = x.shape[0]
        x_flat = x.reshape(n, -1)                  # NCHW flatten == PyTorch reshape
        if in_pad > in_cols:
            x_flat = jnp.pad(x_flat, ((0, 0), (0, in_pad - in_cols)))
        ops = (x_flat, noise) + tuple(packed_ops)
        cost = pl.CostEstimate(
            flops=n * meta['mm_flops_per_row'] + meta['fixed_flops'],
            transcendentals=n * meta['transc_per_row'],
            bytes_accessed=meta['param_bytes']
            + 4 * n * (in_pad + latent + img_pad + mulv_pad),
        )
        img_p, mulv = pl.pallas_call(
            kernel,
            out_shape=(
                jax.ShapeDtypeStruct((n, img_pad), jnp.float32),
                jax.ShapeDtypeStruct((n, mulv_pad), jnp.float32),
            ),
            in_specs=[vmem, vmem] + op_specs,
            out_specs=(vmem, vmem),
            scratch_shapes=tuple(scratch),
            cost_estimate=cost,
        )(*ops)
        img = img_p[:, :img_cols].reshape(n, out_c, out_h, out_w)
        return img, mulv[:, :latent], mulv[:, latent:2 * latent]

    return forward


# ------------------------- pure-JAX reference (check) --------------------------

def _ref_bn(y, eps=_BN_EPS):
    mean = jnp.mean(y, axis=(0, 2, 3), keepdims=True)
    var = jnp.mean(jnp.square(y - mean), axis=(0, 2, 3), keepdims=True)
    return (y - mean) * jax.lax.rsqrt(var + eps)


def vae_reference(params, config, x, noise, emulate_dtype=None):
    """Pure-JAX NCHW reference of the PyTorch forward.  With
    emulate_dtype=jnp.bfloat16 the matmul/conv operands are cast exactly like
    the fused kernel does (f32 accumulation), so the kernel's structural math
    can be validated at tight tolerance."""
    def cast(a):
        return a if emulate_dtype is None else a.astype(emulate_dtype)
    pet = None if emulate_dtype is None else jnp.float32

    def dense(a, w):
        return jnp.dot(cast(a), cast(w), preferred_element_type=pet)

    out = x
    for (w, b), s in zip(params['enc_conv'], config['enc_conv_stride']):
        out = _conv2d_nobias(cast(out), cast(w), s, pet=pet) + b[None, :, None, None]
        out = _apply_act(_ref_bn(out), config['enc_conv_act'])
    out = out.reshape(x.shape[0], -1)
    mu = out
    for (w, b) in params['enc_mean_fc']:
        mu = _apply_act(dense(mu, w) + b, config['enc_fc_mean_act'])
    lv = out
    for (w, b) in params['enc_logvar_fc']:
        lv = _apply_act(dense(lv, w) + b, config['enc_fc_log_var_act'])
    z = mu + jnp.exp(0.5 * lv) * noise
    d = z
    for (w, b) in params['dec_fc']:
        d = _apply_act(dense(d, w) + b, config['dec_fc_act'])
    c0 = config['dec_tconv_channels'][0]
    sp = int(round(math.sqrt(d.shape[1] / c0)))
    d = d.reshape(x.shape[0], c0, sp, sp)
    for (w, b), s in zip(params['dec_tconv'], config['dec_tconv_stride']):
        d = _tconv2d_nobias(cast(d), cast(w), s, pet=pet) + b[None, :, None, None]
        d = _apply_act(_ref_bn(d), config['dec_tconv_act'])
    return d, mu, lv


# ----------------------------------- driver ------------------------------------

if __name__ == "__main__":
    key = jax.random.PRNGKey(0)
    k_x, k_params, k_noise = jax.random.split(key, 3)

    x = jax.random.normal(k_x, (2, 1, 16, 16), jnp.float32)     # NCHW like PyTorch input
    params = init_params(CONFIG, k_params)

    packed_ops, meta = pack_params(params, CONFIG, input_hw=(16, 16),
                                   compute_dtype=jnp.bfloat16)
    vae_forward = build_vae_forward(meta)

    noise = jax.random.normal(k_noise, (2, CONFIG['latent_dim']), jnp.float32)
    final_out, out_mean, out_log_var = vae_forward(packed_ops, x, noise)
    jax.block_until_ready(final_out)
    jax.block_until_ready(out_mean)
    jax.block_until_ready(out_log_var)

    assert final_out.shape == (2, 1, 15, 15), final_out.shape
    assert out_mean.shape == (2, CONFIG['latent_dim'])
    assert out_log_var.shape == (2, CONFIG['latent_dim'])

    # (1) Tight structural check: reference that emulates the kernel's bf16
    #     weight/activation numerics (f32 accumulation) must match closely.
    ref_out_m, ref_mean_m, ref_lv_m = vae_reference(
        params, CONFIG, x, noise, emulate_dtype=jnp.bfloat16)
    for got, ref in ((final_out, ref_out_m), (out_mean, ref_mean_m),
                     (out_log_var, ref_lv_m)):
        assert jnp.allclose(got, ref, atol=5e-3, rtol=5e-3), \
            float(jnp.max(jnp.abs(got - ref)))

    # (2) Loose drift bound vs. the pure-f32 reference: the only expected gap is
    #     the deliberate bf16 weight/activation quantization (typically < 5e-2).
    ref_out, ref_mean, ref_lv = vae_reference(params, CONFIG, x, noise)
    assert jnp.allclose(final_out, ref_out, atol=1e-1, rtol=1e-1), \
        float(jnp.max(jnp.abs(final_out - ref_out)))
    assert jnp.allclose(out_mean, ref_mean, atol=1e-1, rtol=1e-1)
    assert jnp.allclose(out_log_var, ref_lv, atol=1e-1, rtol=1e-1)

    print("KERNEL_OK")
</pallas_src>

<mosaic_0001>
module attributes {stable_mosaic.version = 11 : i64} {
  func.func @kernel(%arg0: memref<2x256xf32, #tpu.memory_space<vmem>>, %arg1: memref<2x8xf32, #tpu.memory_space<vmem>>, %arg2: memref<256x512xbf16, #tpu.memory_space<vmem>>, %arg3: memref<1x512xf32, #tpu.memory_space<vmem>>, %arg4: memref<512x8xf32, #tpu.memory_space<vmem>>, %arg5: memref<8x512xf32, #tpu.memory_space<vmem>>, %arg6: memref<512x256xbf16, #tpu.memory_space<any>>, %arg7: memref<1x256xf32, #tpu.memory_space<vmem>>, %arg8: memref<256x16xf32, #tpu.memory_space<vmem>>, %arg9: memref<16x256xf32, #tpu.memory_space<vmem>>, %arg10: memref<256x128xbf16, #tpu.memory_space<vmem>>, %arg11: memref<1x128xf32, #tpu.memory_space<vmem>>, %arg12: memref<128x128xbf16, #tpu.memory_space<vmem>>, %arg13: memref<1x128xf32, #tpu.memory_space<vmem>>, %arg14: memref<8x128xbf16, #tpu.memory_space<vmem>>, %arg15: memref<1x128xf32, #tpu.memory_space<vmem>>, %arg16: memref<128x256xbf16, #tpu.memory_space<vmem>>, %arg17: memref<1x256xf32, #tpu.memory_space<vmem>>, %arg18: memref<256x512xbf16, #tpu.memory_space<any>>, %arg19: memref<1x512xf32, #tpu.memory_space<vmem>>, %arg20: memref<512x8xf32, #tpu.memory_space<vmem>>, %arg21: memref<8x512xf32, #tpu.memory_space<vmem>>, %arg22: memref<512x256xbf16, #tpu.memory_space<any>>, %arg23: memref<1x256xf32, #tpu.memory_space<vmem>>, %arg24: memref<256x1xf32, #tpu.memory_space<vmem>>, %arg25: memref<1x256xf32, #tpu.memory_space<vmem>>, %arg26: memref<2x256xf32, #tpu.memory_space<vmem>>, %arg27: memref<2x128xf32, #tpu.memory_space<vmem>>, %arg28: memref<512x256xbf16, #tpu.memory_space<vmem>>, %arg29: memref<256x512xbf16, #tpu.memory_space<vmem>>, %arg30: memref<512x256xbf16, #tpu.memory_space<vmem>>, %arg31: memref<3x!tpu.dma_semaphore, #tpu.memory_space<semaphore_mem>>) attributes {dimension_semantics = [], scalar_prefetch = 0 : i64, scratch_operands = 4 : i64, tpu.core_type = #tpu.core_type<tc>} {
    %c0_i32 = arith.constant 0 : i32
    %0 = tpu.memref_slice %arg31[%c0_i32] : memref<3x!tpu.dma_semaphore, #tpu.memory_space<semaphore_mem>> -> memref<1x!tpu.dma_semaphore, #tpu.memory_space<semaphore_mem>>
    %1 = tpu.memref_squeeze %0 : memref<1x!tpu.dma_semaphore, #tpu.memory_space<semaphore_mem>> -> memref<!tpu.dma_semaphore, #tpu.memory_space<semaphore_mem>>
    tpu.enqueue_dma source(%arg6 : memref<512x256xbf16, #tpu.memory_space<any>>) target(%arg28 : memref<512x256xbf16, #tpu.memory_space<vmem>>) target_semaphore(%1 : memref<!tpu.dma_semaphore, #tpu.memory_space<semaphore_mem>>)
    %c1_i32 = arith.constant 1 : i32
    %2 = tpu.memref_slice %arg31[%c1_i32] : memref<3x!tpu.dma_semaphore, #tpu.memory_space<semaphore_mem>> -> memref<1x!tpu.dma_semaphore, #tpu.memory_space<semaphore_mem>>
    %3 = tpu.memref_squeeze %2 : memref<1x!tpu.dma_semaphore, #tpu.memory_space<semaphore_mem>> -> memref<!tpu.dma_semaphore, #tpu.memory_space<semaphore_mem>>
    tpu.enqueue_dma source(%arg18 : memref<256x512xbf16, #tpu.memory_space<any>>) target(%arg29 : memref<256x512xbf16, #tpu.memory_space<vmem>>) target_semaphore(%3 : memref<!tpu.dma_semaphore, #tpu.memory_space<semaphore_mem>>)
    %c2_i32 = arith.constant 2 : i32
    %4 = tpu.memref_slice %arg31[%c2_i32] : memref<3x!tpu.dma_semaphore, #tpu.memory_space<semaphore_mem>> -> memref<1x!tpu.dma_semaphore, #tpu.memory_space<semaphore_mem>>
    %5 = tpu.memref_squeeze %4 : memref<1x!tpu.dma_semaphore, #tpu.memory_space<semaphore_mem>> -> memref<!tpu.dma_semaphore, #tpu.memory_space<semaphore_mem>>
    tpu.enqueue_dma source(%arg22 : memref<512x256xbf16, #tpu.memory_space<any>>) target(%arg30 : memref<512x256xbf16, #tpu.memory_space<vmem>>) target_semaphore(%5 : memref<!tpu.dma_semaphore, #tpu.memory_space<semaphore_mem>>)
    %c0 = arith.constant 0 : index
    %c0_0 = arith.constant 0 : index
    %6 = vector.load %arg0[%c0, %c0_0] : memref<2x256xf32, #tpu.memory_space<vmem>>, vector<2x256xf32>
    %c0_1 = arith.constant 0 : index
    %c0_2 = arith.constant 0 : index
    %7 = vector.load %arg2[%c0_1, %c0_2] : memref<256x512xbf16, #tpu.memory_space<vmem>>, vector<256x512xbf16>
    %8 = arith.truncf %6 : vector<2x256xf32> to vector<2x256xbf16>
    %cst = arith.constant dense<0.000000e+00> : vector<2x512xf32>
    %9 = tpu.matmul %8, %7, %cst {dimension_numbers = #tpu.dot_dimension_numbers<[1], [0], [0], [1], [0, 0, 1, 1], [], []>} : vector<2x256xbf16>, vector<256x512xbf16>, vector<2x512xf32> -> vector<2x512xf32>
    %c0_3 = arith.constant 0 : index
    %c0_4 = arith.constant 0 : index
    %10 = vector.load %arg3[%c0_3, %c0_4] : memref<1x512xf32, #tpu.memory_space<vmem>>, vector<1x512xf32>
    %11 = vector.broadcast %10 : vector<1x512xf32> to vector<2x512xf32>
    %12 = arith.addf %9, %11 : vector<2x512xf32>
    %cst_5 = arith.constant dense<0.000000e+00> : vector<512xf32>
    %13 = vector.multi_reduction <add>, %12, %cst_5 [0] : vector<2x512xf32> to vector<512xf32>
    %14 = vector.shape_cast %13 : vector<512xf32> to vector<1x512xf32>
    %cst_6 = arith.constant 2.000000e+00 : f32
    %15 = vector.broadcast %cst_6 : f32 to vector<1x512xf32>
    %16 = arith.divf %14, %15 : vector<1x512xf32>
    %17 = arith.mulf %12, %12 : vector<2x512xf32>
    %cst_7 = arith.constant dense<0.000000e+00> : vector<512xf32>
    %18 = vector.multi_reduction <add>, %17, %cst_7 [0] : vector<2x512xf32> to vector<512xf32>
    %19 = vector.shape_cast %18 : vector<512xf32> to vector<1x512xf32>
    %cst_8 = arith.constant 2.000000e+00 : f32
    %20 = vector.broadcast %cst_8 : f32 to vector<1x512xf32>
    %21 = arith.divf %19, %20 : vector<1x512xf32>
    %22 = tpu.iota {dimensions = array<i32: 0>} : vector<2x512xi32>
    %c0_i32_9 = arith.constant 0 : i32
    %23 = vector.broadcast %c0_i32_9 : i32 to vector<2x512xi32>
    %24 = arith.cmpi eq, %22, %23 : vector<2x512xi32>
    %25 = vector.shape_cast %16 : vector<1x512xf32> to vector<1x512xf32>
    %26 = vector.broadcast %25 : vector<1x512xf32> to vector<2x512xf32>
    %27 = vector.shape_cast %21 : vector<1x512xf32> to vector<1x512xf32>
    %28 = vector.broadcast %27 : vector<1x512xf32> to vector<2x512xf32>
    %29 = arith.select %24, %26, %28 : vector<2x512xi1>, vector<2x512xf32>
    %c0_10 = arith.constant 0 : index
    %c0_11 = arith.constant 0 : index
    %30 = vector.load %arg4[%c0_10, %c0_11] : memref<512x8xf32, #tpu.memory_space<vmem>>, vector<512x8xf32>
    %cst_12 = arith.constant dense<0.000000e+00> : vector<2x8xf32>
    %31 = tpu.matmul %29, %30, %cst_12 {dimension_numbers = #tpu.dot_dimension_numbers<[1], [0], [0], [1], [0, 0, 1, 1], [], []>} : vector<2x512xf32>, vector<512x8xf32>, vector<2x8xf32> -> vector<2x8xf32>
    %c0_13 = arith.constant 0 : index
    %c0_14 = arith.constant 0 : index
    %32 = vector.load %arg5[%c0_13, %c0_14] : memref<8x512xf32, #tpu.memory_space<vmem>>, vector<8x512xf32>
    %cst_15 = arith.constant dense<0.000000e+00> : vector<2x512xf32>
    %33 = tpu.matmul %31, %32, %cst_15 {dimension_numbers = #tpu.dot_dimension_numbers<[1], [0], [0], [1], [0, 0, 1, 1], [], []>} : vector<2x8xf32>, vector<8x512xf32>, vector<2x512xf32> -> vector<2x512xf32>
    %34 = vector.extract_strided_slice %33 {offsets = [0, 0], sizes = [1, 512], strides = [1, 1]} : vector<2x512xf32> to vector<1x512xf32>
    %35 = vector.extract_strided_slice %33 {offsets = [1, 0], sizes = [1, 512], strides = [1, 1]} : vector<2x512xf32> to vector<1x512xf32>
    %36 = arith.mulf %34, %34 : vector<1x512xf32>
    %37 = arith.subf %35, %36 : vector<1x512xf32>
    %38 = vector.broadcast %34 : vector<1x512xf32> to vector<2x512xf32>
    %39 = arith.subf %12, %38 : vector<2x512xf32>
    %cst_16 = arith.constant 9.99999974E-6 : f32
    %40 = vector.broadcast %cst_16 : f32 to vector<1x512xf32>
    %41 = arith.addf %37, %40 : vector<1x512xf32>
    %42 = math.rsqrt %41 : vector<1x512xf32>
    %43 = vector.broadcast %42 : vector<1x512xf32> to vector<2x512xf32>
    %44 = arith.mulf %39, %43 : vector<2x512xf32>
    %cst_17 = arith.constant 0.000000e+00 : f32
    %45 = vector.broadcast %cst_17 : f32 to vector<2x512xf32>
    %46 = arith.cmpf ogt, %44, %45 : vector<2x512xf32>
    %cst_18 = arith.constant 0.00999999977 : f32
    %47 = vector.broadcast %cst_18 : f32 to vector<2x512xf32>
    %48 = arith.mulf %47, %44 : vector<2x512xf32>
    %49 = arith.select %46, %44, %48 : vector<2x512xi1>, vector<2x512xf32>
    %c0_i32_19 = arith.constant 0 : i32
    %50 = tpu.memref_slice %arg31[%c0_i32_19] : memref<3x!tpu.dma_semaphore, #tpu.memory_space<semaphore_mem>> -> memref<1x!tpu.dma_semaphore, #tpu.memory_space<semaphore_mem>>
    %51 = tpu.memref_squeeze %50 : memref<1x!tpu.dma_semaphore, #tpu.memory_space<semaphore_mem>> -> memref<!tpu.dma_semaphore, #tpu.memory_space<semaphore_mem>>
    tpu.wait_dma2 semaphore(%51 : memref<!tpu.dma_semaphore, #tpu.memory_space<semaphore_mem>>) src(%arg6 : memref<512x256xbf16, #tpu.memory_space<any>>) dst(%arg28 : memref<512x256xbf16, #tpu.memory_space<vmem>>)
    %c0_20 = arith.constant 0 : index
    %c0_21 = arith.constant 0 : index
    %52 = vector.load %arg28[%c0_20, %c0_21] : memref<512x256xbf16, #tpu.memory_space<vmem>>, vector<512x256xbf16>
    %53 = arith.truncf %49 : vector<2x512xf32> to vector<2x512xbf16>
    %cst_22 = arith.constant dense<0.000000e+00> : vector<2x256xf32>
    %54 = tpu.matmul %53, %52, %cst_22 {dimension_numbers = #tpu.dot_dimension_numbers<[1], [0], [0], [1], [0, 0, 1, 1], [], []>} : vector<2x512xbf16>, vector<512x256xbf16>, vector<2x256xf32> -> vector<2x256xf32>
    %c0_23 = arith.constant 0 : index
    %c0_24 = arith.constant 0 : index
    %55 = vector.load %arg7[%c0_23, %c0_24] : memref<1x256xf32, #tpu.memory_space<vmem>>, vector<1x256xf32>
    %56 = vector.broadcast %55 : vector<1x256xf32> to vector<2x256xf32>
    %57 = arith.addf %54, %56 : vector<2x256xf32>
    %cst_25 = arith.constant dense<0.000000e+00> : vector<256xf32>
    %58 = vector.multi_reduction <add>, %57, %cst_25 [0] : vector<2x256xf32> to vector<256xf32>
    %59 = vector.shape_cast %58 : vector<256xf32> to vector<1x256xf32>
    %cst_26 = arith.constant 2.000000e+00 : f32
    %60 = vector.broadcast %cst_26 : f32 to vector<1x256xf32>
    %61 = arith.divf %59, %60 : vector<1x256xf32>
    %62 = arith.mulf %57, %57 : vector<2x256xf32>
    %cst_27 = arith.constant dense<0.000000e+00> : vector<256xf32>
    %63 = vector.multi_reduction <add>, %62, %cst_27 [0] : vector<2x256xf32> to vector<256xf32>
    %64 = vector.shape_cast %63 : vector<256xf32> to vector<1x256xf32>
    %cst_28 = arith.constant 2.000000e+00 : f32
    %65 = vector.broadcast %cst_28 : f32 to vector<1x256xf32>
    %66 = arith.divf %64, %65 : vector<1x256xf32>
    %67 = tpu.iota {dimensions = array<i32: 0>} : vector<2x256xi32>
    %c0_i32_29 = arith.constant 0 : i32
    %68 = vector.broadcast %c0_i32_29 : i32 to vector<2x256xi32>
    %69 = arith.cmpi eq, %67, %68 : vector<2x256xi32>
    %70 = vector.shape_cast %61 : vector<1x256xf32> to vector<1x256xf32>
    %71 = vector.broadcast %70 : vector<1x256xf32> to vector<2x256xf32>
    %72 = vector.shape_cast %66 : vector<1x256xf32> to vector<1x256xf32>
    %73 = vector.broadcast %72 : vector<1x256xf32> to vector<2x256xf32>
    %74 = arith.select %69, %71, %73 : vector<2x256xi1>, vector<2x256xf32>
    %c0_30 = arith.constant 0 : index
    %c0_31 = arith.constant 0 : index
    %75 = vector.load %arg8[%c0_30, %c0_31] : memref<256x16xf32, #tpu.memory_space<vmem>>, vector<256x16xf32>
    %cst_32 = arith.constant dense<0.000000e+00> : vector<2x16xf32>
    %76 = tpu.matmul %74, %75, %cst_32 {dimension_numbers = #tpu.dot_dimension_numbers<[1], [0], [0], [1], [0, 0, 1, 1], [], []>} : vector<2x256xf32>, vector<256x16xf32>, vector<2x16xf32> -> vector<2x16xf32>
    %c0_33 = arith.constant 0 : index
    %c0_34 = arith.constant 0 : index
    %77 = vector.load %arg9[%c0_33, %c0_34] : memref<16x256xf32, #tpu.memory_space<vmem>>, vector<16x256xf32>
    %cst_35 = arith.constant dense<0.000000e+00> : vector<2x256xf32>
    %78 = tpu.matmul %76, %77, %cst_35 {dimension_numbers = #tpu.dot_dimension_numbers<[1], [0], [0], [1], [0, 0, 1, 1], [], []>} : vector<2x16xf32>, vector<16x256xf32>, vector<2x256xf32> -> vector<2x256xf32>
    %79 = vector.extract_strided_slice %78 {offsets = [0, 0], sizes = [1, 256], strides = [1, 1]} : vector<2x256xf32> to vector<1x256xf32>
    %80 = vector.extract_strided_slice %78 {offsets = [1, 0], sizes = [1, 256], strides = [1, 1]} : vector<2x256xf32> to vector<1x256xf32>
    %81 = arith.mulf %79, %79 : vector<1x256xf32>
    %82 = arith.subf %80, %81 : vector<1x256xf32>
    %83 = vector.broadcast %79 : vector<1x256xf32> to vector<2x256xf32>
    %84 = arith.subf %57, %83 : vector<2x256xf32>
    %cst_36 = arith.constant 9.99999974E-6 : f32
    %85 = vector.broadcast %cst_36 : f32 to vector<1x256xf32>
    %86 = arith.addf %82, %85 : vector<1x256xf32>
    %87 = math.rsqrt %86 : vector<1x256xf32>
    %88 = vector.broadcast %87 : vector<1x256xf32> to vector<2x256xf32>
    %89 = arith.mulf %84, %88 : vector<2x256xf32>
    %cst_37 = arith.constant 0.000000e+00 : f32
    %90 = vector.broadcast %cst_37 : f32 to vector<2x256xf32>
    %91 = arith.cmpf ogt, %89, %90 : vector<2x256xf32>
    %cst_38 = arith.constant 0.00999999977 : f32
    %92 = vector.broadcast %cst_38 : f32 to vector<2x256xf32>
    %93 = arith.mulf %92, %89 : vector<2x256xf32>
    %94 = arith.select %91, %89, %93 : vector<2x256xi1>, vector<2x256xf32>
    %95 = arith.truncf %94 : vector<2x256xf32> to vector<2x256xbf16>
    %c0_39 = arith.constant 0 : index
    %c0_40 = arith.constant 0 : index
    %96 = vector.load %arg10[%c0_39, %c0_40] : memref<256x128xbf16, #tpu.memory_space<vmem>>, vector<256x128xbf16>
    %cst_41 = arith.constant dense<0.000000e+00> : vector<2x128xf32>
    %97 = tpu.matmul %95, %96, %cst_41 {dimension_numbers = #tpu.dot_dimension_numbers<[1], [0], [0], [1], [0, 0, 1, 1], [], []>} : vector<2x256xbf16>, vector<256x128xbf16>, vector<2x128xf32> -> vector<2x128xf32>
    %c0_42 = arith.constant 0 : index
    %c0_43 = arith.constant 0 : index
    %98 = vector.load %arg11[%c0_42, %c0_43] : memref<1x128xf32, #tpu.memory_space<vmem>>, vector<1x128xf32>
    %99 = vector.broadcast %98 : vector<1x128xf32> to vector<2x128xf32>
    %100 = arith.addf %97, %99 : vector<2x128xf32>
    %101 = arith.truncf %100 : vector<2x128xf32> to vector<2x128xbf16>
    %c0_44 = arith.constant 0 : index
    %c0_45 = arith.constant 0 : index
    %102 = vector.load %arg12[%c0_44, %c0_45] : memref<128x128xbf16, #tpu.memory_space<vmem>>, vector<128x128xbf16>
    %cst_46 = arith.constant dense<0.000000e+00> : vector<2x128xf32>
    %103 = tpu.matmul %101, %102, %cst_46 {dimension_numbers = #tpu.dot_dimension_numbers<[1], [0], [0], [1], [0, 0, 1, 1], [], []>} : vector<2x128xbf16>, vector<128x128xbf16>, vector<2x128xf32> -> vector<2x128xf32>
    %c0_47 = arith.constant 0 : index
    %c0_48 = arith.constant 0 : index
    %104 = vector.load %arg13[%c0_47, %c0_48] : memref<1x128xf32, #tpu.memory_space<vmem>>, vector<1x128xf32>
    %105 = vector.broadcast %104 : vector<1x128xf32> to vector<2x128xf32>
    %106 = arith.addf %103, %105 : vector<2x128xf32>
    %c0_49 = arith.constant 0 : index
    %c0_50 = arith.constant 0 : index
    %107 = vector.load %arg27[%c0_49, %c0_50] : memref<2x128xf32, #tpu.memory_space<vmem>>, vector<2x128xf32>
    tpu.vector_store %arg27[%c0_49, %c0_50], %106 {strides = array<i32>} : memref<2x128xf32, #tpu.memory_space<vmem>>, vector<2x128xf32>,
    %108 = vector.extract_strided_slice %106 {offsets = [0, 0], sizes = [2, 8], strides = [1, 1]} : vector<2x128xf32> to vector<2x8xf32>
    %109 = vector.extract_strided_slice %106 {offsets = [0, 8], sizes = [2, 8], strides = [1, 1]} : vector<2x128xf32> to vector<2x8xf32>
    %cst_51 = arith.constant 5.000000e-01 : f32
    %110 = vector.broadcast %cst_51 : f32 to vector<2x8xf32>
    %111 = arith.mulf %110, %109 : vector<2x8xf32>
    %112 = math.exp %111 : vector<2x8xf32>
    %c0_52 = arith.constant 0 : index
    %c0_53 = arith.constant 0 : index
    %113 = vector.load %arg1[%c0_52, %c0_53] : memref<2x8xf32, #tpu.memory_space<vmem>>, vector<2x8xf32>
    %114 = arith.mulf %112, %113 : vector<2x8xf32>
    %115 = arith.addf %108, %114 : vector<2x8xf32>
    %116 = arith.truncf %115 : vector<2x8xf32> to vector<2x8xbf16>
    %c0_54 = arith.constant 0 : index
    %c0_55 = arith.constant 0 : index
    %117 = vector.load %arg14[%c0_54, %c0_55] : memref<8x128xbf16, #tpu.memory_space<vmem>>, vector<8x128xbf16>
    %cst_56 = arith.constant dense<0.000000e+00> : vector<2x128xf32>
    %118 = tpu.matmul %116, %117, %cst_56 {dimension_numbers = #tpu.dot_dimension_numbers<[1], [0], [0], [1], [0, 0, 1, 1], [], []>} : vector<2x8xbf16>, vector<8x128xbf16>, vector<2x128xf32> -> vector<2x128xf32>
    %c0_57 = arith.constant 0 : index
    %c0_58 = arith.constant 0 : index
    %119 = vector.load %arg15[%c0_57, %c0_58] : memref<1x128xf32, #tpu.memory_space<vmem>>, vector<1x128xf32>
    %120 = vector.broadcast %119 : vector<1x128xf32> to vector<2x128xf32>
    %121 = arith.addf %118, %120 : vector<2x128xf32>
    %cst_59 = arith.constant 0.000000e+00 : f32
    %122 = vector.broadcast %cst_59 : f32 to vector<2x128xf32>
    %123 = arith.cmpf ogt, %121, %122 : vector<2x128xf32>
    %cst_60 = arith.constant 0.00999999977 : f32
    %124 = vector.broadcast %cst_60 : f32 to vector<2x128xf32>
    %125 = arith.mulf %124, %121 : vector<2x128xf32>
    %126 = arith.select %123, %121, %125 : vector<2x128xi1>, vector<2x128xf32>
    %127 = arith.truncf %126 : vector<2x128xf32> to vector<2x128xbf16>
    %c0_61 = arith.constant 0 : index
    %c0_62 = arith.constant 0 : index
    %128 = vector.load %arg16[%c0_61, %c0_62] : memref<128x256xbf16, #tpu.memory_space<vmem>>, vector<128x256xbf16>
    %cst_63 = arith.constant dense<0.000000e+00> : vector<2x256xf32>
    %129 = tpu.matmul %127, %128, %cst_63 {dimension_numbers = #tpu.dot_dimension_numbers<[1], [0], [0], [1], [0, 0, 1, 1], [], []>} : vector<2x128xbf16>, vector<128x256xbf16>, vector<2x256xf32> -> vector<2x256xf32>
    %c0_64 = arith.constant 0 : index
    %c0_65 = arith.constant 0 : index
    %130 = vector.load %arg17[%c0_64, %c0_65] : memref<1x256xf32, #tpu.memory_space<vmem>>, vector<1x256xf32>
    %131 = vector.broadcast %130 : vector<1x256xf32> to vector<2x256xf32>
    %132 = arith.addf %129, %131 : vector<2x256xf32>
    %cst_66 = arith.constant 0.000000e+00 : f32
    %133 = vector.broadcast %cst_66 : f32 to vector<2x256xf32>
    %134 = arith.cmpf ogt, %132, %133 : vector<2x256xf32>
    %cst_67 = arith.constant 0.00999999977 : f32
    %135 = vector.broadcast %cst_67 : f32 to vector<2x256xf32>
    %136 = arith.mulf %135, %132 : vector<2x256xf32>
    %137 = arith.select %134, %132, %136 : vector<2x256xi1>, vector<2x256xf32>
    %c1_i32_68 = arith.constant 1 : i32
    %138 = tpu.memref_slice %arg31[%c1_i32_68] : memref<3x!tpu.dma_semaphore, #tpu.memory_space<semaphore_mem>> -> memref<1x!tpu.dma_semaphore, #tpu.memory_space<semaphore_mem>>
    %139 = tpu.memref_squeeze %138 : memref<1x!tpu.dma_semaphore, #tpu.memory_space<semaphore_mem>> -> memref<!tpu.dma_semaphore, #tpu.memory_space<semaphore_mem>>
    tpu.wait_dma2 semaphore(%139 : memref<!tpu.dma_semaphore, #tpu.memory_space<semaphore_mem>>) src(%arg18 : memref<256x512xbf16, #tpu.memory_space<any>>) dst(%arg29 : memref<256x512xbf16, #tpu.memory_space<vmem>>)
    %c0_69 = arith.constant 0 : index
    %c0_70 = arith.constant 0 : index
    %140 = vector.load %arg29[%c0_69, %c0_70] : memref<256x512xbf16, #tpu.memory_space<vmem>>, vector<256x512xbf16>
    %141 = arith.truncf %137 : vector<2x256xf32> to vector<2x256xbf16>
    %cst_71 = arith.constant dense<0.000000e+00> : vector<2x512xf32>
    %142 = tpu.matmul %141, %140, %cst_71 {dimension_numbers = #tpu.dot_dimension_numbers<[1], [0], [0], [1], [0, 0, 1, 1], [], []>} : vector<2x256xbf16>, vector<256x512xbf16>, vector<2x512xf32> -> vector<2x512xf32>
    %c0_72 = arith.constant 0 : index
    %c0_73 = arith.constant 0 : index
    %143 = vector.load %arg19[%c0_72, %c0_73] : memref<1x512xf32, #tpu.memory_space<vmem>>, vector<1x512xf32>
    %144 = vector.broadcast %143 : vector<1x512xf32> to vector<2x512xf32>
    %145 = arith.addf %142, %144 : vector<2x512xf32>
    %cst_74 = arith.constant dense<0.000000e+00> : vector<512xf32>
    %146 = vector.multi_reduction <add>, %145, %cst_74 [0] : vector<2x512xf32> to vector<512xf32>
    %147 = vector.shape_cast %146 : vector<512xf32> to vector<1x512xf32>
    %cst_75 = arith.constant 2.000000e+00 : f32
    %148 = vector.broadcast %cst_75 : f32 to vector<1x512xf32>
    %149 = arith.divf %147, %148 : vector<1x512xf32>
    %150 = arith.mulf %145, %145 : vector<2x512xf32>
    %cst_76 = arith.constant dense<0.000000e+00> : vector<512xf32>
    %151 = vector.multi_reduction <add>, %150, %cst_76 [0] : vector<2x512xf32> to vector<512xf32>
    %152 = vector.shape_cast %151 : vector<512xf32> to vector<1x512xf32>
    %cst_77 = arith.constant 2.000000e+00 : f32
    %153 = vector.broadcast %cst_77 : f32 to vector<1x512xf32>
    %154 = arith.divf %152, %153 : vector<1x512xf32>
    %155 = tpu.iota {dimensions = array<i32: 0>} : vector<2x512xi32>
    %c0_i32_78 = arith.constant 0 : i32
    %156 = vector.broadcast %c0_i32_78 : i32 to vector<2x512xi32>
    %157 = arith.cmpi eq, %155, %156 : vector<2x512xi32>
    %158 = vector.shape_cast %149 : vector<1x512xf32> to vector<1x512xf32>
    %159 = vector.broadcast %158 : vector<1x512xf32> to vector<2x512xf32>
    %160 = vector.shape_cast %154 : vector<1x512xf32> to vector<1x512xf32>
    %161 = vector.broadcast %160 : vector<1x512xf32> to vector<2x512xf32>
    %162 = arith.select %157, %159, %161 : vector<2x512xi1>, vector<2x512xf32>
    %c0_79 = arith.constant 0 : index
    %c0_80 = arith.constant 0 : index
    %163 = vector.load %arg20[%c0_79, %c0_80] : memref<512x8xf32, #tpu.memory_space<vmem>>, vector<512x8xf32>
    %cst_81 = arith.constant dense<0.000000e+00> : vector<2x8xf32>
    %164 = tpu.matmul %162, %163, %cst_81 {dimension_numbers = #tpu.dot_dimension_numbers<[1], [0], [0], [1], [0, 0, 1, 1], [], []>} : vector<2x512xf32>, vector<512x8xf32>, vector<2x8xf32> -> vector<2x8xf32>
    %c0_82 = arith.constant 0 : index
    %c0_83 = arith.constant 0 : index
    %165 = vector.load %arg21[%c0_82, %c0_83] : memref<8x512xf32, #tpu.memory_space<vmem>>, vector<8x512xf32>
    %cst_84 = arith.constant dense<0.000000e+00> : vector<2x512xf32>
    %166 = tpu.matmul %164, %165, %cst_84 {dimension_numbers = #tpu.dot_dimension_numbers<[1], [0], [0], [1], [0, 0, 1, 1], [], []>} : vector<2x8xf32>, vector<8x512xf32>, vector<2x512xf32> -> vector<2x512xf32>
    %167 = vector.extract_strided_slice %166 {offsets = [0, 0], sizes = [1, 512], strides = [1, 1]} : vector<2x512xf32> to vector<1x512xf32>
    %168 = vector.extract_strided_slice %166 {offsets = [1, 0], sizes = [1, 512], strides = [1, 1]} : vector<2x512xf32> to vector<1x512xf32>
    %169 = arith.mulf %167, %167 : vector<1x512xf32>
    %170 = arith.subf %168, %169 : vector<1x512xf32>
    %171 = vector.broadcast %167 : vector<1x512xf32> to vector<2x512xf32>
    %172 = arith.subf %145, %171 : vector<2x512xf32>
    %cst_85 = arith.constant 9.99999974E-6 : f32
    %173 = vector.broadcast %cst_85 : f32 to vector<1x512xf32>
    %174 = arith.addf %170, %173 : vector<1x512xf32>
    %175 = math.rsqrt %174 : vector<1x512xf32>
    %176 = vector.broadcast %175 : vector<1x512xf32> to vector<2x512xf32>
    %177 = arith.mulf %172, %176 : vector<2x512xf32>
    %178 = math.tanh %177 : vector<2x512xf32>
    %c2_i32_86 = arith.constant 2 : i32
    %179 = tpu.memref_slice %arg31[%c2_i32_86] : memref<3x!tpu.dma_semaphore, #tpu.memory_space<semaphore_mem>> -> memref<1x!tpu.dma_semaphore, #tpu.memory_space<semaphore_mem>>
    %180 = tpu.memref_squeeze %179 : memref<1x!tpu.dma_semaphore, #tpu.memory_space<semaphore_mem>> -> memref<!tpu.dma_semaphore, #tpu.memory_space<semaphore_mem>>
    tpu.wait_dma2 semaphore(%180 : memref<!tpu.dma_semaphore, #tpu.memory_space<semaphore_mem>>) src(%arg22 : memref<512x256xbf16, #tpu.memory_space<any>>) dst(%arg30 : memref<512x256xbf16, #tpu.memory_space<vmem>>)
    %c0_87 = arith.constant 0 : index
    %c0_88 = arith.constant 0 : index
    %181 = vector.load %arg30[%c0_87, %c0_88] : memref<512x256xbf16, #tpu.memory_space<vmem>>, vector<512x256xbf16>
    %182 = arith.truncf %178 : vector<2x512xf32> to vector<2x512xbf16>
    %cst_89 = arith.constant dense<0.000000e+00> : vector<2x256xf32>
    %183 = tpu.matmul %182, %181, %cst_89 {dimension_numbers = #tpu.dot_dimension_numbers<[1], [0], [0], [1], [0, 0, 1, 1], [], []>} : vector<2x512xbf16>, vector<512x256xbf16>, vector<2x256xf32> -> vector<2x256xf32>
    %c0_90 = arith.constant 0 : index
    %c0_91 = arith.constant 0 : index
    %184 = vector.load %arg23[%c0_90, %c0_91] : memref<1x256xf32, #tpu.memory_space<vmem>>, vector<1x256xf32>
    %185 = vector.broadcast %184 : vector<1x256xf32> to vector<2x256xf32>
    %186 = arith.addf %183, %185 : vector<2x256xf32>
    %cst_92 = arith.constant dense<0.000000e+00> : vector<256xf32>
    %187 = vector.multi_reduction <add>, %186, %cst_92 [0] : vector<2x256xf32> to vector<256xf32>
    %188 = vector.shape_cast %187 : vector<256xf32> to vector<1x256xf32>
    %cst_93 = arith.constant 2.000000e+00 : f32
    %189 = vector.broadcast %cst_93 : f32 to vector<1x256xf32>
    %190 = arith.divf %188, %189 : vector<1x256xf32>
    %191 = arith.mulf %186, %186 : vector<2x256xf32>
    %cst_94 = arith.constant dense<0.000000e+00> : vector<256xf32>
    %192 = vector.multi_reduction <add>, %191, %cst_94 [0] : vector<2x256xf32> to vector<256xf32>
    %193 = vector.shape_cast %192 : vector<256xf32> to vector<1x256xf32>
    %cst_95 = arith.constant 2.000000e+00 : f32
    %194 = vector.broadcast %cst_95 : f32 to vector<1x256xf32>
    %195 = arith.divf %193, %194 : vector<1x256xf32>
    %196 = tpu.iota {dimensions = array<i32: 0>} : vector<2x256xi32>
    %c0_i32_96 = arith.constant 0 : i32
    %197 = vector.broadcast %c0_i32_96 : i32 to vector<2x256xi32>
    %198 = arith.cmpi eq, %196, %197 : vector<2x256xi32>
    %199 = vector.shape_cast %190 : vector<1x256xf32> to vector<1x256xf32>
    %200 = vector.broadcast %199 : vector<1x256xf32> to vector<2x256xf32>
    %201 = vector.shape_cast %195 : vector<1x256xf32> to vector<1x256xf32>
    %202 = vector.broadcast %201 : vector<1x256xf32> to vector<2x256xf32>
    %203 = arith.select %198, %200, %202 : vector<2x256xi1>, vector<2x256xf32>
    %c0_97 = arith.constant 0 : index
    %c0_98 = arith.constant 0 : index
    %204 = vector.load %arg24[%c0_97, %c0_98] : memref<256x1xf32, #tpu.memory_space<vmem>>, vector<256x1xf32>
    %cst_99 = arith.constant dense<0.000000e+00> : vector<2x1xf32>
    %205 = tpu.matmul %203, %204, %cst_99 {dimension_numbers = #tpu.dot_dimension_numbers<[1], [0], [0], [1], [0, 0, 1, 1], [], []>} : vector<2x256xf32>, vector<256x1xf32>, vector<2x1xf32> -> vector<2x1xf32>
    %c0_100 = arith.constant 0 : index
    %c0_101 = arith.constant 0 : index
    %206 = vector.load %arg25[%c0_100, %c0_101] : memref<1x256xf32, #tpu.memory_space<vmem>>, vector<1x256xf32>
    %cst_102 = arith.constant dense<0.000000e+00> : vector<2x256xf32>
    %207 = tpu.matmul %205, %206, %cst_102 {dimension_numbers = #tpu.dot_dimension_numbers<[1], [0], [0], [1], [0, 0, 1, 1], [], []>} : vector<2x1xf32>, vector<1x256xf32>, vector<2x256xf32> -> vector<2x256xf32>
    %208 = vector.extract_strided_slice %207 {offsets = [0, 0], sizes = [1, 256], strides = [1, 1]} : vector<2x256xf32> to vector<1x256xf32>
    %209 = vector.extract_strided_slice %207 {offsets = [1, 0], sizes = [1, 256], strides = [1, 1]} : vector<2x256xf32> to vector<1x256xf32>
    %210 = arith.mulf %208, %208 : vector<1x256xf32>
    %211 = arith.subf %209, %210 : vector<1x256xf32>
    %212 = vector.broadcast %208 : vector<1x256xf32> to vector<2x256xf32>
    %213 = arith.subf %186, %212 : vector<2x256xf32>
    %cst_103 = arith.constant 9.99999974E-6 : f32
    %214 = vector.broadcast %cst_103 : f32 to vector<1x256xf32>
    %215 = arith.addf %211, %214 : vector<1x256xf32>
    %216 = math.rsqrt %215 : vector<1x256xf32>
    %217 = vector.broadcast %216 : vector<1x256xf32> to vector<2x256xf32>
    %218 = arith.mulf %213, %217 : vector<2x256xf32>
    %219 = math.tanh %218 : vector<2x256xf32>
    %c0_104 = arith.constant 0 : index
    %c0_105 = arith.constant 0 : index
    %220 = vector.load %arg26[%c0_104, %c0_105] : memref<2x256xf32, #tpu.memory_space<vmem>>, vector<2x256xf32>
    tpu.vector_store %arg26[%c0_104, %c0_105], %219 {strides = array<i32>} : memref<2x256xf32, #tpu.memory_space<vmem>>, vector<2x256xf32>,
    return
  }
}

</mosaic_0001>

<llo_original>
// kernel: forward.1
$region0: #{forward.1}
  #allocation0 [shape = 'u32[]', space=smem, size = 0x4, offset = 0x4, fixed_abs, tag = 'smem constant byte address 0x4 - core index']
  #allocation1 [shape = 'u32[144,128]{1,0:T(1,128)}', space=vmem, size = 0x12000, scoped, tag = 'internal scratch']
  #allocation2 [shape = 'bf16[512,256]{1,0:T(16,128)(2,1)}', space=vmem, size = 0x40000, scoped, tag = 'scratch operand']
  #allocation3 [shape = 'bf16[256,512]{1,0:T(16,128)(2,1)}', space=vmem, size = 0x40000, scoped, tag = 'scratch operand']
  #allocation4 [shape = 'bf16[512,256]{1,0:T(16,128)(2,1)}', space=vmem, size = 0x40000, scoped, tag = 'scratch operand']
  #allocation5 [shape = 's32[3]{0}', space=sflag, size = 0xc, scoped, tag = 'scratch operand']
  #allocation28 [shape = 's32[]', space=sflag, size = 0x4, offset = 0, fixed_abs, tag = 'sflag constant byte address 0x0 - dummy sync flag']
  #allocation29 [shape = 's32[]', space=sflag, size = 0x4, offset = 0, fixed_abs, tag = 'sflag constant byte address 0x0 - dummy sync flag']
  #allocation30 [shape = 's32[]', space=sflag, size = 0x4, offset = 0, fixed_abs, tag = 'sflag constant byte address 0x0 - dummy sync flag']
  %s0 = inlined_call_operand.vmem [shape: f32[2,256], index: 0, kind: input, shape index: {}]
  %s1 = inlined_call_operand.vmem [shape: f32[2,8], index: 1, kind: input, shape index: {}]
  %s2 = inlined_call_operand.vmem [shape: bf16[256,512], index: 2, kind: input, shape index: {}]
  %s3 = inlined_call_operand.hbm [shape: f32[1,512], index: 3, kind: input, shape index: {}]
  %s4 = inlined_call_operand.vmem [shape: f32[512,8], index: 4, kind: input, shape index: {}]
  %s5 = inlined_call_operand.hbm [shape: f32[8,512], index: 5, kind: input, shape index: {}]
  %s6 = inlined_call_operand.vmem [shape: bf16[512,256], index: 6, kind: input, shape index: {}]
  %s7 = inlined_call_operand.hbm [shape: f32[1,256], index: 7, kind: input, shape index: {}]
  %s8 = inlined_call_operand.vmem [shape: f32[256,16], index: 8, kind: input, shape index: {}]
  %s9 = inlined_call_operand.hbm [shape: f32[16,256], index: 9, kind: input, shape index: {}]
  %s10 = inlined_call_operand.vmem [shape: bf16[256,128], index: 10, kind: input, shape index: {}]
  %s11 = inlined_call_operand.hbm [shape: f32[1,128], index: 11, kind: input, shape index: {}]
  %s12 = inlined_call_operand.hbm [shape: bf16[128,128], index: 12, kind: input, shape index: {}]
  %s13 = inlined_call_operand.hbm [shape: f32[1,128], index: 13, kind: input, shape index: {}]
  %s14 = inlined_call_operand.hbm [shape: bf16[8,128], index: 14, kind: input, shape index: {}]
  %s15 = inlined_call_operand.hbm [shape: f32[1,128], index: 15, kind: input, shape index: {}]
  %s16 = inlined_call_operand.hbm [shape: bf16[128,256], index: 16, kind: input, shape index: {}]
  %s17 = inlined_call_operand.hbm [shape: f32[1,256], index: 17, kind: input, shape index: {}]
  %s18 = inlined_call_operand.vmem [shape: bf16[256,512], index: 18, kind: input, shape index: {}]
  %s19 = inlined_call_operand.hbm [shape: f32[1,512], index: 19, kind: input, shape index: {}]
  %s20 = inlined_call_operand.vmem [shape: f32[512,8], index: 20, kind: input, shape index: {}]
  %s21 = inlined_call_operand.vmem [shape: f32[8,512], index: 21, kind: input, shape index: {}]
  %s22 = inlined_call_operand.hbm [shape: bf16[512,256], index: 22, kind: input, shape index: {}]
  %s23 = inlined_call_operand.hbm [shape: f32[1,256], index: 23, kind: input, shape index: {}]
  %s24 = inlined_call_operand.vmem [shape: f32[256,1], index: 24, kind: input, shape index: {}]
  %s25 = inlined_call_operand.hbm [shape: f32[1,256], index: 25, kind: input, shape index: {}]
  %s26 = inlined_call_operand.vmem [shape: f32[2,256], index: 26, kind: output, shape index: {0}]
  %s27 = inlined_call_operand.vmem [shape: f32[2,128], index: 27, kind: output, shape index: {1}]
  %28 = xla_tuple %s26, %s27
  %s29 = sld [smem:[#allocation0]]
  $region240: #{forward.1} parent=0
    _
  %s31 = ssub.s32 1, %s29
  %s32 = scalar_select 0, %s31, %s29
  $region1: #{forward.1} parent=0
    #allocation6 [shape = 'u8[2048]{0}', space=vmem, size = 0x800, scoped, tag = 'input window, operand 3, single buffered']
    #allocation7 [shape = 's32[1]{0}', space=sflag, size = 0x4, scoped, tag = 'scoped memory for forward.1']
    #allocation8 [shape = 'u8[16384]{0}', space=vmem, size = 0x4000, scoped, tag = 'input window, operand 5, single buffered']
    #allocation9 [shape = 's32[1]{0}', space=sflag, size = 0x4, scoped, tag = 'scoped memory for forward.1']
    #allocation10 [shape = 'u8[1024]{0}', space=vmem, size = 0x400, scoped, tag = 'input window, operand 7, single buffered']
    #allocation11 [shape = 'u8[16384]{0}', space=vmem, size = 0x4000, scoped, tag = 'input window, operand 9, single buffered']
    #allocation12 [shape = 's32[1]{0}', space=sflag, size = 0x4, scoped, tag = 'scoped memory for forward.1']
    #allocation13 [shape = 'u8[512]{0}', space=vmem, size = 0x400, scoped, tag = 'input window, operand 11, single buffered']
    #allocation14 [shape = 'u8[32768]{0}', space=vmem, size = 0x8000, scoped, tag = 'input window, operand 12, single buffered']
    #allocation15 [shape = 's32[1]{0}', space=sflag, size = 0x4, scoped, tag = 'scoped memory for forward.1']
    #allocation16 [shape = 'u8[512]{0}', space=vmem, size = 0x400, scoped, tag = 'input window, operand 13, single buffered']
    #allocation17 [shape = 'u8[2048]{0}', space=vmem, size = 0x800, scoped, tag = 'input window, operand 14, single buffered']
    #allocation18 [shape = 's32[1]{0}', space=sflag, size = 0x4, scoped, tag = 'scoped memory for forward.1']
    #allocation19 [shape = 'u8[512]{0}', space=vmem, size = 0x400, scoped, tag = 'input window, operand 15, single buffered']
    #allocation20 [shape = 'u8[65536]{0}', space=vmem, size = 0x10000, scoped, tag = 'input window, operand 16, single buffered']
    #allocation21 [shape = 's32[1]{0}', space=sflag, size = 0x4, scoped, tag = 'scoped memory for forward.1']
    #allocation22 [shape = 'u8[1024]{0}', space=vmem, size = 0x400, scoped, tag = 'input window, operand 17, single buffered']
    #allocation23 [shape = 'u8[2048]{0}', space=vmem, size = 0x800, scoped, tag = 'input window, operand 19, single buffered']
    #allocation24 [shape = 's32[1]{0}', space=sflag, size = 0x4, scoped, tag = 'scoped memory for forward.1']
    #allocation25 [shape = 'u8[1024]{0}', space=vmem, size = 0x400, scoped, tag = 'input window, operand 23, single buffered']
    #allocation26 [shape = 'u8[1024]{0}', space=vmem, size = 0x400, scoped, tag = 'input window, operand 25, single buffered']
    #allocation27 [shape = 's32[1]{0}', space=sflag, size = 0x4, scoped, tag = 'scoped memory for forward.1']
    #allocation31 [shape = 'u32[9]{0}', space=smem, size = 0x24, scoped, tag = 'DMA stride descriptor']
    %33 = vsyncpa [#allocation7], 0
    %34 = vsyncpa [#allocation9], 0
    %35 = vsyncpa [#allocation12], 0
    %36 = vsyncpa [#allocation15], 0
    %37 = vsyncpa [#allocation18], 0
    %38 = vsyncpa [#allocation21], 0
    %39 = vsyncpa [#allocation24], 0
    %40 = vsyncpa [#allocation27], 0
    // Predicated region
    $region2: #{forward.1} parent=1 // pred_check
      _
    $region3: #{forward.1} parent=1 // pred_check_branch
      %42 = sbr.rel (0) target = $region5
    $region4: #{forward.1} parent=1 // pred_region
      _
    $region5: #{forward.1} parent=1 // pred_fallthru
      _
    // Predicated region
    $region6: #{forward.1} parent=1 // pred_check
      _
    $region7: #{forward.1} parent=1 // pred_check_branch
      %44 = sbr.rel (0) target = $region9
    $region8: #{forward.1} parent=1 // pred_region
      _
    $region9: #{forward.1} parent=1 // pred_fallthru
      _
    // Predicated region
    $region10: #{forward.1} parent=1 // pred_check
      _
    $region11: #{forward.1} parent=1 // pred_check_branch
      %46 = sbr.rel (0) target = $region13
    $region12: #{forward.1} parent=1 // pred_region
      _
    $region13: #{forward.1} parent=1 // pred_fallthru
      _
    // Predicated region
    $region14: #{forward.1} parent=1 // pred_check
      _
    $region15: #{forward.1} parent=1 // pred_check_branch
      %48 = sbr.rel (0) target = $region17
    $region16: #{forward.1} parent=1 // pred_region
      %s50 = ssub.s32 64, 64
      %51 = vsyncadd [#allocation7], %s50
      %s53 = sshll.u32 [#allocation6], 4
      %s54 = int_to_ptr.vmem [resolvable:$true] %s53
      %56 = dma.hbm_to_vmem [thread:$0]  %s3, 64, %s54, [#allocation7]
    $region17: #{forward.1} parent=1 // pred_fallthru
      _
    // Predicated region
    $region18: #{forward.1} parent=1 // pred_check
      _
    $region19: #{forward.1} parent=1 // pred_check_branch
      %58 = sbr.rel (0) target = $region21
    $region20: #{forward.1} parent=1 // pred_region
      _
    $region21: #{forward.1} parent=1 // pred_fallthru
      _
    // Predicated region
    $region22: #{forward.1} parent=1 // pred_check
      _
    $region23: #{forward.1} parent=1 // pred_check_branch
      %60 = sbr.rel (0) target = $region25
    $region24: #{forward.1} parent=1 // pred_region
      %s62 = ssub.s32 512, 512
      %63 = vsyncadd [#allocation9], %s62
      %s65 = sshll.u32 [#allocation8], 4
      %s66 = int_to_ptr.vmem [resolvable:$true] %s65
      %68 = dma.hbm_to_vmem [thread:$0]  %s5, 512, %s66, [#allocation9]
    $region25: #{forward.1} parent=1 // pred_fallthru
      _
    // Predicated region
    $region26: #{forward.1} parent=1 // pred_check
      _
    $region27: #{forward.1} parent=1 // pred_check_branch
      %70 = sbr.rel (0) target = $region29
    $region28: #{forward.1} parent=1 // pred_region
      %s72 = ssub.s32 32, 32
      %73 = vsyncadd [#allocation9], %s72
      %s75 = sshll.u32 [#allocation10], 4
      %s76 = int_to_ptr.vmem [resolvable:$true] %s75
      %78 = dma.hbm_to_vmem [thread:$0]  %s7, 32, %s76, [#allocation9]
    $region29: #{forward.1} parent=1 // pred_fallthru
      _
    // Predicated region
    $region30: #{forward.1} parent=1 // pred_check
      _
    $region31: #{forward.1} parent=1 // pred_check_branch
      %80 = sbr.rel (0) target = $region33
    $region32: #{forward.1} parent=1 // pred_region
      _
    $region33: #{forward.1} parent=1 // pred_fallthru
      _
    // Predicated region
    $region34: #{forward.1} parent=1 // pred_check
      _
    $region35: #{forward.1} parent=1 // pred_check_branch
      %82 = sbr.rel (0) target = $region37
    $region36: #{forward.1} parent=1 // pred_region
      %s84 = ssub.s32 512, 512
      %85 = vsyncadd [#allocation12], %s84
      %s86 = sshll.u32 [#allocation11], 4
      %s87 = int_to_ptr.vmem [resolvable:$true] %s86
      %92 = dma.hbm_to_vmem [thread:$0]  %s9, 512, %s87, [#allocation12], 256, 256, 16
    $region37: #{forward.1} parent=1 // pred_fallthru
      _
    // Predicated region
    $region38: #{forward.1} parent=1 // pred_check
      _
    $region39: #{forward.1} parent=1 // pred_check_branch
      %94 = sbr.rel (0) target = $region41
    $region40: #{forward.1} parent=1 // pred_region
      _
    $region41: #{forward.1} parent=1 // pred_fallthru
      _
    // Predicated region
    $region42: #{forward.1} parent=1 // pred_check
      _
    $region43: #{forward.1} parent=1 // pred_check_branch
      %96 = sbr.rel (0) target = $region45
    $region44: #{forward.1} parent=1 // pred_region
      %s98 = ssub.s32 16, 16
      %99 = vsyncadd [#allocation12], %s98
      %s101 = sshll.u32 [#allocation13], 4
      %s102 = int_to_ptr.vmem [resolvable:$true] %s101
      %104 = dma.hbm_to_vmem [thread:$0]  %s11, 16, %s102, [#allocation12]
    $region45: #{forward.1} parent=1 // pred_fallthru
      _
    // Predicated region
    $region46: #{forward.1} parent=1 // pred_check
      _
    $region47: #{forward.1} parent=1 // pred_check_branch
      %106 = sbr.rel (0) target = $region49
    $region48: #{forward.1} parent=1 // pred_region
      %s108 = ssub.s32 1024, 1024
      %109 = vsyncadd [#allocation15], %s108
      %s110 = sshll.u32 [#allocation14], 4
      %s111 = int_to_ptr.vmem [resolvable:$true] %s110
      %116 = dma.hbm_to_vmem [thread:$0]  %s12, 1024, %s111, [#allocation15], 64, 64, 4
    $region49: #{forward.1} parent=1 // pred_fallthru
      _
    // Predicated region
    $region50: #{forward.1} parent=1 // pred_check
      _
    $region51: #{forward.1} parent=1 // pred_check_branch
      %118 = sbr.rel (0) target = $region53
    $region52: #{forward.1} parent=1 // pred_region
      %s120 = ssub.s32 16, 16
      %121 = vsyncadd [#allocation15], %s120
      %s123 = sshll.u32 [#allocation16], 4
      %s124 = int_to_ptr.vmem [resolvable:$true] %s123
      %126 = dma.hbm_to_vmem [thread:$0]  %s13, 16, %s124, [#allocation15]
    $region53: #{forward.1} parent=1 // pred_fallthru
      _
    // Predicated region
    $region54: #{forward.1} parent=1 // pred_check
      _
    $region55: #{forward.1} parent=1 // pred_check_branch
      %128 = sbr.rel (0) target = $region57
    $region56: #{forward.1} parent=1 // pred_region
      %s130 = ssub.s32 64, 64
      %131 = vsyncadd [#allocation18], %s130
      %s133 = sshll.u32 [#allocation17], 4
      %s134 = int_to_ptr.vmem [resolvable:$true] %s133
      %136 = dma.hbm_to_vmem [thread:$0]  %s14, 64, %s134, [#allocation18]
    $region57: #{forward.1} parent=1 // pred_fallthru
      _
    // Predicated region
    $region58: #{forward.1} parent=1 // pred_check
      _
    $region59: #{forward.1} parent=1 // pred_check_branch
      %138 = sbr.rel (0) target = $region61
    $region60: #{forward.1} parent=1 // pred_region
      %s140 = ssub.s32 16, 16
      %141 = vsyncadd [#allocation18], %s140
      %s143 = sshll.u32 [#allocation19], 4
      %s144 = int_to_ptr.vmem [resolvable:$true] %s143
      %146 = dma.hbm_to_vmem [thread:$0]  %s15, 16, %s144, [#allocation18]
    $region61: #{forward.1} parent=1 // pred_fallthru
      _
    // Predicated region
    $region62: #{forward.1} parent=1 // pred_check
      _
    $region63: #{forward.1} parent=1 // pred_check_branch
      %148 = sbr.rel (0) target = $region65
    $region64: #{forward.1} parent=1 // pred_region
      %s150 = ssub.s32 2048, 2048
      %151 = vsyncadd [#allocation21], %s150
      %s152 = sshll.u32 [#allocation20], 4
      %s153 = int_to_ptr.vmem [resolvable:$true] %s152
      %158 = dma.hbm_to_vmem [thread:$0]  %s16, 2048, %s153, [#allocation21], 128, 128, 8
    $region65: #{forward.1} parent=1 // pred_fallthru
      _
    // Predicated region
    $region66: #{forward.1} parent=1 // pred_check
      _
    $region67: #{forward.1} parent=1 // pred_check_branch
      %160 = sbr.rel (0) target = $region69
    $region68: #{forward.1} parent=1 // pred_region
      %s162 = ssub.s32 32, 32
      %163 = vsyncadd [#allocation21], %s162
      %s165 = sshll.u32 [#allocation22], 4
      %s166 = int_to_ptr.vmem [resolvable:$true] %s165
      %168 = dma.hbm_to_vmem [thread:$0]  %s17, 32, %s166, [#allocation21]
    $region69: #{forward.1} parent=1 // pred_fallthru
      _
    // Predicated region
    $region70: #{forward.1} parent=1 // pred_check
      _
    $region71: #{forward.1} parent=1 // pred_check_branch
      %170 = sbr.rel (0) target = $region73
    $region72: #{forward.1} parent=1 // pred_region
      %s172 = ssub.s32 64, 64
      %173 = vsyncadd [#allocation24], %s172
      %s175 = sshll.u32 [#allocation23], 4
      %s176 = int_to_ptr.vmem [resolvable:$true] %s175
      %178 = dma.hbm_to_vmem [thread:$0]  %s19, 64, %s176, [#allocation24]
    $region73: #{forward.1} parent=1 // pred_fallthru
      _
    // Predicated region
    $region74: #{forward.1} parent=1 // pred_check
      _
    $region75: #{forward.1} parent=1 // pred_check_branch
      %180 = sbr.rel (0) target = $region77
    $region76: #{forward.1} parent=1 // pred_region
      _
    $region77: #{forward.1} parent=1 // pred_fallthru
      _
    // Predicated region
    $region78: #{forward.1} parent=1 // pred_check
      _
    $region79: #{forward.1} parent=1 // pred_check_branch
      %182 = sbr.rel (0) target = $region81
    $region80: #{forward.1} parent=1 // pred_region
      _
    $region81: #{forward.1} parent=1 // pred_fallthru
      _
    // Predicated region
    $region82: #{forward.1} parent=1 // pred_check
      _
    $region83: #{forward.1} parent=1 // pred_check_branch
      %184 = sbr.rel (0) target = $region85
    $region84: #{forward.1} parent=1 // pred_region
      %s186 = ssub.s32 32, 32
      %187 = vsyncadd [#allocation24], %s186
      %s189 = sshll.u32 [#allocation25], 4
      %s190 = int_to_ptr.vmem [resolvable:$true] %s189
      %192 = dma.hbm_to_vmem [thread:$0]  %s23, 32, %s190, [#allocation24]
    $region85: #{forward.1} parent=1 // pred_fallthru
      _
    // Predicated region
    $region86: #{forward.1} parent=1 // pred_check
      _
    $region87: #{forward.1} parent=1 // pred_check_branch
      %194 = sbr.rel (0) target = $region89
    $region88: #{forward.1} parent=1 // pred_region
      _
    $region89: #{forward.1} parent=1 // pred_fallthru
      _
    // Predicated region
    $region90: #{forward.1} parent=1 // pred_check
      _
    $region91: #{forward.1} parent=1 // pred_check_branch
      %196 = sbr.rel (0) target = $region93
    $region92: #{forward.1} parent=1 // pred_region
      %s198 = ssub.s32 32, 32
      %199 = vsyncadd [#allocation27], %s198
      %s201 = sshll.u32 [#allocation26], 4
      %s202 = int_to_ptr.vmem [resolvable:$true] %s201
      %204 = dma.hbm_to_vmem [thread:$0]  %s25, 32, %s202, [#allocation27]
    $region93: #{forward.1} parent=1 // pred_fallthru
      _
    // Predicated region
    $region94: #{forward.1} parent=1 // pred_check
      _
    $region95: #{forward.1} parent=1 // pred_check_branch
      %206 = sbr.rel (0) target = $region97
    $region96: #{forward.1} parent=1 // pred_region
      %207 = dma.done [#allocation7], 64
    $region97: #{forward.1} parent=1 // pred_fallthru
      _
    // Predicated region
    $region98: #{forward.1} parent=1 // pred_check
      _
    $region99: #{forward.1} parent=1 // pred_check_branch
      %209 = sbr.rel (0) target = $region101
    $region100: #{forward.1} parent=1 // pred_region
      %210 = dma.done [#allocation9], 512
    $region101: #{forward.1} parent=1 // pred_fallthru
      _
    // Predicated region
    $region102: #{forward.1} parent=1 // pred_check
      _
    $region103: #{forward.1} parent=1 // pred_check_branch
      %212 = sbr.rel (0) target = $region105
    $region104: #{forward.1} parent=1 // pred_region
      %213 = dma.done [#allocation9], 32
    $region105: #{forward.1} parent=1 // pred_fallthru
      _
    // Predicated region
    $region106: #{forward.1} parent=1 // pred_check
      _
    $region107: #{forward.1} parent=1 // pred_check_branch
      %215 = sbr.rel (0) target = $region109
    $region108: #{forward.1} parent=1 // pred_region
      %216 = dma.done [#allocation12], 512
    $region109: #{forward.1} parent=1 // pred_fallthru
      _
    // Predicated region
    $region110: #{forward.1} parent=1 // pred_check
      _
    $region111: #{forward.1} parent=1 // pred_check_branch
      %218 = sbr.rel (0) target = $region113
    $region112: #{forward.1} parent=1 // pred_region
      %219 = dma.done [#allocation12], 16
    $region113: #{forward.1} parent=1 // pred_fallthru
      _
    // Predicated region
    $region114: #{forward.1} parent=1 // pred_check
      _
    $region115: #{forward.1} parent=1 // pred_check_branch
      %221 = sbr.rel (0) target = $region117
    $region116: #{forward.1} parent=1 // pred_region
      %222 = dma.done [#allocation15], 1024
    $region117: #{forward.1} parent=1 // pred_fallthru
      _
    // Predicated region
    $region118: #{forward.1} parent=1 // pred_check
      _
    $region119: #{forward.1} parent=1 // pred_check_branch
      %224 = sbr.rel (0) target = $region121
    $region120: #{forward.1} parent=1 // pred_region
      %225 = dma.done [#allocation15], 16
    $region121: #{forward.1} parent=1 // pred_fallthru
      _
    // Predicated region
    $region122: #{forward.1} parent=1 // pred_check
      _
    $region123: #{forward.1} parent=1 // pred_check_branch
      %227 = sbr.rel (0) target = $region125
    $region124: #{forward.1} parent=1 // pred_region
      %228 = dma.done [#allocation18], 64
    $region125: #{forward.1} parent=1 // pred_fallthru
      _
    // Predicated region
    $region126: #{forward.1} parent=1 // pred_check
      _
    $region127: #{forward.1} parent=1 // pred_check_branch
      %230 = sbr.rel (0) target = $region129
    $region128: #{forward.1} parent=1 // pred_region
      %231 = dma.done [#allocation18], 16
    $region129: #{forward.1} parent=1 // pred_fallthru
      _
    // Predicated region
    $region130: #{forward.1} parent=1 // pred_check
      _
    $region131: #{forward.1} parent=1 // pred_check_branch
      %233 = sbr.rel (0) target = $region133
    $region132: #{forward.1} parent=1 // pred_region
      %234 = dma.done [#allocation21], 2048
    $region133: #{forward.1} parent=1 // pred_fallthru
      _
    // Predicated region
    $region134: #{forward.1} parent=1 // pred_check
      _
    $region135: #{forward.1} parent=1 // pred_check_branch
      %236 = sbr.rel (0) target = $region137
    $region136: #{forward.1} parent=1 // pred_region
      %237 = dma.done [#allocation21], 32
    $region137: #{forward.1} parent=1 // pred_fallthru
      _
    // Predicated region
    $region138: #{forward.1} parent=1 // pred_check
      _
    $region139: #{forward.1} parent=1 // pred_check_branch
      %239 = sbr.rel (0) target = $region141
    $region140: #{forward.1} parent=1 // pred_region
      %240 = dma.done [#allocation24], 64
    $region141: #{forward.1} parent=1 // pred_fallthru
      _
    // Predicated region
    $region142: #{forward.1} parent=1 // pred_check
      _
    $region143: #{forward.1} parent=1 // pred_check_branch
      %242 = sbr.rel (0) target = $region145
    $region144: #{forward.1} parent=1 // pred_region
      %243 = dma.done [#allocation24], 32
    $region145: #{forward.1} parent=1 // pred_fallthru
      _
    // Predicated region
    $region146: #{forward.1} parent=1 // pred_check
      _
    $region147: #{forward.1} parent=1 // pred_check_branch
      %245 = sbr.rel (0) target = $region149
    $region148: #{forward.1} parent=1 // pred_region
      %246 = dma.done [#allocation27], 32
    $region149: #{forward.1} parent=1 // pred_fallthru
      _
    %p249 = scmp.lt.u32.totalorder 4, 8
    %p250 = pneg %p249
    // Predicated region
    $region150: #{forward.1} parent=1 // pred_check
      _
    $region151: #{forward.1} parent=1 // pred_check_branch
      %252 = sbr.rel (%p249) target = $region153
    $region152: #{forward.1} parent=1 // pred_region
      %s521 = sand.u32 4, 7
      %p522 = scmp.eq.s32.totalorder %s521, 0
      %p523 = pneg %p522
      // Predicated region
      $region165: #{forward.1} parent=152 // pred_check
        _
      $region166: #{forward.1} parent=152 // pred_check_branch
        %525 = sbr.rel (%p522) target = $region168
      $region167: #{forward.1} parent=152 // pred_region
        %s526 = sand.u32 4, 7
        %s527 = ssub.s32 4, %s526
        %s528 = scalar_lea.vmem %s6, %s527
        %s529 = ssub.s32 4, %s526
        %s530 = scalar_lea.vmem [#allocation2], %s529
        loop: start=0, step=1, limit=1
        $region169: #{forward.1} parent=167 // loop_pre_header
          _
        $region170: #{forward.1} parent=167 // loop_header
          %s532 = sphi 0, %s536
          %p533 = scmp.ge.s32.totalorder %s532, 1
          %s537 = sphi %s6, %s6
          %s538 = sphi [#allocation2], [#allocation2]
        $region171: #{forward.1} parent=167 // loop_header_branch
          %535 = sbr.rel (%p533) target = $region175
        $region172: #{forward.1} parent=167 // loop_body
          _
        $region173: #{forward.1} parent=167 // loop_footer
          %s536 = sadd.s32 1, %s532
        $region174: #{forward.1} parent=167 // loop_footer_branch
          %531 = sbr.rel target = $region170
        $region175: #{forward.1} parent=167 // loop_exit
          _
        %s539 = sshllo.u32 0, %s526
        loop: start=0, step=1, limit=1
        $region176: #{forward.1} parent=167 // loop_pre_header
          _
        $region177: #{forward.1} parent=167 // loop_header
          %s541 = sphi 0, %s545
          %p542 = scmp.ge.s32.totalorder %s541, 1
          %s546 = sphi %s528, %s528
          %s547 = sphi %s530, %s530
        $region178: #{forward.1} parent=167 // loop_header_branch
          %544 = sbr.rel (%p542) target = $region182
        $region179: #{forward.1} parent=167 // loop_body
          %v548 = vld [vmem:[%s546] sm:%s539]
          %549 = vst [vmem:[%s547] sm:%s539] %v548
          %v550 = vld [vmem:[%s546 + $0x8] sm:%s539]
          %551 = vst [vmem:[%s547 + $0x4] sm:%s539] %v550
          %v552 = vld [vmem:[%s546 + $0x4] sm:%s539]
          %553 = vst [vmem:[%s547 + $0x8] sm:%s539] %v552
          %v554 = vld [vmem:[%s546 + $0xc] sm:%s539]
          %555 = vst [vmem:[%s547 + $0xc] sm:%s539] %v554
          %v556 = vld [vmem:[%s546 + $0x10] sm:%s539]
          %557 = vst [vmem:[%s547 + $0x10] sm:%s539] %v556
          %v558 = vld [vmem:[%s546 + $0x18] sm:%s539]
          %559 = vst [vmem:[%s547 + $0x14] sm:%s539] %v558
          %v560 = vld [vmem:[%s546 + $0x14] sm:%s539]
          %561 = vst [vmem:[%s547 + $0x18] sm:%s539] %v560
          %v562 = vld [vmem:[%s546 + $0x1c] sm:%s539]
          %563 = vst [vmem:[%s547 + $0x1c] sm:%s539] %v562
          %v564 = vld [vmem:[%s546 + $0x20] sm:%s539]
          %565 = vst [vmem:[%s547 + $0x20] sm:%s539] %v564
          %v566 = vld [vmem:[%s546 + $0x28] sm:%s539]
          %567 = vst [vmem:[%s547 + $0x24] sm:%s539] %v566
          %v568 = vld [vmem:[%s546 + $0x24] sm:%s539]
          %569 = vst [vmem:[%s547 + $0x28] sm:%s539] %v568
          %v570 = vld [vmem:[%s546 + $0x2c] sm:%s539]
          %571 = vst [vmem:[%s547 + $0x2c] sm:%s539] %v570
          %v572 = vld [vmem:[%s546 + $0x30] sm:%s539]
          %573 = vst [vmem:[%s547 + $0x30] sm:%s539] %v572
          %v574 = vld [vmem:[%s546 + $0x38] sm:%s539]
          %575 = vst [vmem:[%s547 + $0x34] sm:%s539] %v574
          %v576 = vld [vmem:[%s546 + $0x34] sm:%s539]
          %577 = vst [vmem:[%s547 + $0x38] sm:%s539] %v576
          %v578 = vld [vmem:[%s546 + $0x3c] sm:%s539]
          %579 = vst [vmem:[%s547 + $0x3c] sm:%s539] %v578
          %v580 = vld [vmem:[%s546 + $0x40] sm:%s539]
          %581 = vst [vmem:[%s547 + $0x40] sm:%s539] %v580
          %v582 = vld [vmem:[%s546 + $0x48] sm:%s539]
          %583 = vst [vmem:[%s547 + $0x44] sm:%s539] %v582
          %v584 = vld [vmem:[%s546 + $0x44] sm:%s539]
          %585 = vst [vmem:[%s547 + $0x48] sm:%s539] %v584
          %v586 = vld [vmem:[%s546 + $0x4c] sm:%s539]
          %587 = vst [vmem:[%s547 + $0x4c] sm:%s539] %v586
          %v588 = vld [vmem:[%s546 + $0x50] sm:%s539]
          %589 = vst [vmem:[%s547 + $0x50] sm:%s539] %v588
          %v590 = vld [vmem:[%s546 + $0x58] sm:%s539]
          %591 = vst [vmem:[%s547 + $0x54] sm:%s539] %v590
          %v592 = vld [vmem:[%s546 + $0x54] sm:%s539]
          %593 = vst [vmem:[%s547 + $0x58] sm:%s539] %v592
          %v594 = vld [vmem:[%s546 + $0x5c] sm:%s539]
          %595 = vst [vmem:[%s547 + $0x5c] sm:%s539] %v594
          %v596 = vld [vmem:[%s546 + $0x60] sm:%s539]
          %597 = vst [vmem:[%s547 + $0x60] sm:%s539] %v596
          %v598 = vld [vmem:[%s546 + $0x68] sm:%s539]
          %599 = vst [vmem:[%s547 + $0x64] sm:%s539] %v598
          %v600 = vld [vmem:[%s546 + $0x64] sm:%s539]
          %601 = vst [vmem:[%s547 + $0x68] sm:%s539] %v600
          %v602 = vld [vmem:[%s546 + $0x6c] sm:%s539]
          %603 = vst [vmem:[%s547 + $0x6c] sm:%s539] %v602
          %v604 = vld [vmem:[%s546 + $0x70] sm:%s539]
          %605 = vst [vmem:[%s547 + $0x70] sm:%s539] %v604
          %v606 = vld [vmem:[%s546 + $0x78] sm:%s539]
          %607 = vst [vmem:[%s547 + $0x74] sm:%s539] %v606
          %v608 = vld [vmem:[%s546 + $0x74] sm:%s539]
          %609 = vst [vmem:[%s547 + $0x78] sm:%s539] %v608
          %v610 = vld [vmem:[%s546 + $0x7c] sm:%s539]
          %611 = vst [vmem:[%s547 + $0x7c] sm:%s539] %v610
          %v612 = vld [vmem:[%s546 + $0x80] sm:%s539]
          %613 = vst [vmem:[%s547 + $0x80] sm:%s539] %v612
          %v614 = vld [vmem:[%s546 + $0x88] sm:%s539]
          %615 = vst [vmem:[%s547 + $0x84] sm:%s539] %v614
          %v616 = vld [vmem:[%s546 + $0x84] sm:%s539]
          %617 = vst [vmem:[%s547 + $0x88] sm:%s539] %v616
          %v618 = vld [vmem:[%s546 + $0x8c] sm:%s539]
          %619 = vst [vmem:[%s547 + $0x8c] sm:%s539] %v618
          %v620 = vld [vmem:[%s546 + $0x90] sm:%s539]
          %621 = vst [vmem:[%s547 + $0x90] sm:%s539] %v620
          %v622 = vld [vmem:[%s546 + $0x98] sm:%s539]
          %623 = vst [vmem:[%s547 + $0x94] sm:%s539] %v622
          %v624 = vld [vmem:[%s546 + $0x94] sm:%s539]
          %625 = vst [vmem:[%s547 + $0x98] sm:%s539] %v624
          %v626 = vld [vmem:[%s546 + $0x9c] sm:%s539]
          %627 = vst [vmem:[%s547 + $0x9c] sm:%s539] %v626
          %v628 = vld [vmem:[%s546 + $0xa0] sm:%s539]
          %629 = vst [vmem:[%s547 + $0xa0] sm:%s539] %v628
          %v630 = vld [vmem:[%s546 + $0xa8] sm:%s539]
          %631 = vst [vmem:[%s547 + $0xa4] sm:%s539] %v630
          %v632 = vld [vmem:[%s546 + $0xa4] sm:%s539]
          %633 = vst [vmem:[%s547 + $0xa8] sm:%s539] %v632
          %v634 = vld [vmem:[%s546 + $0xac] sm:%s539]
          %635 = vst [vmem:[%s547 + $0xac] sm:%s539] %v634
          %v636 = vld [vmem:[%s546 + $0xb0] sm:%s539]
          %637 = vst [vmem:[%s547 + $0xb0] sm:%s539] %v636
          %v638 = vld [vmem:[%s546 + $0xb8] sm:%s539]
          %639 = vst [vmem:[%s547 + $0xb4] sm:%s539] %v638
          %v640 = vld [vmem:[%s546 + $0xb4] sm:%s539]
          %641 = vst [vmem:[%s547 + $0xb8] sm:%s539] %v640
          %v642 = vld [vmem:[%s546 + $0xbc] sm:%s539]
          %643 = vst [vmem:[%s547 + $0xbc] sm:%s539] %v642
          %v644 = vld [vmem:[%s546 + $0xc0] sm:%s539]
          %645 = vst [vmem:[%s547 + $0xc0] sm:%s539] %v644
          %v646 = vld [vmem:[%s546 + $0xc8] sm:%s539]
          %647 = vst [vmem:[%s547 + $0xc4] sm:%s539] %v646
          %v648 = vld [vmem:[%s546 + $0xc4] sm:%s539]
          %649 = vst [vmem:[%s547 + $0xc8] sm:%s539] %v648
          %v650 = vld [vmem:[%s546 + $0xcc] sm:%s539]
          %651 = vst [vmem:[%s547 + $0xcc] sm:%s539] %v650
          %v652 = vld [vmem:[%s546 + $0xd0] sm:%s539]
          %653 = vst [vmem:[%s547 + $0xd0] sm:%s539] %v652
          %v654 = vld [vmem:[%s546 + $0xd8] sm:%s539]
          %655 = vst [vmem:[%s547 + $0xd4] sm:%s539] %v654
          %v656 = vld [vmem:[%s546 + $0xd4] sm:%s539]
          %657 = vst [vmem:[%s547 + $0xd8] sm:%s539] %v656
          %v658 = vld [vmem:[%s546 + $0xdc] sm:%s539]
          %659 = vst [vmem:[%s547 + $0xdc] sm:%s539] %v658
          %v660 = vld [vmem:[%s546 + $0xe0] sm:%s539]
          %661 = vst [vmem:[%s547 + $0xe0] sm:%s539] %v660
          %v662 = vld [vmem:[%s546 + $0xe8] sm:%s539]
          %663 = vst [vmem:[%s547 + $0xe4] sm:%s539] %v662
          %v664 = vld [vmem:[%s546 + $0xe4] sm:%s539]
          %665 = vst [vmem:[%s547 + $0xe8] sm:%s539] %v664
          %v666 = vld [vmem:[%s546 + $0xec] sm:%s539]
          %667 = vst [vmem:[%s547 + $0xec] sm:%s539] %v666
          %v668 = vld [vmem:[%s546 + $0xf0] sm:%s539]
          %669 = vst [vmem:[%s547 + $0xf0] sm:%s539] %v668
          %v670 = vld [vmem:[%s546 + $0xf8] sm:%s539]
          %671 = vst [vmem:[%s547 + $0xf4] sm:%s539] %v670
          %v672 = vld [vmem:[%s546 + $0xf4] sm:%s539]
          %673 = vst [vmem:[%s547 + $0xf8] sm:%s539] %v672
          %v674 = vld [vmem:[%s546 + $0xfc] sm:%s539]
          %675 = vst [vmem:[%s547 + $0xfc] sm:%s539] %v674
          %v676 = vld [vmem:[%s546 + $0x100] sm:%s539]
          %677 = vst [vmem:[%s547 + $0x100] sm:%s539] %v676
          %v678 = vld [vmem:[%s546 + $0x108] sm:%s539]
          %679 = vst [vmem:[%s547 + $0x104] sm:%s539] %v678
          %v680 = vld [vmem:[%s546 + $0x104] sm:%s539]
          %681 = vst [vmem:[%s547 + $0x108] sm:%s539] %v680
          %v682 = vld [vmem:[%s546 + $0x10c] sm:%s539]
          %683 = vst [vmem:[%s547 + $0x10c] sm:%s539] %v682
          %v684 = vld [vmem:[%s546 + $0x110] sm:%s539]
          %685 = vst [vmem:[%s547 + $0x110] sm:%s539] %v684
          %v686 = vld [vmem:[%s546 + $0x118] sm:%s539]
          %687 = vst [vmem:[%s547 + $0x114] sm:%s539] %v686
          %v688 = vld [vmem:[%s546 + $0x114] sm:%s539]
          %689 = vst [vmem:[%s547 + $0x118] sm:%s539] %v688
          %v690 = vld [vmem:[%s546 + $0x11c] sm:%s539]
          %691 = vst [vmem:[%s547 + $0x11c] sm:%s539] %v690
          %v692 = vld [vmem:[%s546 + $0x120] sm:%s539]
          %693 = vst [vmem:[%s547 + $0x120] sm:%s539] %v692
          %v694 = vld [vmem:[%s546 + $0x128] sm:%s539]
          %695 = vst [vmem:[%s547 + $0x124] sm:%s539] %v694
          %v696 = vld [vmem:[%s546 + $0x124] sm:%s539]
          %697 = vst [vmem:[%s547 + $0x128] sm:%s539] %v696
          %v698 = vld [vmem:[%s546 + $0x12c] sm:%s539]
          %699 = vst [vmem:[%s547 + $0x12c] sm:%s539] %v698
          %v700 = vld [vmem:[%s546 + $0x130] sm:%s539]
          %701 = vst [vmem:[%s547 + $0x130] sm:%s539] %v700
          %v702 = vld [vmem:[%s546 + $0x138] sm:%s539]
          %703 = vst [vmem:[%s547 + $0x134] sm:%s539] %v702
          %v704 = vld [vmem:[%s546 + $0x134] sm:%s539]
          %705 = vst [vmem:[%s547 + $0x138] sm:%s539] %v704
          %v706 = vld [vmem:[%s546 + $0x13c] sm:%s539]
          %707 = vst [vmem:[%s547 + $0x13c] sm:%s539] %v706
          %v708 = vld [vmem:[%s546 + $0x140] sm:%s539]
          %709 = vst [vmem:[%s547 + $0x140] sm:%s539] %v708
          %v710 = vld [vmem:[%s546 + $0x148] sm:%s539]
          %711 = vst [vmem:[%s547 + $0x144] sm:%s539] %v710
          %v712 = vld [vmem:[%s546 + $0x144] sm:%s539]
          %713 = vst [vmem:[%s547 + $0x148] sm:%s539] %v712
          %v714 = vld [vmem:[%s546 + $0x14c] sm:%s539]
          %715 = vst [vmem:[%s547 + $0x14c] sm:%s539] %v714
          %v716 = vld [vmem:[%s546 + $0x150] sm:%s539]
          %717 = vst [vmem:[%s547 + $0x150] sm:%s539] %v716
          %v718 = vld [vmem:[%s546 + $0x158] sm:%s539]
          %719 = vst [vmem:[%s547 + $0x154] sm:%s539] %v718
          %v720 = vld [vmem:[%s546 + $0x154] sm:%s539]
          %721 = vst [vmem:[%s547 + $0x158] sm:%s539] %v720
          %v722 = vld [vmem:[%s546 + $0x15c] sm:%s539]
          %723 = vst [vmem:[%s547 + $0x15c] sm:%s539] %v722
          %v724 = vld [vmem:[%s546 + $0x160] sm:%s539]
          %725 = vst [vmem:[%s547 + $0x160] sm:%s539] %v724
          %v726 = vld [vmem:[%s546 + $0x168] sm:%s539]
          %727 = vst [vmem:[%s547 + $0x164] sm:%s539] %v726
          %v728 = vld [vmem:[%s546 + $0x164] sm:%s539]
          %729 = vst [vmem:[%s547 + $0x168] sm:%s539] %v728
          %v730 = vld [vmem:[%s546 + $0x16c] sm:%s539]
          %731 = vst [vmem:[%s547 + $0x16c] sm:%s539] %v730
          %v732 = vld [vmem:[%s546 + $0x170] sm:%s539]
          %733 = vst [vmem:[%s547 + $0x170] sm:%s539] %v732
          %v734 = vld [vmem:[%s546 + $0x178] sm:%s539]
          %735 = vst [vmem:[%s547 + $0x174] sm:%s539] %v734
          %v736 = vld [vmem:[%s546 + $0x174] sm:%s539]
          %737 = vst [vmem:[%s547 + $0x178] sm:%s539] %v736
          %v738 = vld [vmem:[%s546 + $0x17c] sm:%s539]
          %739 = vst [vmem:[%s547 + $0x17c] sm:%s539] %v738
          %v740 = vld [vmem:[%s546 + $0x180] sm:%s539]
          %741 = vst [vmem:[%s547 + $0x180] sm:%s539] %v740
          %v742 = vld [vmem:[%s546 + $0x188] sm:%s539]
          %743 = vst [vmem:[%s547 + $0x184] sm:%s539] %v742
          %v744 = vld [vmem:[%s546 + $0x184] sm:%s539]
          %745 = vst [vmem:[%s547 + $0x188] sm:%s539] %v744
          %v746 = vld [vmem:[%s546 + $0x18c] sm:%s539]
          %747 = vst [vmem:[%s547 + $0x18c] sm:%s539] %v746
          %v748 = vld [vmem:[%s546 + $0x190] sm:%s539]
          %749 = vst [vmem:[%s547 + $0x190] sm:%s539] %v748
          %v750 = vld [vmem:[%s546 + $0x198] sm:%s539]
          %751 = vst [vmem:[%s547 + $0x194] sm:%s539] %v750
          %v752 = vld [vmem:[%s546 + $0x194] sm:%s539]
          %753 = vst [vmem:[%s547 + $0x198] sm:%s539] %v752
          %v754 = vld [vmem:[%s546 + $0x19c] sm:%s539]
          %755 = vst [vmem:[%s547 + $0x19c] sm:%s539] %v754
          %v756 = vld [vmem:[%s546 + $0x1a0] sm:%s539]
          %757 = vst [vmem:[%s547 + $0x1a0] sm:%s539] %v756
          %v758 = vld [vmem:[%s546 + $0x1a8] sm:%s539]
          %759 = vst [vmem:[%s547 + $0x1a4] sm:%s539] %v758
          %v760 = vld [vmem:[%s546 + $0x1a4] sm:%s539]
          %761 = vst [vmem:[%s547 + $0x1a8] sm:%s539] %v760
          %v762 = vld [vmem:[%s546 + $0x1ac] sm:%s539]
          %763 = vst [vmem:[%s547 + $0x1ac] sm:%s539] %v762
          %v764 = vld [vmem:[%s546 + $0x1b0] sm:%s539]
          %765 = vst [vmem:[%s547 + $0x1b0] sm:%s539] %v764
          %v766 = vld [vmem:[%s546 + $0x1b8] sm:%s539]
          %767 = vst [vmem:[%s547 + $0x1b4] sm:%s539] %v766
          %v768 = vld [vmem:[%s546 + $0x1b4] sm:%s539]
          %769 = vst [vmem:[%s547 + $0x1b8] sm:%s539] %v768
          %v770 = vld [vmem:[%s546 + $0x1bc] sm:%s539]
          %771 = vst [vmem:[%s547 + $0x1bc] sm:%s539] %v770
          %v772 = vld [vmem:[%s546 + $0x1c0] sm:%s539]
          %773 = vst [vmem:[%s547 + $0x1c0] sm:%s539] %v772
          %v774 = vld [vmem:[%s546 + $0x1c8] sm:%s539]
          %775 = vst [vmem:[%s547 + $0x1c4] sm:%s539] %v774
          %v776 = vld [vmem:[%s546 + $0x1c4] sm:%s539]
          %777 = vst [vmem:[%s547 + $0x1c8] sm:%s539] %v776
          %v778 = vld [vmem:[%s546 + $0x1cc] sm:%s539]
          %779 = vst [vmem:[%s547 + $0x1cc] sm:%s539] %v778
          %v780 = vld [vmem:[%s546 + $0x1d0] sm:%s539]
          %781 = vst [vmem:[%s547 + $0x1d0] sm:%s539] %v780
          %v782 = vld [vmem:[%s546 + $0x1d8] sm:%s539]
          %783 = vst [vmem:[%s547 + $0x1d4] sm:%s539] %v782
          %v784 = vld [vmem:[%s546 + $0x1d4] sm:%s539]
          %785 = vst [vmem:[%s547 + $0x1d8] sm:%s539] %v784
          %v786 = vld [vmem:[%s546 + $0x1dc] sm:%s539]
          %787 = vst [vmem:[%s547 + $0x1dc] sm:%s539] %v786
          %v788 = vld [vmem:[%s546 + $0x1e0] sm:%s539]
          %789 = vst [vmem:[%s547 + $0x1e0] sm:%s539] %v788
          %v790 = vld [vmem:[%s546 + $0x1e8] sm:%s539]
          %791 = vst [vmem:[%s547 + $0x1e4] sm:%s539] %v790
          %v792 = vld [vmem:[%s546 + $0x1e4] sm:%s539]
          %793 = vst [vmem:[%s547 + $0x1e8] sm:%s539] %v792
          %v794 = vld [vmem:[%s546 + $0x1ec] sm:%s539]
          %795 = vst [vmem:[%s547 + $0x1ec] sm:%s539] %v794
          %v796 = vld [vmem:[%s546 + $0x1f0] sm:%s539]
          %797 = vst [vmem:[%s547 + $0x1f0] sm:%s539] %v796
          %v798 = vld [vmem:[%s546 + $0x1f8] sm:%s539]
          %799 = vst [vmem:[%s547 + $0x1f4] sm:%s539] %v798
          %v800 = vld [vmem:[%s546 + $0x1f4] sm:%s539]
          %801 = vst [vmem:[%s547 + $0x1f8] sm:%s539] %v800
          %v802 = vld [vmem:[%s546 + $0x1fc] sm:%s539]
          %803 = vst [vmem:[%s547 + $0x1fc] sm:%s539] %v802
        $region180: #{forward.1} parent=167 // loop_footer
          %s545 = sadd.s32 1, %s541
        $region181: #{forward.1} parent=167 // loop_footer_branch
          %540 = sbr.rel target = $region177
        $region182: #{forward.1} parent=167 // loop_exit
          _
      $region168: #{forward.1} parent=152 // pred_fallthru
        _
    $region153: #{forward.1} parent=1 // pred_fallthru
      _
    // Predicated region
    $region154: #{forward.1} parent=1 // pred_check
      %p253 = pneg %p249
    $region155: #{forward.1} parent=1 // pred_check_branch
      %255 = sbr.rel (%p253) target = $region157
    $region156: #{forward.1} parent=1 // pred_region
      %s256 = sshllo.u32 0, 4
      loop: start=0, step=1, limit=1
      $region158: #{forward.1} parent=156 // loop_pre_header
        _
      $region159: #{forward.1} parent=156 // loop_header
        %s258 = sphi 0, %s262
        %p259 = scmp.ge.s32.totalorder %s258, 1
        %s263 = sphi %s6, %s6
        %s264 = sphi [#allocation2], [#allocation2]
      $region160: #{forward.1} parent=156 // loop_header_branch
        %261 = sbr.rel (%p259) target = $region164
      $region161: #{forward.1} parent=156 // loop_body
        %v265 = vld [vmem:[%s263] sm:%s256]
        %266 = vst [vmem:[%s264] sm:%s256] %v265
        %v267 = vld [vmem:[%s263 + $0x8] sm:%s256]
        %268 = vst [vmem:[%s264 + $0x4] sm:%s256] %v267
        %v269 = vld [vmem:[%s263 + $0x4] sm:%s256]
        %270 = vst [vmem:[%s264 + $0x8] sm:%s256] %v269
        %v271 = vld [vmem:[%s263 + $0xc] sm:%s256]
        %272 = vst [vmem:[%s264 + $0xc] sm:%s256] %v271
        %v273 = vld [vmem:[%s263 + $0x10] sm:%s256]
        %274 = vst [vmem:[%s264 + $0x10] sm:%s256] %v273
        %v275 = vld [vmem:[%s263 + $0x18] sm:%s256]
        %276 = vst [vmem:[%s264 + $0x14] sm:%s256] %v275
        %v277 = vld [vmem:[%s263 + $0x14] sm:%s256]
        %278 = vst [vmem:[%s264 + $0x18] sm:%s256] %v277
        %v279 = vld [vmem:[%s263 + $0x1c] sm:%s256]
        %280 = vst [vmem:[%s264 + $0x1c] sm:%s256] %v279
        %v281 = vld [vmem:[%s263 + $0x20] sm:%s256]
        %282 = vst [vmem:[%s264 + $0x20] sm:%s256] %v281
        %v283 = vld [vmem:[%s263 + $0x28] sm:%s256]
        %284 = vst [vmem:[%s264 + $0x24] sm:%s256] %v283
        %v285 = vld [vmem:[%s263 + $0x24] sm:%s256]
        %286 = vst [vmem:[%s264 + $0x28] sm:%s256] %v285
        %v287 = vld [vmem:[%s263 + $0x2c] sm:%s256]
        %288 = vst [vmem:[%s264 + $0x2c] sm:%s256] %v287
        %v289 = vld [vmem:[%s263 + $0x30] sm:%s256]
        %290 = vst [vmem:[%s264 + $0x30] sm:%s256] %v289
        %v291 = vld [vmem:[%s263 + $0x38] sm:%s256]
        %292 = vst [vmem:[%s264 + $0x34] sm:%s256] %v291
        %v293 = vld [vmem:[%s263 + $0x34] sm:%s256]
        %294 = vst [vmem:[%s264 + $0x38] sm:%s256] %v293
        %v295 = vld [vmem:[%s263 + $0x3c] sm:%s256]
        %296 = vst [vmem:[%s264 + $0x3c] sm:%s256] %v295
        %v297 = vld [vmem:[%s263 + $0x40] sm:%s256]
        %298 = vst [vmem:[%s264 + $0x40] sm:%s256] %v297
        %v299 = vld [vmem:[%s263 + $0x48] sm:%s256]
        %300 = vst [vmem:[%s264 + $0x44] sm:%s256] %v299
        %v301 = vld [vmem:[%s263 + $0x44] sm:%s256]
        %302 = vst [vmem:[%s264 + $0x48] sm:%s256] %v301
        %v303 = vld [vmem:[%s263 + $0x4c] sm:%s256]
        %304 = vst [vmem:[%s264 + $0x4c] sm:%s256] %v303
        %v305 = vld [vmem:[%s263 + $0x50] sm:%s256]
        %306 = vst [vmem:[%s264 + $0x50] sm:%s256] %v305
        %v307 = vld [vmem:[%s263 + $0x58] sm:%s256]
        %308 = vst [vmem:[%s264 + $0x54] sm:%s256] %v307
        %v309 = vld [vmem:[%s263 + $0x54] sm:%s256]
        %310 = vst [vmem:[%s264 + $0x58] sm:%s256] %v309
        %v311 = vld [vmem:[%s263 + $0x5c] sm:%s256]
        %312 = vst [vmem:[%s264 + $0x5c] sm:%s256] %v311
        %v313 = vld [vmem:[%s263 + $0x60] sm:%s256]
        %314 = vst [vmem:[%s264 + $0x60] sm:%s256] %v313
        %v315 = vld [vmem:[%s263 + $0x68] sm:%s256]
        %316 = vst [vmem:[%s264 + $0x64] sm:%s256] %v315
        %v317 = vld [vmem:[%s263 + $0x64] sm:%s256]
        %318 = vst [vmem:[%s264 + $0x68] sm:%s256] %v317
        %v319 = vld [vmem:[%s263 + $0x6c] sm:%s256]
        %320 = vst [vmem:[%s264 + $0x6c] sm:%s256] %v319
        %v321 = vld [vmem:[%s263 + $0x70] sm:%s256]
        %322 = vst [vmem:[%s264 + $0x70] sm:%s256] %v321
        %v323 = vld [vmem:[%s263 + $0x78] sm:%s256]
        %324 = vst [vmem:[%s264 + $0x74] sm:%s256] %v323
        %v325 = vld [vmem:[%s263 + $0x74] sm:%s256]
        %326 = vst [vmem:[%s264 + $0x78] sm:%s256] %v325
        %v327 = vld [vmem:[%s263 + $0x7c] sm:%s256]
        %328 = vst [vmem:[%s264 + $0x7c] sm:%s256] %v327
        %v329 = vld [vmem:[%s263 + $0x80] sm:%s256]
        %330 = vst [vmem:[%s264 + $0x80] sm:%s256] %v329
        %v331 = vld [vmem:[%s263 + $0x88] sm:%s256]
        %332 = vst [vmem:[%s264 + $0x84] sm:%s256] %v331
        %v333 = vld [vmem:[%s263 + $0x84] sm:%s256]
        %334 = vst [vmem:[%s264 + $0x88] sm:%s256] %v333
        %v335 = vld [vmem:[%s263 + $0x8c] sm:%s256]
        %336 = vst [vmem:[%s264 + $0x8c] sm:%s256] %v335
        %v337 = vld [vmem:[%s263 + $0x90] sm:%s256]
        %338 = vst [vmem:[%s264 + $0x90] sm:%s256] %v337
        %v339 = vld [vmem:[%s263 + $0x98] sm:%s256]
        %340 = vst [vmem:[%s264 + $0x94] sm:%s256] %v339
        %v341 = vld [vmem:[%s263 + $0x94] sm:%s256]
        %342 = vst [vmem:[%s264 + $0x98] sm:%s256] %v341
        %v343 = vld [vmem:[%s263 + $0x9c] sm:%s256]
        %344 = vst [vmem:[%s264 + $0x9c] sm:%s256] %v343
        %v345 = vld [vmem:[%s263 + $0xa0] sm:%s256]
        %346 = vst [vmem:[%s264 + $0xa0] sm:%s256] %v345
        %v347 = vld [vmem:[%s263 + $0xa8] sm:%s256]
        %348 = vst [vmem:[%s264 + $0xa4] sm:%s256] %v347
        %v349 = vld [vmem:[%s263 + $0xa4] sm:%s256]
        %350 = vst [vmem:[%s264 + $0xa8] sm:%s256] %v349
        %v351 = vld [vmem:[%s263 + $0xac] sm:%s256]
        %352 = vst [vmem:[%s264 + $0xac] sm:%s256] %v351
        %v353 = vld [vmem:[%s263 + $0xb0] sm:%s256]
        %354 = vst [vmem:[%s264 + $0xb0] sm:%s256] %v353
        %v355 = vld [vmem:[%s263 + $0xb8] sm:%s256]
        %356 = vst [vmem:[%s264 + $0xb4] sm:%s256] %v355
        %v357 = vld [vmem:[%s263 + $0xb4] sm:%s256]
        %358 = vst [vmem:[%s264 + $0xb8] sm:%s256] %v357
        %v359 = vld [vmem:[%s263 + $0xbc] sm:%s256]
        %360 = vst [vmem:[%s264 + $0xbc] sm:%s256] %v359
        %v361 = vld [vmem:[%s263 + $0xc0] sm:%s256]
        %362 = vst [vmem:[%s264 + $0xc0] sm:%s256] %v361
        %v363 = vld [vmem:[%s263 + $0xc8] sm:%s256]
        %364 = vst [vmem:[%s264 + $0xc4] sm:%s256] %v363
        %v365 = vld [vmem:[%s263 + $0xc4] sm:%s256]
        %366 = vst [vmem:[%s264 + $0xc8] sm:%s256] %v365
        %v367 = vld [vmem:[%s263 + $0xcc] sm:%s256]
        %368 = vst [vmem:[%s264 + $0xcc] sm:%s256] %v367
        %v369 = vld [vmem:[%s263 + $0xd0] sm:%s256]
        %370 = vst [vmem:[%s264 + $0xd0] sm:%s256] %v369
        %v371 = vld [vmem:[%s263 + $0xd8] sm:%s256]
        %372 = vst [vmem:[%s264 + $0xd4] sm:%s256] %v371
        %v373 = vld [vmem:[%s263 + $0xd4] sm:%s256]
        %374 = vst [vmem:[%s264 + $0xd8] sm:%s256] %v373
        %v375 = vld [vmem:[%s263 + $0xdc] sm:%s256]
        %376 = vst [vmem:[%s264 + $0xdc] sm:%s256] %v375
        %v377 = vld [vmem:[%s263 + $0xe0] sm:%s256]
        %378 = vst [vmem:[%s264 + $0xe0] sm:%s256] %v377
        %v379 = vld [vmem:[%s263 + $0xe8] sm:%s256]
        %380 = vst [vmem:[%s264 + $0xe4] sm:%s256] %v379
        %v381 = vld [vmem:[%s263 + $0xe4] sm:%s256]
        %382 = vst [vmem:[%s264 + $0xe8] sm:%s256] %v381
        %v383 = vld [vmem:[%s263 + $0xec] sm:%s256]
        %384 = vst [vmem:[%s264 + $0xec] sm:%s256] %v383
        %v385 = vld [vmem:[%s263 + $0xf0] sm:%s256]
        %386 = vst [vmem:[%s264 + $0xf0] sm:%s256] %v385
        %v387 = vld [vmem:[%s263 + $0xf8] sm:%s256]
        %388 = vst [vmem:[%s264 + $0xf4] sm:%s256] %v387
        %v389 = vld [vmem:[%s263 + $0xf4] sm:%s256]
        %390 = vst [vmem:[%s264 + $0xf8] sm:%s256] %v389
        %v391 = vld [vmem:[%s263 + $0xfc] sm:%s256]
        %392 = vst [vmem:[%s264 + $0xfc] sm:%s256] %v391
        %v393 = vld [vmem:[%s263 + $0x100] sm:%s256]
        %394 = vst [vmem:[%s264 + $0x100] sm:%s256] %v393
        %v395 = vld [vmem:[%s263 + $0x108] sm:%s256]
        %396 = vst [vmem:[%s264 + $0x104] sm:%s256] %v395
        %v397 = vld [vmem:[%s263 + $0x104] sm:%s256]
        %398 = vst [vmem:[%s264 + $0x108] sm:%s256] %v397
        %v399 = vld [vmem:[%s263 + $0x10c] sm:%s256]
        %400 = vst [vmem:[%s264 + $0x10c] sm:%s256] %v399
        %v401 = vld [vmem:[%s263 + $0x110] sm:%s256]
        %402 = vst [vmem:[%s264 + $0x110] sm:%s256] %v401
        %v403 = vld [vmem:[%s263 + $0x118] sm:%s256]
        %404 = vst [vmem:[%s264 + $0x114] sm:%s256] %v403
        %v405 = vld [vmem:[%s263 + $0x114] sm:%s256]
        %406 = vst [vmem:[%s264 + $0x118] sm:%s256] %v405
        %v407 = vld [vmem:[%s263 + $0x11c] sm:%s256]
        %408 = vst [vmem:[%s264 + $0x11c] sm:%s256] %v407
        %v409 = vld [vmem:[%s263 + $0x120] sm:%s256]
        %410 = vst [vmem:[%s264 + $0x120] sm:%s256] %v409
        %v411 = vld [vmem:[%s263 + $0x128] sm:%s256]
        %412 = vst [vmem:[%s264 + $0x124] sm:%s256] %v411
        %v413 = vld [vmem:[%s263 + $0x124] sm:%s256]
        %414 = vst [vmem:[%s264 + $0x128] sm:%s256] %v413
        %v415 = vld [vmem:[%s263 + $0x12c] sm:%s256]
        %416 = vst [vmem:[%s264 + $0x12c] sm:%s256] %v415
        %v417 = vld [vmem:[%s263 + $0x130] sm:%s256]
        %418 = vst [vmem:[%s264 + $0x130] sm:%s256] %v417
        %v419 = vld [vmem:[%s263 + $0x138] sm:%s256]
        %420 = vst [vmem:[%s264 + $0x134] sm:%s256] %v419
        %v421 = vld [vmem:[%s263 + $0x134] sm:%s256]
        %422 = vst [vmem:[%s264 + $0x138] sm:%s256] %v421
        %v423 = vld [vmem:[%s263 + $0x13c] sm:%s256]
        %424 = vst [vmem:[%s264 + $0x13c] sm:%s256] %v423
        %v425 = vld [vmem:[%s263 + $0x140] sm:%s256]
        %426 = vst [vmem:[%s264 + $0x140] sm:%s256] %v425
        %v427 = vld [vmem:[%s263 + $0x148] sm:%s256]
        %428 = vst [vmem:[%s264 + $0x144] sm:%s256] %v427
        %v429 = vld [vmem:[%s263 + $0x144] sm:%s256]
        %430 = vst [vmem:[%s264 + $0x148] sm:%s256] %v429
        %v431 = vld [vmem:[%s263 + $0x14c] sm:%s256]
        %432 = vst [vmem:[%s264 + $0x14c] sm:%s256] %v431
        %v433 = vld [vmem:[%s263 + $0x150] sm:%s256]
        %434 = vst [vmem:[%s264 + $0x150] sm:%s256] %v433
        %v435 = vld [vmem:[%s263 + $0x158] sm:%s256]
        %436 = vst [vmem:[%s264 + $0x154] sm:%s256] %v435
        %v437 = vld [vmem:[%s263 + $0x154] sm:%s256]
        %438 = vst [vmem:[%s264 + $0x158] sm:%s256] %v437
        %v439 = vld [vmem:[%s263 + $0x15c] sm:%s256]
        %440 = vst [vmem:[%s264 + $0x15c] sm:%s256] %v439
        %v441 = vld [vmem:[%s263 + $0x160] sm:%s256]
        %442 = vst [vmem:[%s264 + $0x160] sm:%s256] %v441
        %v443 = vld [vmem:[%s263 + $0x168] sm:%s256]
        %444 = vst [vmem:[%s264 + $0x164] sm:%s256] %v443
        %v445 = vld [vmem:[%s263 + $0x164] sm:%s256]
        %446 = vst [vmem:[%s264 + $0x168] sm:%s256] %v445
        %v447 = vld [vmem:[%s263 + $0x16c] sm:%s256]
        %448 = vst [vmem:[%s264 + $0x16c] sm:%s256] %v447
        %v449 = vld [vmem:[%s263 + $0x170] sm:%s256]
        %450 = vst [vmem:[%s264 + $0x170] sm:%s256] %v449
        %v451 = vld [vmem:[%s263 + $0x178] sm:%s256]
        %452 = vst [vmem:[%s264 + $0x174] sm:%s256] %v451
        %v453 = vld [vmem:[%s263 + $0x174] sm:%s256]
        %454 = vst [vmem:[%s264 + $0x178] sm:%s256] %v453
        %v455 = vld [vmem:[%s263 + $0x17c] sm:%s256]
        %456 = vst [vmem:[%s264 + $0x17c] sm:%s256] %v455
        %v457 = vld [vmem:[%s263 + $0x180] sm:%s256]
        %458 = vst [vmem:[%s264 + $0x180] sm:%s256] %v457
        %v459 = vld [vmem:[%s263 + $0x188] sm:%s256]
        %460 = vst [vmem:[%s264 + $0x184] sm:%s256] %v459
        %v461 = vld [vmem:[%s263 + $0x184] sm:%s256]
        %462 = vst [vmem:[%s264 + $0x188] sm:%s256] %v461
        %v463 = vld [vmem:[%s263 + $0x18c] sm:%s256]
        %464 = vst [vmem:[%s264 + $0x18c] sm:%s256] %v463
        %v465 = vld [vmem:[%s263 + $0x190] sm:%s256]
        %466 = vst [vmem:[%s264 + $0x190] sm:%s256] %v465
        %v467 = vld [vmem:[%s263 + $0x198] sm:%s256]
        %468 = vst [vmem:[%s264 + $0x194] sm:%s256] %v467
        %v469 = vld [vmem:[%s263 + $0x194] sm:%s256]
        %470 = vst [vmem:[%s264 + $0x198] sm:%s256] %v469
        %v471 = vld [vmem:[%s263 + $0x19c] sm:%s256]
        %472 = vst [vmem:[%s264 + $0x19c] sm:%s256] %v471
        %v473 = vld [vmem:[%s263 + $0x1a0] sm:%s256]
        %474 = vst [vmem:[%s264 + $0x1a0] sm:%s256] %v473
        %v475 = vld [vmem:[%s263 + $0x1a8] sm:%s256]
        %476 = vst [vmem:[%s264 + $0x1a4] sm:%s256] %v475
        %v477 = vld [vmem:[%s263 + $0x1a4] sm:%s256]
        %478 = vst [vmem:[%s264 + $0x1a8] sm:%s256] %v477
        %v479 = vld [vmem:[%s263 + $0x1ac] sm:%s256]
        %480 = vst [vmem:[%s264 + $0x1ac] sm:%s256] %v479
        %v481 = vld [vmem:[%s263 + $0x1b0] sm:%s256]
        %482 = vst [vmem:[%s264 + $0x1b0] sm:%s256] %v481
        %v483 = vld [vmem:[%s263 + $0x1b8] sm:%s256]
        %484 = vst [vmem:[%s264 + $0x1b4] sm:%s256] %v483
        %v485 = vld [vmem:[%s263 + $0x1b4] sm:%s256]
        %486 = vst [vmem:[%s264 + $0x1b8] sm:%s256] %v485
        %v487 = vld [vmem:[%s263 + $0x1bc] sm:%s256]
        %488 = vst [vmem:[%s264 + $0x1bc] sm:%s256] %v487
        %v489 = vld [vmem:[%s263 + $0x1c0] sm:%s256]
        %490 = vst [vmem:[%s264 + $0x1c0] sm:%s256] %v489
        %v491 = vld [vmem:[%s263 + $0x1c8] sm:%s256]
        %492 = vst [vmem:[%s264 + $0x1c4] sm:%s256] %v491
        %v493 = vld [vmem:[%s263 + $0x1c4] sm:%s256]
        %494 = vst [vmem:[%s264 + $0x1c8] sm:%s256] %v493
        %v495 = vld [vmem:[%s263 + $0x1cc] sm:%s256]
        %496 = vst [vmem:[%s264 + $0x1cc] sm:%s256] %v495
        %v497 = vld [vmem:[%s263 + $0x1d0] sm:%s256]
        %498 = vst [vmem:[%s264 + $0x1d0] sm:%s256] %v497
        %v499 = vld [vmem:[%s263 + $0x1d8] sm:%s256]
        %500 = vst [vmem:[%s264 + $0x1d4] sm:%s256] %v499
        %v501 = vld [vmem:[%s263 + $0x1d4] sm:%s256]
        %502 = vst [vmem:[%s264 + $0x1d8] sm:%s256] %v501
        %v503 = vld [vmem:[%s263 + $0x1dc] sm:%s256]
        %504 = vst [vmem:[%s264 + $0x1dc] sm:%s256] %v503
        %v505 = vld [vmem:[%s263 + $0x1e0] sm:%s256]
        %506 = vst [vmem:[%s264 + $0x1e0] sm:%s256] %v505
        %v507 = vld [vmem:[%s263 + $0x1e8] sm:%s256]
        %508 = vst [vmem:[%s264 + $0x1e4] sm:%s256] %v507
        %v509 = vld [vmem:[%s263 + $0x1e4] sm:%s256]
        %510 = vst [vmem:[%s264 + $0x1e8] sm:%s256] %v509
        %v511 = vld [vmem:[%s263 + $0x1ec] sm:%s256]
        %512 = vst [vmem:[%s264 + $0x1ec] sm:%s256] %v511
        %v513 = vld [vmem:[%s263 + $0x1f0] sm:%s256]
        %514 = vst [vmem:[%s264 + $0x1f0] sm:%s256] %v513
        %v515 = vld [vmem:[%s263 + $0x1f8] sm:%s256]
        %516 = vst [vmem:[%s264 + $0x1f4] sm:%s256] %v515
        %v517 = vld [vmem:[%s263 + $0x1f4] sm:%s256]
        %518 = vst [vmem:[%s264 + $0x1f8] sm:%s256] %v517
        %v519 = vld [vmem:[%s263 + $0x1fc] sm:%s256]
        %520 = vst [vmem:[%s264 + $0x1fc] sm:%s256] %v519
      $region162: #{forward.1} parent=156 // loop_footer
        %s262 = sadd.s32 1, %s258
      $region163: #{forward.1} parent=156 // loop_footer_branch
        %257 = sbr.rel target = $region159
      $region164: #{forward.1} parent=156 // loop_exit
        _
    $region157: #{forward.1} parent=1 // pred_fallthru
      _
    // Predicated region
    $region183: #{forward.1} parent=1 // pred_check
      _
    $region184: #{forward.1} parent=1 // pred_check_branch
      %806 = sbr.rel (0) target = $region186
    $region185: #{forward.1} parent=1 // pred_region
      %807 = vsyncadd [#allocation5], 8192
    $region186: #{forward.1} parent=1 // pred_fallthru
      _
    %s808 = scalar_lea.sflag [#allocation5], 1
    %p810 = scmp.lt.u32.totalorder 4, 8
    %p811 = pneg %p810
    // Predicated region
    $region187: #{forward.1} parent=1 // pred_check
      _
    $region188: #{forward.1} parent=1 // pred_check_branch
      %813 = sbr.rel (%p810) target = $region190
    $region189: #{forward.1} parent=1 // pred_region
      %s1082 = sand.u32 4, 7
      %p1083 = scmp.eq.s32.totalorder %s1082, 0
      %p1084 = pneg %p1083
      // Predicated region
      $region202: #{forward.1} parent=189 // pred_check
        _
      $region203: #{forward.1} parent=189 // pred_check_branch
        %1086 = sbr.rel (%p1083) target = $region205
      $region204: #{forward.1} parent=189 // pred_region
        %s1087 = sand.u32 4, 7
        %s1088 = ssub.s32 4, %s1087
        %s1089 = scalar_lea.vmem %s18, %s1088
        %s1090 = ssub.s32 4, %s1087
        %s1091 = scalar_lea.vmem [#allocation3], %s1090
        loop: start=0, step=1, limit=1
        $region206: #{forward.1} parent=204 // loop_pre_header
          _
        $region207: #{forward.1} parent=204 // loop_header
          %s1093 = sphi 0, %s1097
          %p1094 = scmp.ge.s32.totalorder %s1093, 1
          %s1098 = sphi %s18, %s18
          %s1099 = sphi [#allocation3], [#allocation3]
        $region208: #{forward.1} parent=204 // loop_header_branch
          %1096 = sbr.rel (%p1094) target = $region212
        $region209: #{forward.1} parent=204 // loop_body
          _
        $region210: #{forward.1} parent=204 // loop_footer
          %s1097 = sadd.s32 1, %s1093
        $region211: #{forward.1} parent=204 // loop_footer_branch
          %1092 = sbr.rel target = $region207
        $region212: #{forward.1} parent=204 // loop_exit
          _
        %s1100 = sshllo.u32 0, %s1087
        loop: start=0, step=1, limit=1
        $region213: #{forward.1} parent=204 // loop_pre_header
          _
        $region214: #{forward.1} parent=204 // loop_header
          %s1102 = sphi 0, %s1106
          %p1103 = scmp.ge.s32.totalorder %s1102, 1
          %s1107 = sphi %s1089, %s1089
          %s1108 = sphi %s1091, %s1091
        $region215: #{forward.1} parent=204 // loop_header_branch
          %1105 = sbr.rel (%p1103) target = $region219
        $region216: #{forward.1} parent=204 // loop_body
          %v1109 = vld [vmem:[%s1107] sm:%s1100]
          %1110 = vst [vmem:[%s1108] sm:%s1100] %v1109
          %v1111 = vld [vmem:[%s1107 + $0x10] sm:%s1100]
          %1112 = vst [vmem:[%s1108 + $0x4] sm:%s1100] %v1111
          %v1113 = vld [vmem:[%s1107 + $0x4] sm:%s1100]
          %1114 = vst [vmem:[%s1108 + $0x8] sm:%s1100] %v1113
          %v1115 = vld [vmem:[%s1107 + $0x14] sm:%s1100]
          %1116 = vst [vmem:[%s1108 + $0xc] sm:%s1100] %v1115
          %v1117 = vld [vmem:[%s1107 + $0x8] sm:%s1100]
          %1118 = vst [vmem:[%s1108 + $0x10] sm:%s1100] %v1117
          %v1119 = vld [vmem:[%s1107 + $0x18] sm:%s1100]
          %1120 = vst [vmem:[%s1108 + $0x14] sm:%s1100] %v1119
          %v1121 = vld [vmem:[%s1107 + $0xc] sm:%s1100]
          %1122 = vst [vmem:[%s1108 + $0x18] sm:%s1100] %v1121
          %v1123 = vld [vmem:[%s1107 + $0x1c] sm:%s1100]
          %1124 = vst [vmem:[%s1108 + $0x1c] sm:%s1100] %v1123
          %v1125 = vld [vmem:[%s1107 + $0x20] sm:%s1100]
          %1126 = vst [vmem:[%s1108 + $0x20] sm:%s1100] %v1125
          %v1127 = vld [vmem:[%s1107 + $0x30] sm:%s1100]
          %1128 = vst [vmem:[%s1108 + $0x24] sm:%s1100] %v1127
          %v1129 = vld [vmem:[%s1107 + $0x24] sm:%s1100]
          %1130 = vst [vmem:[%s1108 + $0x28] sm:%s1100] %v1129
          %v1131 = vld [vmem:[%s1107 + $0x34] sm:%s1100]
          %1132 = vst [vmem:[%s1108 + $0x2c] sm:%s1100] %v1131
          %v1133 = vld [vmem:[%s1107 + $0x28] sm:%s1100]
          %1134 = vst [vmem:[%s1108 + $0x30] sm:%s1100] %v1133
          %v1135 = vld [vmem:[%s1107 + $0x38] sm:%s1100]
          %1136 = vst [vmem:[%s1108 + $0x34] sm:%s1100] %v1135
          %v1137 = vld [vmem:[%s1107 + $0x2c] sm:%s1100]
          %1138 = vst [vmem:[%s1108 + $0x38] sm:%s1100] %v1137
          %v1139 = vld [vmem:[%s1107 + $0x3c] sm:%s1100]
          %1140 = vst [vmem:[%s1108 + $0x3c] sm:%s1100] %v1139
          %v1141 = vld [vmem:[%s1107 + $0x40] sm:%s1100]
          %1142 = vst [vmem:[%s1108 + $0x40] sm:%s1100] %v1141
          %v1143 = vld [vmem:[%s1107 + $0x50] sm:%s1100]
          %1144 = vst [vmem:[%s1108 + $0x44] sm:%s1100] %v1143
          %v1145 = vld [vmem:[%s1107 + $0x44] sm:%s1100]
          %1146 = vst [vmem:[%s1108 + $0x48] sm:%s1100] %v1145
          %v1147 = vld [vmem:[%s1107 + $0x54] sm:%s1100]
          %1148 = vst [vmem:[%s1108 + $0x4c] sm:%s1100] %v1147
          %v1149 = vld [vmem:[%s1107 + $0x48] sm:%s1100]
          %1150 = vst [vmem:[%s1108 + $0x50] sm:%s1100] %v1149
          %v1151 = vld [vmem:[%s1107 + $0x58] sm:%s1100]
          %1152 = vst [vmem:[%s1108 + $0x54] sm:%s1100] %v1151
          %v1153 = vld [vmem:[%s1107 + $0x4c] sm:%s1100]
          %1154 = vst [vmem:[%s1108 + $0x58] sm:%s1100] %v1153
          %v1155 = vld [vmem:[%s1107 + $0x5c] sm:%s1100]
          %1156 = vst [vmem:[%s1108 + $0x5c] sm:%s1100] %v1155
          %v1157 = vld [vmem:[%s1107 + $0x60] sm:%s1100]
          %1158 = vst [vmem:[%s1108 + $0x60] sm:%s1100] %v1157
          %v1159 = vld [vmem:[%s1107 + $0x70] sm:%s1100]
          %1160 = vst [vmem:[%s1108 + $0x64] sm:%s1100] %v1159
          %v1161 = vld [vmem:[%s1107 + $0x64] sm:%s1100]
          %1162 = vst [vmem:[%s1108 + $0x68] sm:%s1100] %v1161
          %v1163 = vld [vmem:[%s1107 + $0x74] sm:%s1100]
          %1164 = vst [vmem:[%s1108 + $0x6c] sm:%s1100] %v1163
          %v1165 = vld [vmem:[%s1107 + $0x68] sm:%s1100]
          %1166 = vst [vmem:[%s1108 + $0x70] sm:%s1100] %v1165
          %v1167 = vld [vmem:[%s1107 + $0x78] sm:%s1100]
          %1168 = vst [vmem:[%s1108 + $0x74] sm:%s1100] %v1167
          %v1169 = vld [vmem:[%s1107 + $0x6c] sm:%s1100]
          %1170 = vst [vmem:[%s1108 + $0x78] sm:%s1100] %v1169
          %v1171 = vld [vmem:[%s1107 + $0x7c] sm:%s1100]
          %1172 = vst [vmem:[%s1108 + $0x7c] sm:%s1100] %v1171
          %v1173 = vld [vmem:[%s1107 + $0x80] sm:%s1100]
          %1174 = vst [vmem:[%s1108 + $0x80] sm:%s1100] %v1173
          %v1175 = vld [vmem:[%s1107 + $0x90] sm:%s1100]
          %1176 = vst [vmem:[%s1108 + $0x84] sm:%s1100] %v1175
          %v1177 = vld [vmem:[%s1107 + $0x84] sm:%s1100]
          %1178 = vst [vmem:[%s1108 + $0x88] sm:%s1100] %v1177
          %v1179 = vld [vmem:[%s1107 + $0x94] sm:%s1100]
          %1180 = vst [vmem:[%s1108 + $0x8c] sm:%s1100] %v1179
          %v1181 = vld [vmem:[%s1107 + $0x88] sm:%s1100]
          %1182 = vst [vmem:[%s1108 + $0x90] sm:%s1100] %v1181
          %v1183 = vld [vmem:[%s1107 + $0x98] sm:%s1100]
          %1184 = vst [vmem:[%s1108 + $0x94] sm:%s1100] %v1183
          %v1185 = vld [vmem:[%s1107 + $0x8c] sm:%s1100]
          %1186 = vst [vmem:[%s1108 + $0x98] sm:%s1100] %v1185
          %v1187 = vld [vmem:[%s1107 + $0x9c] sm:%s1100]
          %1188 = vst [vmem:[%s1108 + $0x9c] sm:%s1100] %v1187
          %v1189 = vld [vmem:[%s1107 + $0xa0] sm:%s1100]
          %1190 = vst [vmem:[%s1108 + $0xa0] sm:%s1100] %v1189
          %v1191 = vld [vmem:[%s1107 + $0xb0] sm:%s1100]
          %1192 = vst [vmem:[%s1108 + $0xa4] sm:%s1100] %v1191
          %v1193 = vld [vmem:[%s1107 + $0xa4] sm:%s1100]
          %1194 = vst [vmem:[%s1108 + $0xa8] sm:%s1100] %v1193
          %v1195 = vld [vmem:[%s1107 + $0xb4] sm:%s1100]
          %1196 = vst [vmem:[%s1108 + $0xac] sm:%s1100] %v1195
          %v1197 = vld [vmem:[%s1107 + $0xa8] sm:%s1100]
          %1198 = vst [vmem:[%s1108 + $0xb0] sm:%s1100] %v1197
          %v1199 = vld [vmem:[%s1107 + $0xb8] sm:%s1100]
          %1200 = vst [vmem:[%s1108 + $0xb4] sm:%s1100] %v1199
          %v1201 = vld [vmem:[%s1107 + $0xac] sm:%s1100]
          %1202 = vst [vmem:[%s1108 + $0xb8] sm:%s1100] %v1201
          %v1203 = vld [vmem:[%s1107 + $0xbc] sm:%s1100]
          %1204 = vst [vmem:[%s1108 + $0xbc] sm:%s1100] %v1203
          %v1205 = vld [vmem:[%s1107 + $0xc0] sm:%s1100]
          %1206 = vst [vmem:[%s1108 + $0xc0] sm:%s1100] %v1205
          %v1207 = vld [vmem:[%s1107 + $0xd0] sm:%s1100]
          %1208 = vst [vmem:[%s1108 + $0xc4] sm:%s1100] %v1207
          %v1209 = vld [vmem:[%s1107 + $0xc4] sm:%s1100]
          %1210 = vst [vmem:[%s1108 + $0xc8] sm:%s1100] %v1209
          %v1211 = vld [vmem:[%s1107 + $0xd4] sm:%s1100]
          %1212 = vst [vmem:[%s1108 + $0xcc] sm:%s1100] %v1211
          %v1213 = vld [vmem:[%s1107 + $0xc8] sm:%s1100]
          %1214 = vst [vmem:[%s1108 + $0xd0] sm:%s1100] %v1213
          %v1215 = vld [vmem:[%s1107 + $0xd8] sm:%s1100]
          %1216 = vst [vmem:[%s1108 + $0xd4] sm:%s1100] %v1215
          %v1217 = vld [vmem:[%s1107 + $0xcc] sm:%s1100]
          %1218 = vst [vmem:[%s1108 + $0xd8] sm:%s1100] %v1217
          %v1219 = vld [vmem:[%s1107 + $0xdc] sm:%s1100]
          %1220 = vst [vmem:[%s1108 + $0xdc] sm:%s1100] %v1219
          %v1221 = vld [vmem:[%s1107 + $0xe0] sm:%s1100]
          %1222 = vst [vmem:[%s1108 + $0xe0] sm:%s1100] %v1221
          %v1223 = vld [vmem:[%s1107 + $0xf0] sm:%s1100]
          %1224 = vst [vmem:[%s1108 + $0xe4] sm:%s1100] %v1223
          %v1225 = vld [vmem:[%s1107 + $0xe4] sm:%s1100]
          %1226 = vst [vmem:[%s1108 + $0xe8] sm:%s1100] %v1225
          %v1227 = vld [vmem:[%s1107 + $0xf4] sm:%s1100]
          %1228 = vst [vmem:[%s1108 + $0xec] sm:%s1100] %v1227
          %v1229 = vld [vmem:[%s1107 + $0xe8] sm:%s1100]
          %1230 = vst [vmem:[%s1108 + $0xf0] sm:%s1100] %v1229
          %v1231 = vld [vmem:[%s1107 + $0xf8] sm:%s1100]
          %1232 = vst [vmem:[%s1108 + $0xf4] sm:%s1100] %v1231
          %v1233 = vld [vmem:[%s1107 + $0xec] sm:%s1100]
          %1234 = vst [vmem:[%s1108 + $0xf8] sm:%s1100] %v1233
          %v1235 = vld [vmem:[%s1107 + $0xfc] sm:%s1100]
          %1236 = vst [vmem:[%s1108 + $0xfc] sm:%s1100] %v1235
          %v1237 = vld [vmem:[%s1107 + $0x100] sm:%s1100]
          %1238 = vst [vmem:[%s1108 + $0x100] sm:%s1100] %v1237
          %v1239 = vld [vmem:[%s1107 + $0x110] sm:%s1100]
          %1240 = vst [vmem:[%s1108 + $0x104] sm:%s1100] %v1239
          %v1241 = vld [vmem:[%s1107 + $0x104] sm:%s1100]
          %1242 = vst [vmem:[%s1108 + $0x108] sm:%s1100] %v1241
          %v1243 = vld [vmem:[%s1107 + $0x114] sm:%s1100]
          %1244 = vst [vmem:[%s1108 + $0x10c] sm:%s1100] %v1243
          %v1245 = vld [vmem:[%s1107 + $0x108] sm:%s1100]
          %1246 = vst [vmem:[%s1108 + $0x110] sm:%s1100] %v1245
          %v1247 = vld [vmem:[%s1107 + $0x118] sm:%s1100]
          %1248 = vst [vmem:[%s1108 + $0x114] sm:%s1100] %v1247
          %v1249 = vld [vmem:[%s1107 + $0x10c] sm:%s1100]
          %1250 = vst [vmem:[%s1108 + $0x118] sm:%s1100] %v1249
          %v1251 = vld [vmem:[%s1107 + $0x11c] sm:%s1100]
          %1252 = vst [vmem:[%s1108 + $0x11c] sm:%s1100] %v1251
          %v1253 = vld [vmem:[%s1107 + $0x120] sm:%s1100]
          %1254 = vst [vmem:[%s1108 + $0x120] sm:%s1100] %v1253
          %v1255 = vld [vmem:[%s1107 + $0x130] sm:%s1100]
          %1256 = vst [vmem:[%s1108 + $0x124] sm:%s1100] %v1255
          %v1257 = vld [vmem:[%s1107 + $0x124] sm:%s1100]
          %1258 = vst [vmem:[%s1108 + $0x128] sm:%s1100] %v1257
          %v1259 = vld [vmem:[%s1107 + $0x134] sm:%s1100]
          %1260 = vst [vmem:[%s1108 + $0x12c] sm:%s1100] %v1259
          %v1261 = vld [vmem:[%s1107 + $0x128] sm:%s1100]
          %1262 = vst [vmem:[%s1108 + $0x130] sm:%s1100] %v1261
          %v1263 = vld [vmem:[%s1107 + $0x138] sm:%s1100]
          %1264 = vst [vmem:[%s1108 + $0x134] sm:%s1100] %v1263
          %v1265 = vld [vmem:[%s1107 + $0x12c] sm:%s1100]
          %1266 = vst [vmem:[%s1108 + $0x138] sm:%s1100] %v1265
          %v1267 = vld [vmem:[%s1107 + $0x13c] sm:%s1100]
          %1268 = vst [vmem:[%s1108 + $0x13c] sm:%s1100] %v1267
          %v1269 = vld [vmem:[%s1107 + $0x140] sm:%s1100]
          %1270 = vst [vmem:[%s1108 + $0x140] sm:%s1100] %v1269
          %v1271 = vld [vmem:[%s1107 + $0x150] sm:%s1100]
          %1272 = vst [vmem:[%s1108 + $0x144] sm:%s1100] %v1271
          %v1273 = vld [vmem:[%s1107 + $0x144] sm:%s1100]
          %1274 = vst [vmem:[%s1108 + $0x148] sm:%s1100] %v1273
          %v1275 = vld [vmem:[%s1107 + $0x154] sm:%s1100]
          %1276 = vst [vmem:[%s1108 + $0x14c] sm:%s1100] %v1275
          %v1277 = vld [vmem:[%s1107 + $0x148] sm:%s1100]
          %1278 = vst [vmem:[%s1108 + $0x150] sm:%s1100] %v1277
          %v1279 = vld [vmem:[%s1107 + $0x158] sm:%s1100]
          %1280 = vst [vmem:[%s1108 + $0x154] sm:%s1100] %v1279
          %v1281 = vld [vmem:[%s1107 + $0x14c] sm:%s1100]
          %1282 = vst [vmem:[%s1108 + $0x158] sm:%s1100] %v1281
          %v1283 = vld [vmem:[%s1107 + $0x15c] sm:%s1100]
          %1284 = vst [vmem:[%s1108 + $0x15c] sm:%s1100] %v1283
          %v1285 = vld [vmem:[%s1107 + $0x160] sm:%s1100]
          %1286 = vst [vmem:[%s1108 + $0x160] sm:%s1100] %v1285
          %v1287 = vld [vmem:[%s1107 + $0x170] sm:%s1100]
          %1288 = vst [vmem:[%s1108 + $0x164] sm:%s1100] %v1287
          %v1289 = vld [vmem:[%s1107 + $0x164] sm:%s1100]
          %1290 = vst [vmem:[%s1108 + $0x168] sm:%s1100] %v1289
          %v1291 = vld [vmem:[%s1107 + $0x174] sm:%s1100]
          %1292 = vst [vmem:[%s1108 + $0x16c] sm:%s1100] %v1291
          %v1293 = vld [vmem:[%s1107 + $0x168] sm:%s1100]
          %1294 = vst [vmem:[%s1108 + $0x170] sm:%s1100] %v1293
          %v1295 = vld [vmem:[%s1107 + $0x178] sm:%s1100]
          %1296 = vst [vmem:[%s1108 + $0x174] sm:%s1100] %v1295
          %v1297 = vld [vmem:[%s1107 + $0x16c] sm:%s1100]
          %1298 = vst [vmem:[%s1108 + $0x178] sm:%s1100] %v1297
          %v1299 = vld [vmem:[%s1107 + $0x17c] sm:%s1100]
          %1300 = vst [vmem:[%s1108 + $0x17c] sm:%s1100] %v1299
          %v1301 = vld [vmem:[%s1107 + $0x180] sm:%s1100]
          %1302 = vst [vmem:[%s1108 + $0x180] sm:%s1100] %v1301
          %v1303 = vld [vmem:[%s1107 + $0x190] sm:%s1100]
          %1304 = vst [vmem:[%s1108 + $0x184] sm:%s1100] %v1303
          %v1305 = vld [vmem:[%s1107 + $0x184] sm:%s1100]
          %1306 = vst [vmem:[%s1108 + $0x188] sm:%s1100] %v1305
          %v1307 = vld [vmem:[%s1107 + $0x194] sm:%s1100]
          %1308 = vst [vmem:[%s1108 + $0x18c] sm:%s1100] %v1307
          %v1309 = vld [vmem:[%s1107 + $0x188] sm:%s1100]
          %1310 = vst [vmem:[%s1108 + $0x190] sm:%s1100] %v1309
          %v1311 = vld [vmem:[%s1107 + $0x198] sm:%s1100]
          %1312 = vst [vmem:[%s1108 + $0x194] sm:%s1100] %v1311
          %v1313 = vld [vmem:[%s1107 + $0x18c] sm:%s1100]
          %1314 = vst [vmem:[%s1108 + $0x198] sm:%s1100] %v1313
          %v1315 = vld [vmem:[%s1107 + $0x19c] sm:%s1100]
          %1316 = vst [vmem:[%s1108 + $0x19c] sm:%s1100] %v1315
          %v1317 = vld [vmem:[%s1107 + $0x1a0] sm:%s1100]
          %1318 = vst [vmem:[%s1108 + $0x1a0] sm:%s1100] %v1317
          %v1319 = vld [vmem:[%s1107 + $0x1b0] sm:%s1100]
          %1320 = vst [vmem:[%s1108 + $0x1a4] sm:%s1100] %v1319
          %v1321 = vld [vmem:[%s1107 + $0x1a4] sm:%s1100]
          %1322 = vst [vmem:[%s1108 + $0x1a8] sm:%s1100] %v1321
          %v1323 = vld [vmem:[%s1107 + $0x1b4] sm:%s1100]
          %1324 = vst [vmem:[%s1108 + $0x1ac] sm:%s1100] %v1323
          %v1325 = vld [vmem:[%s1107 + $0x1a8] sm:%s1100]
          %1326 = vst [vmem:[%s1108 + $0x1b0] sm:%s1100] %v1325
          %v1327 = vld [vmem:[%s1107 + $0x1b8] sm:%s1100]
          %1328 = vst [vmem:[%s1108 + $0x1b4] sm:%s1100] %v1327
          %v1329 = vld [vmem:[%s1107 + $0x1ac] sm:%s1100]
          %1330 = vst [vmem:[%s1108 + $0x1b8] sm:%s1100] %v1329
          %v1331 = vld [vmem:[%s1107 + $0x1bc] sm:%s1100]
          %1332 = vst [vmem:[%s1108 + $0x1bc] sm:%s1100] %v1331
          %v1333 = vld [vmem:[%s1107 + $0x1c0] sm:%s1100]
          %1334 = vst [vmem:[%s1108 + $0x1c0] sm:%s1100] %v1333
          %v1335 = vld [vmem:[%s1107 + $0x1d0] sm:%s1100]
          %1336 = vst [vmem:[%s1108 + $0x1c4] sm:%s1100] %v1335
          %v1337 = vld [vmem:[%s1107 + $0x1c4] sm:%s1100]
          %1338 = vst [vmem:[%s1108 + $0x1c8] sm:%s1100] %v1337
          %v1339 = vld [vmem:[%s1107 + $0x1d4] sm:%s1100]
          %1340 = vst [vmem:[%s1108 + $0x1cc] sm:%s1100] %v1339
          %v1341 = vld [vmem:[%s1107 + $0x1c8] sm:%s1100]
          %1342 = vst [vmem:[%s1108 + $0x1d0] sm:%s1100] %v1341
          %v1343 = vld [vmem:[%s1107 + $0x1d8] sm:%s1100]
          %1344 = vst [vmem:[%s1108 + $0x1d4] sm:%s1100] %v1343
          %v1345 = vld [vmem:[%s1107 + $0x1cc] sm:%s1100]
          %1346 = vst [vmem:[%s1108 + $0x1d8] sm:%s1100] %v1345
          %v1347 = vld [vmem:[%s1107 + $0x1dc] sm:%s1100]
          %1348 = vst [vmem:[%s1108 + $0x1dc] sm:%s1100] %v1347
          %v1349 = vld [vmem:[%s1107 + $0x1e0] sm:%s1100]
          %1350 = vst [vmem:[%s1108 + $0x1e0] sm:%s1100] %v1349
          %v1351 = vld [vmem:[%s1107 + $0x1f0] sm:%s1100]
          %1352 = vst [vmem:[%s1108 + $0x1e4] sm:%s1100] %v1351
          %v1353 = vld [vmem:[%s1107 + $0x1e4] sm:%s1100]
          %1354 = vst [vmem:[%s1108 + $0x1e8] sm:%s1100] %v1353
          %v1355 = vld [vmem:[%s1107 + $0x1f4] sm:%s1100]
          %1356 = vst [vmem:[%s1108 + $0x1ec] sm:%s1100] %v1355
          %v1357 = vld [vmem:[%s1107 + $0x1e8] sm:%s1100]
          %1358 = vst [vmem:[%s1108 + $0x1f0] sm:%s1100] %v1357
          %v1359 = vld [vmem:[%s1107 + $0x1f8] sm:%s1100]
          %1360 = vst [vmem:[%s1108 + $0x1f4] sm:%s1100] %v1359
          %v1361 = vld [vmem:[%s1107 + $0x1ec] sm:%s1100]
          %1362 = vst [vmem:[%s1108 + $0x1f8] sm:%s1100] %v1361
          %v1363 = vld [vmem:[%s1107 + $0x1fc] sm:%s1100]
          %1364 = vst [vmem:[%s1108 + $0x1fc] sm:%s1100] %v1363
        $region217: #{forward.1} parent=204 // loop_footer
          %s1106 = sadd.s32 1, %s1102
        $region218: #{forward.1} parent=204 // loop_footer_branch
          %1101 = sbr.rel target = $region214
        $region219: #{forward.1} parent=204 // loop_exit
          _
      $region205: #{forward.1} parent=189 // pred_fallthru
        _
    $region190: #{forward.1} parent=1 // pred_fallthru
      _
    // Predicated region
    $region191: #{forward.1} parent=1 // pred_check
      %p814 = pneg %p810
    $region192: #{forward.1} parent=1 // pred_check_branch
      %816 = sbr.rel (%p814) target = $region194
    $region193: #{forward.1} parent=1 // pred_region
      %s817 = sshllo.u32 0, 4
      loop: start=0, step=1, limit=1
      $region195: #{forward.1} parent=193 // loop_pre_header
        _
      $region196: #{forward.1} parent=193 // loop_header
        %s819 = sphi 0, %s823
        %p820 = scmp.ge.s32.totalorder %s819, 1
        %s824 = sphi %s18, %s18
        %s825 = sphi [#allocation3], [#allocation3]
      $region197: #{forward.1} parent=193 // loop_header_branch
        %822 = sbr.rel (%p820) target = $region201
      $region198: #{forward.1} parent=193 // loop_body
        %v826 = vld [vmem:[%s824] sm:%s817]
        %827 = vst [vmem:[%s825] sm:%s817] %v826
        %v828 = vld [vmem:[%s824 + $0x10] sm:%s817]
        %829 = vst [vmem:[%s825 + $0x4] sm:%s817] %v828
        %v830 = vld [vmem:[%s824 + $0x4] sm:%s817]
        %831 = vst [vmem:[%s825 + $0x8] sm:%s817] %v830
        %v832 = vld [vmem:[%s824 + $0x14] sm:%s817]
        %833 = vst [vmem:[%s825 + $0xc] sm:%s817] %v832
        %v834 = vld [vmem:[%s824 + $0x8] sm:%s817]
        %835 = vst [vmem:[%s825 + $0x10] sm:%s817] %v834
        %v836 = vld [vmem:[%s824 + $0x18] sm:%s817]
        %837 = vst [vmem:[%s825 + $0x14] sm:%s817] %v836
        %v838 = vld [vmem:[%s824 + $0xc] sm:%s817]
        %839 = vst [vmem:[%s825 + $0x18] sm:%s817] %v838
        %v840 = vld [vmem:[%s824 + $0x1c] sm:%s817]
        %841 = vst [vmem:[%s825 + $0x1c] sm:%s817] %v840
        %v842 = vld [vmem:[%s824 + $0x20] sm:%s817]
        %843 = vst [vmem:[%s825 + $0x20] sm:%s817] %v842
        %v844 = vld [vmem:[%s824 + $0x30] sm:%s817]
        %845 = vst [vmem:[%s825 + $0x24] sm:%s817] %v844
        %v846 = vld [vmem:[%s824 + $0x24] sm:%s817]
        %847 = vst [vmem:[%s825 + $0x28] sm:%s817] %v846
        %v848 = vld [vmem:[%s824 + $0x34] sm:%s817]
        %849 = vst [vmem:[%s825 + $0x2c] sm:%s817] %v848
        %v850 = vld [vmem:[%s824 + $0x28] sm:%s817]
        %851 = vst [vmem:[%s825 + $0x30] sm:%s817] %v850
        %v852 = vld [vmem:[%s824 + $0x38] sm:%s817]
        %853 = vst [vmem:[%s825 + $0x34] sm:%s817] %v852
        %v854 = vld [vmem:[%s824 + $0x2c] sm:%s817]
        %855 = vst [vmem:[%s825 + $0x38] sm:%s817] %v854
        %v856 = vld [vmem:[%s824 + $0x3c] sm:%s817]
        %857 = vst [vmem:[%s825 + $0x3c] sm:%s817] %v856
        %v858 = vld [vmem:[%s824 + $0x40] sm:%s817]
        %859 = vst [vmem:[%s825 + $0x40] sm:%s817] %v858
        %v860 = vld [vmem:[%s824 + $0x50] sm:%s817]
        %861 = vst [vmem:[%s825 + $0x44] sm:%s817] %v860
        %v862 = vld [vmem:[%s824 + $0x44] sm:%s817]
        %863 = vst [vmem:[%s825 + $0x48] sm:%s817] %v862
        %v864 = vld [vmem:[%s824 + $0x54] sm:%s817]
        %865 = vst [vmem:[%s825 + $0x4c] sm:%s817] %v864
        %v866 = vld [vmem:[%s824 + $0x48] sm:%s817]
        %867 = vst [vmem:[%s825 + $0x50] sm:%s817] %v866
        %v868 = vld [vmem:[%s824 + $0x58] sm:%s817]
        %869 = vst [vmem:[%s825 + $0x54] sm:%s817] %v868
        %v870 = vld [vmem:[%s824 + $0x4c] sm:%s817]
        %871 = vst [vmem:[%s825 + $0x58] sm:%s817] %v870
        %v872 = vld [vmem:[%s824 + $0x5c] sm:%s817]
        %873 = vst [vmem:[%s825 + $0x5c] sm:%s817] %v872
        %v874 = vld [vmem:[%s824 + $0x60] sm:%s817]
        %875 = vst [vmem:[%s825 + $0x60] sm:%s817] %v874
        %v876 = vld [vmem:[%s824 + $0x70] sm:%s817]
        %877 = vst [vmem:[%s825 + $0x64] sm:%s817] %v876
        %v878 = vld [vmem:[%s824 + $0x64] sm:%s817]
        %879 = vst [vmem:[%s825 + $0x68] sm:%s817] %v878
        %v880 = vld [vmem:[%s824 + $0x74] sm:%s817]
        %881 = vst [vmem:[%s825 + $0x6c] sm:%s817] %v880
        %v882 = vld [vmem:[%s824 + $0x68] sm:%s817]
        %883 = vst [vmem:[%s825 + $0x70] sm:%s817] %v882
        %v884 = vld [vmem:[%s824 + $0x78] sm:%s817]
        %885 = vst [vmem:[%s825 + $0x74] sm:%s817] %v884
        %v886 = vld [vmem:[%s824 + $0x6c] sm:%s817]
        %887 = vst [vmem:[%s825 + $0x78] sm:%s817] %v886
        %v888 = vld [vmem:[%s824 + $0x7c] sm:%s817]
        %889 = vst [vmem:[%s825 + $0x7c] sm:%s817] %v888
        %v890 = vld [vmem:[%s824 + $0x80] sm:%s817]
        %891 = vst [vmem:[%s825 + $0x80] sm:%s817] %v890
        %v892 = vld [vmem:[%s824 + $0x90] sm:%s817]
        %893 = vst [vmem:[%s825 + $0x84] sm:%s817] %v892
        %v894 = vld [vmem:[%s824 + $0x84] sm:%s817]
        %895 = vst [vmem:[%s825 + $0x88] sm:%s817] %v894
        %v896 = vld [vmem:[%s824 + $0x94] sm:%s817]
        %897 = vst [vmem:[%s825 + $0x8c] sm:%s817] %v896
        %v898 = vld [vmem:[%s824 + $0x88] sm:%s817]
        %899 = vst [vmem:[%s825 + $0x90] sm:%s817] %v898
        %v900 = vld [vmem:[%s824 + $0x98] sm:%s817]
        %901 = vst [vmem:[%s825 + $0x94] sm:%s817] %v900
        %v902 = vld [vmem:[%s824 + $0x8c] sm:%s817]
        %903 = vst [vmem:[%s825 + $0x98] sm:%s817] %v902
        %v904 = vld [vmem:[%s824 + $0x9c] sm:%s817]
        %905 = vst [vmem:[%s825 + $0x9c] sm:%s817] %v904
        %v906 = vld [vmem:[%s824 + $0xa0] sm:%s817]
        %907 = vst [vmem:[%s825 + $0xa0] sm:%s817] %v906
        %v908 = vld [vmem:[%s824 + $0xb0] sm:%s817]
        %909 = vst [vmem:[%s825 + $0xa4] sm:%s817] %v908
        %v910 = vld [vmem:[%s824 + $0xa4] sm:%s817]
        %911 = vst [vmem:[%s825 + $0xa8] sm:%s817] %v910
        %v912 = vld [vmem:[%s824 + $0xb4] sm:%s817]
        %913 = vst [vmem:[%s825 + $0xac] sm:%s817] %v912
        %v914 = vld [vmem:[%s824 + $0xa8] sm:%s817]
        %915 = vst [vmem:[%s825 + $0xb0] sm:%s817] %v914
        %v916 = vld [vmem:[%s824 + $0xb8] sm:%s817]
        %917 = vst [vmem:[%s825 + $0xb4] sm:%s817] %v916
        %v918 = vld [vmem:[%s824 + $0xac] sm:%s817]
        %919 = vst [vmem:[%s825 + $0xb8] sm:%s817] %v918
        %v920 = vld [vmem:[%s824 + $0xbc] sm:%s817]
        %921 = vst [vmem:[%s825 + $0xbc] sm:%s817] %v920
        %v922 = vld [vmem:[%s824 + $0xc0] sm:%s817]
        %923 = vst [vmem:[%s825 + $0xc0] sm:%s817] %v922
        %v924 = vld [vmem:[%s824 + $0xd0] sm:%s817]
        %925 = vst [vmem:[%s825 + $0xc4] sm:%s817] %v924
        %v926 = vld [vmem:[%s824 + $0xc4] sm:%s817]
        %927 = vst [vmem:[%s825 + $0xc8] sm:%s817] %v926
        %v928 = vld [vmem:[%s824 + $0xd4] sm:%s817]
        %929 = vst [vmem:[%s825 + $0xcc] sm:%s817] %v928
        %v930 = vld [vmem:[%s824 + $0xc8] sm:%s817]
        %931 = vst [vmem:[%s825 + $0xd0] sm:%s817] %v930
        %v932 = vld [vmem:[%s824 + $0xd8] sm:%s817]
        %933 = vst [vmem:[%s825 + $0xd4] sm:%s817] %v932
        %v934 = vld [vmem:[%s824 + $0xcc] sm:%s817]
        %935 = vst [vmem:[%s825 + $0xd8] sm:%s817] %v934
        %v936 = vld [vmem:[%s824 + $0xdc] sm:%s817]
        %937 = vst [vmem:[%s825 + $0xdc] sm:%s817] %v936
        %v938 = vld [vmem:[%s824 + $0xe0] sm:%s817]
        %939 = vst [vmem:[%s825 + $0xe0] sm:%s817] %v938
        %v940 = vld [vmem:[%s824 + $0xf0] sm:%s817]
        %941 = vst [vmem:[%s825 + $0xe4] sm:%s817] %v940
        %v942 = vld [vmem:[%s824 + $0xe4] sm:%s817]
        %943 = vst [vmem:[%s825 + $0xe8] sm:%s817] %v942
        %v944 = vld [vmem:[%s824 + $0xf4] sm:%s817]
        %945 = vst [vmem:[%s825 + $0xec] sm:%s817] %v944
        %v946 = vld [vmem:[%s824 + $0xe8] sm:%s817]
        %947 = vst [vmem:[%s825 + $0xf0] sm:%s817] %v946
        %v948 = vld [vmem:[%s824 + $0xf8] sm:%s817]
        %949 = vst [vmem:[%s825 + $0xf4] sm:%s817] %v948
        %v950 = vld [vmem:[%s824 + $0xec] sm:%s817]
        %951 = vst [vmem:[%s825 + $0xf8] sm:%s817] %v950
        %v952 = vld [vmem:[%s824 + $0xfc] sm:%s817]
        %953 = vst [vmem:[%s825 + $0xfc] sm:%s817] %v952
        %v954 = vld [vmem:[%s824 + $0x100] sm:%s817]
        %955 = vst [vmem:[%s825 + $0x100] sm:%s817] %v954
        %v956 = vld [vmem:[%s824 + $0x110] sm:%s817]
        %957 = vst [vmem:[%s825 + $0x104] sm:%s817] %v956
        %v958 = vld [vmem:[%s824 + $0x104] sm:%s817]
        %959 = vst [vmem:[%s825 + $0x108] sm:%s817] %v958
        %v960 = vld [vmem:[%s824 + $0x114] sm:%s817]
        %961 = vst [vmem:[%s825 + $0x10c] sm:%s817] %v960
        %v962 = vld [vmem:[%s824 + $0x108] sm:%s817]
        %963 = vst [vmem:[%s825 + $0x110] sm:%s817] %v962
        %v964 = vld [vmem:[%s824 + $0x118] sm:%s817]
        %965 = vst [vmem:[%s825 + $0x114] sm:%s817] %v964
        %v966 = vld [vmem:[%s824 + $0x10c] sm:%s817]
        %967 = vst [vmem:[%s825 + $0x118] sm:%s817] %v966
        %v968 = vld [vmem:[%s824 + $0x11c] sm:%s817]
        %969 = vst [vmem:[%s825 + $0x11c] sm:%s817] %v968
        %v970 = vld [vmem:[%s824 + $0x120] sm:%s817]
        %971 = vst [vmem:[%s825 + $0x120] sm:%s817] %v970
        %v972 = vld [vmem:[%s824 + $0x130] sm:%s817]
        %973 = vst [vmem:[%s825 + $0x124] sm:%s817] %v972
        %v974 = vld [vmem:[%s824 + $0x124] sm:%s817]
        %975 = vst [vmem:[%s825 + $0x128] sm:%s817] %v974
        %v976 = vld [vmem:[%s824 + $0x134] sm:%s817]
        %977 = vst [vmem:[%s825 + $0x12c] sm:%s817] %v976
        %v978 = vld [vmem:[%s824 + $0x128] sm:%s817]
        %979 = vst [vmem:[%s825 + $0x130] sm:%s817] %v978
        %v980 = vld [vmem:[%s824 + $0x138] sm:%s817]
        %981 = vst [vmem:[%s825 + $0x134] sm:%s817] %v980
        %v982 = vld [vmem:[%s824 + $0x12c] sm:%s817]
        %983 = vst [vmem:[%s825 + $0x138] sm:%s817] %v982
        %v984 = vld [vmem:[%s824 + $0x13c] sm:%s817]
        %985 = vst [vmem:[%s825 + $0x13c] sm:%s817] %v984
        %v986 = vld [vmem:[%s824 + $0x140] sm:%s817]
        %987 = vst [vmem:[%s825 + $0x140] sm:%s817] %v986
        %v988 = vld [vmem:[%s824 + $0x150] sm:%s817]
        %989 = vst [vmem:[%s825 + $0x144] sm:%s817] %v988
        %v990 = vld [vmem:[%s824 + $0x144] sm:%s817]
        %991 = vst [vmem:[%s825 + $0x148] sm:%s817] %v990
        %v992 = vld [vmem:[%s824 + $0x154] sm:%s817]
        %993 = vst [vmem:[%s825 + $0x14c] sm:%s817] %v992
        %v994 = vld [vmem:[%s824 + $0x148] sm:%s817]
        %995 = vst [vmem:[%s825 + $0x150] sm:%s817] %v994
        %v996 = vld [vmem:[%s824 + $0x158] sm:%s817]
        %997 = vst [vmem:[%s825 + $0x154] sm:%s817] %v996
        %v998 = vld [vmem:[%s824 + $0x14c] sm:%s817]
        %999 = vst [vmem:[%s825 + $0x158] sm:%s817] %v998
        %v1000 = vld [vmem:[%s824 + $0x15c] sm:%s817]
        %1001 = vst [vmem:[%s825 + $0x15c] sm:%s817] %v1000
        %v1002 = vld [vmem:[%s824 + $0x160] sm:%s817]
        %1003 = vst [vmem:[%s825 + $0x160] sm:%s817] %v1002
        %v1004 = vld [vmem:[%s824 + $0x170] sm:%s817]
        %1005 = vst [vmem:[%s825 + $0x164] sm:%s817] %v1004
        %v1006 = vld [vmem:[%s824 + $0x164] sm:%s817]
        %1007 = vst [vmem:[%s825 + $0x168] sm:%s817] %v1006
        %v1008 = vld [vmem:[%s824 + $0x174] sm:%s817]
        %1009 = vst [vmem:[%s825 + $0x16c] sm:%s817] %v1008
        %v1010 = vld [vmem:[%s824 + $0x168] sm:%s817]
        %1011 = vst [vmem:[%s825 + $0x170] sm:%s817] %v1010
        %v1012 = vld [vmem:[%s824 + $0x178] sm:%s817]
        %1013 = vst [vmem:[%s825 + $0x174] sm:%s817] %v1012
        %v1014 = vld [vmem:[%s824 + $0x16c] sm:%s817]
        %1015 = vst [vmem:[%s825 + $0x178] sm:%s817] %v1014
        %v1016 = vld [vmem:[%s824 + $0x17c] sm:%s817]
        %1017 = vst [vmem:[%s825 + $0x17c] sm:%s817] %v1016
        %v1018 = vld [vmem:[%s824 + $0x180] sm:%s817]
        %1019 = vst [vmem:[%s825 + $0x180] sm:%s817] %v1018
        %v1020 = vld [vmem:[%s824 + $0x190] sm:%s817]
        %1021 = vst [vmem:[%s825 + $0x184] sm:%s817] %v1020
        %v1022 = vld [vmem:[%s824 + $0x184] sm:%s817]
        %1023 = vst [vmem:[%s825 + $0x188] sm:%s817] %v1022
        %v1024 = vld [vmem:[%s824 + $0x194] sm:%s817]
        %1025 = vst [vmem:[%s825 + $0x18c] sm:%s817] %v1024
        %v1026 = vld [vmem:[%s824 + $0x188] sm:%s817]
        %1027 = vst [vmem:[%s825 + $0x190] sm:%s817] %v1026
        %v1028 = vld [vmem:[%s824 + $0x198] sm:%s817]
        %1029 = vst [vmem:[%s825 + $0x194] sm:%s817] %v1028
        %v1030 = vld [vmem:[%s824 + $0x18c] sm:%s817]
        %1031 = vst [vmem:[%s825 + $0x198] sm:%s817] %v1030
        %v1032 = vld [vmem:[%s824 + $0x19c] sm:%s817]
        %1033 = vst [vmem:[%s825 + $0x19c] sm:%s817] %v1032
        %v1034 = vld [vmem:[%s824 + $0x1a0] sm:%s817]
        %1035 = vst [vmem:[%s825 + $0x1a0] sm:%s817] %v1034
        %v1036 = vld [vmem:[%s824 + $0x1b0] sm:%s817]
        %1037 = vst [vmem:[%s825 + $0x1a4] sm:%s817] %v1036
        %v1038 = vld [vmem:[%s824 + $0x1a4] sm:%s817]
        %1039 = vst [vmem:[%s825 + $0x1a8] sm:%s817] %v1038
        %v1040 = vld [vmem:[%s824 + $0x1b4] sm:%s817]
        %1041 = vst [vmem:[%s825 + $0x1ac] sm:%s817] %v1040
        %v1042 = vld [vmem:[%s824 + $0x1a8] sm:%s817]
        %1043 = vst [vmem:[%s825 + $0x1b0] sm:%s817] %v1042
        %v1044 = vld [vmem:[%s824 + $0x1b8] sm:%s817]
        %1045 = vst [vmem:[%s825 + $0x1b4] sm:%s817] %v1044
        %v1046 = vld [vmem:[%s824 + $0x1ac] sm:%s817]
        %1047 = vst [vmem:[%s825 + $0x1b8] sm:%s817] %v1046
        %v1048 = vld [vmem:[%s824 + $0x1bc] sm:%s817]
        %1049 = vst [vmem:[%s825 + $0x1bc] sm:%s817] %v1048
        %v1050 = vld [vmem:[%s824 + $0x1c0] sm:%s817]
        %1051 = vst [vmem:[%s825 + $0x1c0] sm:%s817] %v1050
        %v1052 = vld [vmem:[%s824 + $0x1d0] sm:%s817]
        %1053 = vst [vmem:[%s825 + $0x1c4] sm:%s817] %v1052
        %v1054 = vld [vmem:[%s824 + $0x1c4] sm:%s817]
        %1055 = vst [vmem:[%s825 + $0x1c8] sm:%s817] %v1054
        %v1056 = vld [vmem:[%s824 + $0x1d4] sm:%s817]
        %1057 = vst [vmem:[%s825 + $0x1cc] sm:%s817] %v1056
        %v1058 = vld [vmem:[%s824 + $0x1c8] sm:%s817]
        %1059 = vst [vmem:[%s825 + $0x1d0] sm:%s817] %v1058
        %v1060 = vld [vmem:[%s824 + $0x1d8] sm:%s817]
        %1061 = vst [vmem:[%s825 + $0x1d4] sm:%s817] %v1060
        %v1062 = vld [vmem:[%s824 + $0x1cc] sm:%s817]
        %1063 = vst [vmem:[%s825 + $0x1d8] sm:%s817] %v1062
        %v1064 = vld [vmem:[%s824 + $0x1dc] sm:%s817]
        %1065 = vst [vmem:[%s825 + $0x1dc] sm:%s817] %v1064
        %v1066 = vld [vmem:[%s824 + $0x1e0] sm:%s817]
        %1067 = vst [vmem:[%s825 + $0x1e0] sm:%s817] %v1066
        %v1068 = vld [vmem:[%s824 + $0x1f0] sm:%s817]
        %1069 = vst [vmem:[%s825 + $0x1e4] sm:%s817] %v1068
        %v1070 = vld [vmem:[%s824 + $0x1e4] sm:%s817]
        %1071 = vst [vmem:[%s825 + $0x1e8] sm:%s817] %v1070
        %v1072 = vld [vmem:[%s824 + $0x1f4] sm:%s817]
        %1073 = vst [vmem:[%s825 + $0x1ec] sm:%s817] %v1072
        %v1074 = vld [vmem:[%s824 + $0x1e8] sm:%s817]
        %1075 = vst [vmem:[%s825 + $0x1f0] sm:%s817] %v1074
        %v1076 = vld [vmem:[%s824 + $0x1f8] sm:%s817]
        %1077 = vst [vmem:[%s825 + $0x1f4] sm:%s817] %v1076
        %v1078 = vld [vmem:[%s824 + $0x1ec] sm:%s817]
        %1079 = vst [vmem:[%s825 + $0x1f8] sm:%s817] %v1078
        %v1080 = vld [vmem:[%s824 + $0x1fc] sm:%s817]
        %1081 = vst [vmem:[%s825 + $0x1fc] sm:%s817] %v1080
      $region199: #{forward.1} parent=193 // loop_footer
        %s823 = sadd.s32 1, %s819
      $region200: #{forward.1} parent=193 // loop_footer_branch
        %818 = sbr.rel target = $region196
      $region201: #{forward.1} parent=193 // loop_exit
        _
    $region194: #{forward.1} parent=1 // pred_fallthru
      _
    // Predicated region
    $region220: #{forward.1} parent=1 // pred_check
      _
    $region221: #{forward.1} parent=1 // pred_check_branch
      %1367 = sbr.rel (0) target = $region223
    $region222: #{forward.1} parent=1 // pred_region
      %1368 = vsyncadd %s808, 8192
    $region223: #{forward.1} parent=1 // pred_fallthru
      _
    %s1369 = scalar_lea.sflag [#allocation5], 2
    %s1371 = sshll.u32 1, 14
    %s1372 = sxor.u32 4294967295, %s1371
    %s1374 = sld [smem:[#allocation0]]
    %s1375 = sadd.s32 2, %s1374
    %s1377 = sshll.u32 7, 26
    %s1378 = sxor.u32 4294967295, %s1377
    %s1379 = sand.u32 0, %s1378
    %s1380 = sshll.u32 %s1375, 26
    %s1381 = sor.u32 %s1379, %s1380
    %s1382 = sshll.u32 [#allocation4], 4
    %s1383 = int_to_ptr.vmem [resolvable:$true] %s1382
    %1386 = sst [smem:[#allocation31]] 256
    %s1387 = scalar_lea.smem [#allocation31], 1
    %1388 = sst [smem:[%s1387]] 256
    %s1389 = scalar_lea.smem [#allocation31], 2
    %1390 = sst [smem:[%s1389]] 2
    %s1391 = scalar_lea.smem [#allocation31], 3
    %1392 = sst [smem:[%s1391]] 64
    %s1393 = scalar_lea.smem [#allocation31], 4
    %1394 = sst [smem:[%s1393]] 128
    %s1395 = scalar_lea.smem [#allocation31], 5
    %1396 = sst [smem:[%s1395]] 2
    %s1397 = scalar_lea.smem [#allocation31], 6
    %1398 = sst [smem:[%s1397]] 128
    %s1399 = scalar_lea.smem [#allocation31], 7
    %1400 = sst [smem:[%s1399]] 64
    %s1401 = scalar_lea.smem [#allocation31], 8
    %1402 = sst [smem:[%s1401]] 4
    %1404 = dma.general %s22, 8192, %s1383, %s1369, [#allocation30], [#allocation31], %s1381, 0
    %v1405 = vld [vmem:[%s0] sm:$0xf]
    %v1406 = vld [vmem:[%s2] sm:$0xff]
    %v1407 = vld [vmem:[%s2 + $0x8] sm:$0xff]
    %v1408 = vld [vmem:[%s2 + $0x10] sm:$0xff]
    %v1409 = vld [vmem:[%s2 + $0x18] sm:$0xff]
    %v1410 = vld [vmem:[%s2 + $0x20] sm:$0xff]
    %v1411 = vld [vmem:[%s2 + $0x28] sm:$0xff]
    %v1412 = vld [vmem:[%s2 + $0x30] sm:$0xff]
    %v1413 = vld [vmem:[%s2 + $0x38] sm:$0xff]
    %v1414 = vld [vmem:[%s2 + $0x40] sm:$0xff]
    %v1415 = vld [vmem:[%s2 + $0x48] sm:$0xff]
    %v1416 = vld [vmem:[%s2 + $0x50] sm:$0xff]
    %v1417 = vld [vmem:[%s2 + $0x58] sm:$0xff]
    %v1418 = vld [vmem:[%s2 + $0x60] sm:$0xff]
    %v1419 = vld [vmem:[%s2 + $0x68] sm:$0xff]
    %v1420 = vld [vmem:[%s2 + $0x70] sm:$0xff]
    %v1421 = vld [vmem:[%s2 + $0x78] sm:$0xff]
    %v1422 = vld [vmem:[%s2 + $0x80] sm:$0xff]
    %v1423 = vld [vmem:[%s2 + $0x88] sm:$0xff]
    %v1424 = vld [vmem:[%s2 + $0x90] sm:$0xff]
    %v1425 = vld [vmem:[%s2 + $0x98] sm:$0xff]
    %v1426 = vld [vmem:[%s2 + $0xa0] sm:$0xff]
    %v1427 = vld [vmem:[%s2 + $0xa8] sm:$0xff]
    %v1428 = vld [vmem:[%s2 + $0xb0] sm:$0xff]
    %v1429 = vld [vmem:[%s2 + $0xb8] sm:$0xff]
    %v1430 = vld [vmem:[%s2 + $0xc0] sm:$0xff]
    %v1431 = vld [vmem:[%s2 + $0xc8] sm:$0xff]
    %v1432 = vld [vmem:[%s2 + $0xd0] sm:$0xff]
    %v1433 = vld [vmem:[%s2 + $0xd8] sm:$0xff]
    %v1434 = vld [vmem:[%s2 + $0xe0] sm:$0xff]
    %v1435 = vld [vmem:[%s2 + $0xe8] sm:$0xff]
    %v1436 = vld [vmem:[%s2 + $0xf0] sm:$0xff]
    %v1437 = vld [vmem:[%s2 + $0xf8] sm:$0xff]
    %v1438 = vld [vmem:[%s2 + $0x100] sm:$0xff]
    %v1439 = vld [vmem:[%s2 + $0x108] sm:$0xff]
    %v1440 = vld [vmem:[%s2 + $0x110] sm:$0xff]
    %v1441 = vld [vmem:[%s2 + $0x118] sm:$0xff]
    %v1442 = vld [vmem:[%s2 + $0x120] sm:$0xff]
    %v1443 = vld [vmem:[%s2 + $0x128] sm:$0xff]
    %v1444 = vld [vmem:[%s2 + $0x130] sm:$0xff]
    %v1445 = vld [vmem:[%s2 + $0x138] sm:$0xff]
    %v1446 = vld [vmem:[%s2 + $0x140] sm:$0xff]
    %v1447 = vld [vmem:[%s2 + $0x148] sm:$0xff]
    %v1448 = vld [vmem:[%s2 + $0x150] sm:$0xff]
    %v1449 = vld [vmem:[%s2 + $0x158] sm:$0xff]
    %v1450 = vld [vmem:[%s2 + $0x160] sm:$0xff]
    %v1451 = vld [vmem:[%s2 + $0x168] sm:$0xff]
    %v1452 = vld [vmem:[%s2 + $0x170] sm:$0xff]
    %v1453 = vld [vmem:[%s2 + $0x178] sm:$0xff]
    %v1454 = vld [vmem:[%s2 + $0x180] sm:$0xff]
    %v1455 = vld [vmem:[%s2 + $0x188] sm:$0xff]
    %v1456 = vld [vmem:[%s2 + $0x190] sm:$0xff]
    %v1457 = vld [vmem:[%s2 + $0x198] sm:$0xff]
    %v1458 = vld [vmem:[%s2 + $0x1a0] sm:$0xff]
    %v1459 = vld [vmem:[%s2 + $0x1a8] sm:$0xff]
    %v1460 = vld [vmem:[%s2 + $0x1b0] sm:$0xff]
    %v1461 = vld [vmem:[%s2 + $0x1b8] sm:$0xff]
    %v1462 = vld [vmem:[%s2 + $0x1c0] sm:$0xff]
    %v1463 = vld [vmem:[%s2 + $0x1c8] sm:$0xff]
    %v1464 = vld [vmem:[%s2 + $0x1d0] sm:$0xff]
    %v1465 = vld [vmem:[%s2 + $0x1d8] sm:$0xff]
    %v1466 = vld [vmem:[%s2 + $0x1e0] sm:$0xff]
    %v1467 = vld [vmem:[%s2 + $0x1e8] sm:$0xff]
    %v1468 = vld [vmem:[%s2 + $0x1f0] sm:$0xff]
    %v1469 = vld [vmem:[%s2 + $0x1f8] sm:$0xff]
    %v1472 = vunpack.c.l.s4 1983009808
    %v1473 = vunpack.c.0.s8 %v1472
    %v1474 = vlaneseq
    %v1475 = vshrl.u32 %v1474, 7
    %v1476 = vsub.s32 %v1473, %v1475
    %v1477 = vrot.slane %v1405, %v1476
    %v1478 = vcombine.high %v1477, %v1477
    %v1481 = vpack.c.bf16 %v1477, %v1477
    %v1482 = vpack.c.bf16 %v1478, %v1478
    %v1483 = vld [vmem:[#allocation6] sm:$0xf]
    %v1485 = vlaneseq
    %v1486 = vshrl.u32 %v1485, 7
    %v1487 = vsub.s32 0, %v1486
    %v1488 = vrot.slane %v1483, %v1487
    %v1489 = vlaneseq
    %v1490 = vshrl.u32 %v1489, 7
    %v1491 = vsub.s32 1, %v1490
    %v1492 = vrot.slane %v1483, %v1491
    %v1493 = vlaneseq
    %v1494 = vshrl.u32 %v1493, 7
    %v1495 = vsub.s32 2, %v1494
    %v1496 = vrot.slane %v1483, %v1495
    %v1497 = vlaneseq
    %v1498 = vshrl.u32 %v1497, 7
    %v1499 = vsub.s32 3, %v1498
    %v1500 = vrot.slane %v1483, %v1499
    %v1569 = vunpack.c.l.b16 %v1406
    %v1570 = vunpack.c.h.b16 %v1406
    %v1571 = vunpack.c.l.b16 %v1407
    %v1572 = vunpack.c.h.b16 %v1407
    %v1573 = vunpack.c.l.b16 %v1408
    %v1574 = vunpack.c.h.b16 %v1408
    %v1575 = vunpack.c.l.b16 %v1409
    %v1576 = vunpack.c.h.b16 %v1409
    %v1577 = vunpack.c.l.b16 %v1410
    %v1578 = vunpack.c.h.b16 %v1410
    %v1579 = vunpack.c.l.b16 %v1411
    %v1580 = vunpack.c.h.b16 %v1411
    %v1581 = vunpack.c.l.b16 %v1412
    %v1582 = vunpack.c.h.b16 %v1412
    %v1583 = vunpack.c.l.b16 %v1413
    %v1584 = vunpack.c.h.b16 %v1413
    %v1585 = vunpack.c.l.b16 %v1414
    %v1586 = vunpack.c.h.b16 %v1414
    %v1587 = vunpack.c.l.b16 %v1415
    %v1588 = vunpack.c.h.b16 %v1415
    %v1589 = vunpack.c.l.b16 %v1416
    %v1590 = vunpack.c.h.b16 %v1416
    %v1591 = vunpack.c.l.b16 %v1417
    %v1592 = vunpack.c.h.b16 %v1417
    %v1593 = vunpack.c.l.b16 %v1418
    %v1594 = vunpack.c.h.b16 %v1418
    %v1595 = vunpack.c.l.b16 %v1419
    %v1596 = vunpack.c.h.b16 %v1419
    %v1597 = vunpack.c.l.b16 %v1420
    %v1598 = vunpack.c.h.b16 %v1420
    %v1599 = vunpack.c.l.b16 %v1421
    %v1600 = vunpack.c.h.b16 %v1421
    %v1601 = vunpack.c.l.b16 %v1422
    %v1602 = vunpack.c.h.b16 %v1422
    %v1603 = vunpack.c.l.b16 %v1423
    %v1604 = vunpack.c.h.b16 %v1423
    %v1605 = vunpack.c.l.b16 %v1424
    %v1606 = vunpack.c.h.b16 %v1424
    %v1607 = vunpack.c.l.b16 %v1425
    %v1608 = vunpack.c.h.b16 %v1425
    %v1609 = vunpack.c.l.b16 %v1426
    %v1610 = vunpack.c.h.b16 %v1426
    %v1611 = vunpack.c.l.b16 %v1427
    %v1612 = vunpack.c.h.b16 %v1427
    %v1613 = vunpack.c.l.b16 %v1428
    %v1614 = vunpack.c.h.b16 %v1428
    %v1615 = vunpack.c.l.b16 %v1429
    %v1616 = vunpack.c.h.b16 %v1429
    %v1617 = vunpack.c.l.b16 %v1430
    %v1618 = vunpack.c.h.b16 %v1430
    %v1619 = vunpack.c.l.b16 %v1431
    %v1620 = vunpack.c.h.b16 %v1431
    %v1621 = vunpack.c.l.b16 %v1432
    %v1622 = vunpack.c.h.b16 %v1432
    %v1623 = vunpack.c.l.b16 %v1433
    %v1624 = vunpack.c.h.b16 %v1433
    %v1625 = vunpack.c.l.b16 %v1434
    %v1626 = vunpack.c.h.b16 %v1434
    %v1627 = vunpack.c.l.b16 %v1435
    %v1628 = vunpack.c.h.b16 %v1435
    %v1629 = vunpack.c.l.b16 %v1436
    %v1630 = vunpack.c.h.b16 %v1436
    %v1631 = vunpack.c.l.b16 %v1437
    %v1632 = vunpack.c.h.b16 %v1437
    %v1633 = vunpack.c.l.b16 %v1438
    %v1634 = vunpack.c.h.b16 %v1438
    %v1635 = vunpack.c.l.b16 %v1439
    %v1636 = vunpack.c.h.b16 %v1439
    %v1637 = vunpack.c.l.b16 %v1440
    %v1638 = vunpack.c.h.b16 %v1440
    %v1639 = vunpack.c.l.b16 %v1441
    %v1640 = vunpack.c.h.b16 %v1441
    %v1641 = vunpack.c.l.b16 %v1442
    %v1642 = vunpack.c.h.b16 %v1442
    %v1643 = vunpack.c.l.b16 %v1443
    %v1644 = vunpack.c.h.b16 %v1443
    %v1645 = vunpack.c.l.b16 %v1444
    %v1646 = vunpack.c.h.b16 %v1444
    %v1647 = vunpack.c.l.b16 %v1445
    %v1648 = vunpack.c.h.b16 %v1445
    %v1649 = vunpack.c.l.b16 %v1446
    %v1650 = vunpack.c.h.b16 %v1446
    %v1651 = vunpack.c.l.b16 %v1447
    %v1652 = vunpack.c.h.b16 %v1447
    %v1653 = vunpack.c.l.b16 %v1448
    %v1654 = vunpack.c.h.b16 %v1448
    %v1655 = vunpack.c.l.b16 %v1449
    %v1656 = vunpack.c.h.b16 %v1449
    %v1657 = vunpack.c.l.b16 %v1450
    %v1658 = vunpack.c.h.b16 %v1450
    %v1659 = vunpack.c.l.b16 %v1451
    %v1660 = vunpack.c.h.b16 %v1451
    %v1661 = vunpack.c.l.b16 %v1452
    %v1662 = vunpack.c.h.b16 %v1452
    %v1663 = vunpack.c.l.b16 %v1453
    %v1664 = vunpack.c.h.b16 %v1453
    %v1665 = vunpack.c.l.b16 %v1454
    %v1666 = vunpack.c.h.b16 %v1454
    %v1667 = vunpack.c.l.b16 %v1455
    %v1668 = vunpack.c.h.b16 %v1455
    %v1669 = vunpack.c.l.b16 %v1456
    %v1670 = vunpack.c.h.b16 %v1456
    %v1671 = vunpack.c.l.b16 %v1457
    %v1672 = vunpack.c.h.b16 %v1457
    %v1673 = vunpack.c.l.b16 %v1458
    %v1674 = vunpack.c.h.b16 %v1458
    %v1675 = vunpack.c.l.b16 %v1459
    %v1676 = vunpack.c.h.b16 %v1459
    %v1677 = vunpack.c.l.b16 %v1460
    %v1678 = vunpack.c.h.b16 %v1460
    %v1679 = vunpack.c.l.b16 %v1461
    %v1680 = vunpack.c.h.b16 %v1461
    %v1681 = vunpack.c.l.b16 %v1462
    %v1682 = vunpack.c.h.b16 %v1462
    %v1683 = vunpack.c.l.b16 %v1463
    %v1684 = vunpack.c.h.b16 %v1463
    %v1685 = vunpack.c.l.b16 %v1464
    %v1686 = vunpack.c.h.b16 %v1464
    %v1687 = vunpack.c.l.b16 %v1465
    %v1688 = vunpack.c.h.b16 %v1465
    %v1689 = vunpack.c.l.b16 %v1466
    %v1690 = vunpack.c.h.b16 %v1466
    %v1691 = vunpack.c.l.b16 %v1467
    %v1692 = vunpack.c.h.b16 %v1467
    %v1693 = vunpack.c.l.b16 %v1468
    %v1694 = vunpack.c.h.b16 %v1468
    %v1695 = vunpack.c.l.b16 %v1469
    %v1696 = vunpack.c.h.b16 %v1469
    %v1697 = vpack.c.b16 %v1573, %v1569
    %v1698 = vpack.c.b16 %v1574, %v1570
    %v1699 = vpack.c.b16 %v1575, %v1571
    %v1700 = vpack.c.b16 %v1576, %v1572
    %v1701 = vpack.c.b16 %v1581, %v1577
    %v1702 = vpack.c.b16 %v1582, %v1578
    %v1703 = vpack.c.b16 %v1583, %v1579
    %v1704 = vpack.c.b16 %v1584, %v1580
    %v1705 = vpack.c.b16 %v1589, %v1585
    %v1706 = vpack.c.b16 %v1590, %v1586
    %v1707 = vpack.c.b16 %v1591, %v1587
    %v1708 = vpack.c.b16 %v1592, %v1588
    %v1709 = vpack.c.b16 %v1597, %v1593
    %v1710 = vpack.c.b16 %v1598, %v1594
    %v1711 = vpack.c.b16 %v1599, %v1595
    %v1712 = vpack.c.b16 %v1600, %v1596
    %v1713 = vpack.c.b16 %v1605, %v1601
    %v1714 = vpack.c.b16 %v1606, %v1602
    %v1715 = vpack.c.b16 %v1607, %v1603
    %v1716 = vpack.c.b16 %v1608, %v1604
    %v1717 = vpack.c.b16 %v1613, %v1609
    %v1718 = vpack.c.b16 %v1614, %v1610
    %v1719 = vpack.c.b16 %v1615, %v1611
    %v1720 = vpack.c.b16 %v1616, %v1612
    %v1721 = vpack.c.b16 %v1621, %v1617
    %v1722 = vpack.c.b16 %v1622, %v1618
    %v1723 = vpack.c.b16 %v1623, %v1619
    %v1724 = vpack.c.b16 %v1624, %v1620
    %v1725 = vpack.c.b16 %v1629, %v1625
    %v1726 = vpack.c.b16 %v1630, %v1626
    %v1727 = vpack.c.b16 %v1631, %v1627
    %v1728 = vpack.c.b16 %v1632, %v1628
    %v1729 = vpack.c.b16 %v1637, %v1633
    %v1730 = vpack.c.b16 %v1638, %v1634
    %v1731 = vpack.c.b16 %v1639, %v1635
    %v1732 = vpack.c.b16 %v1640, %v1636
    %v1733 = vpack.c.b16 %v1645, %v1641
    %v1734 = vpack.c.b16 %v1646, %v1642
    %v1735 = vpack.c.b16 %v1647, %v1643
    %v1736 = vpack.c.b16 %v1648, %v1644
    %v1737 = vpack.c.b16 %v1653, %v1649
    %v1738 = vpack.c.b16 %v1654, %v1650
    %v1739 = vpack.c.b16 %v1655, %v1651
    %v1740 = vpack.c.b16 %v1656, %v1652
    %v1741 = vpack.c.b16 %v1661, %v1657
    %v1742 = vpack.c.b16 %v1662, %v1658
    %v1743 = vpack.c.b16 %v1663, %v1659
    %v1744 = vpack.c.b16 %v1664, %v1660
    %v1745 = vpack.c.b16 %v1669, %v1665
    %v1746 = vpack.c.b16 %v1670, %v1666
    %v1747 = vpack.c.b16 %v1671, %v1667
    %v1748 = vpack.c.b16 %v1672, %v1668
    %v1749 = vpack.c.b16 %v1677, %v1673
    %v1750 = vpack.c.b16 %v1678, %v1674
    %v1751 = vpack.c.b16 %v1679, %v1675
    %v1752 = vpack.c.b16 %v1680, %v1676
    %v1753 = vpack.c.b16 %v1685, %v1681
    %v1754 = vpack.c.b16 %v1686, %v1682
    %v1755 = vpack.c.b16 %v1687, %v1683
    %v1756 = vpack.c.b16 %v1688, %v1684
    %v1757 = vpack.c.b16 %v1693, %v1689
    %v1758 = vpack.c.b16 %v1694, %v1690
    %v1759 = vpack.c.b16 %v1695, %v1691
    %v1760 = vpack.c.b16 %v1696, %v1692
    %1825 = vmatprep.subr.bf16.mxu0 %v1698
    %1826 = vmatpush1.bf16.msra.mxu0 %v1697
    %1827 = vmatprep.subr.bf16.mxu0 %v1702
    %1828 = vmatpush1.bf16.msra.mxu0 %v1701
    %1829 = vmatprep.subr.bf16.mxu0 %v1706
    %1830 = vmatpush1.bf16.msra.mxu0 %v1705
    %1831 = vmatprep.subr.bf16.mxu0 %v1710
    %1832 = vmatpush1.bf16.msra.mxu0 %v1709
    %1833 = vmatprep.subr.bf16.mxu0 %v1714
    %1834 = vmatpush1.bf16.msra.mxu0 %v1713
    %1835 = vmatprep.subr.bf16.mxu0 %v1718
    %1836 = vmatpush1.bf16.msra.mxu0 %v1717
    %1837 = vmatprep.subr.bf16.mxu0 %v1722
    %1838 = vmatpush1.bf16.msra.mxu0 %v1721
    %1839 = vmatprep.subr.bf16.mxu0 %v1726
    %1840 = vmatpush1.bf16.msra.mxu0 %v1725
    %1841 = vmatprep.subr.bf16.mxu0 %v1730
    %1842 = vmatpush1.bf16.msra.mxu0 %v1729
    %1843 = vmatprep.subr.bf16.mxu0 %v1734
    %1844 = vmatpush1.bf16.msra.mxu0 %v1733
    %1845 = vmatprep.subr.bf16.mxu0 %v1738
    %1846 = vmatpush1.bf16.msra.mxu0 %v1737
    %1847 = vmatprep.subr.bf16.mxu0 %v1742
    %1848 = vmatpush1.bf16.msra.mxu0 %v1741
    %1849 = vmatprep.subr.bf16.mxu0 %v1746
    %1850 = vmatpush1.bf16.msra.mxu0 %v1745
    %1851 = vmatprep.subr.bf16.mxu0 %v1750
    %1852 = vmatpush1.bf16.msra.mxu0 %v1749
    %1853 = vmatprep.subr.bf16.mxu0 %v1754
    %1854 = vmatpush1.bf16.msra.mxu0 %v1753
    %1855 = vmatprep.subr.bf16.mxu0 %v1758
    %1856 = vmatpush1.bf16.msra.mxu0 %v1757
    %1857 = vmatprep.mubr.bf16.mxu0 %v1482
    %1858 = vmatmul.mubr.bf16.gmra.mrb[0].mxu0 %v1481
    %v1859 = vpop.f32.mrb[0].mxu0
    %v1860 = vadd.f32 %v1488, %v1859
    %v1861 = vpop.f32.mrb[0].mxu0
    %v1862 = vadd.f32 %v1492, %v1861
    %v1863 = vpop.f32.mrb[0].mxu0
    %v1864 = vpop.f32.mrb[0].mxu0
    %1865 = vdwg.mxu0
    %1866 = vmatprep.subr.bf16.mxu0 %v1700
    %1867 = vmatpush1.bf16.msra.mxu0 %v1699
    %1868 = vmatprep.subr.bf16.mxu0 %v1704
    %1869 = vmatpush1.bf16.msra.mxu0 %v1703
    %1870 = vmatprep.subr.bf16.mxu0 %v1708
    %1871 = vmatpush1.bf16.msra.mxu0 %v1707
    %1872 = vmatprep.subr.bf16.mxu0 %v1712
    %1873 = vmatpush1.bf16.msra.mxu0 %v1711
    %1874 = vmatprep.subr.bf16.mxu0 %v1716
    %1875 = vmatpush1.bf16.msra.mxu0 %v1715
    %1876 = vmatprep.subr.bf16.mxu0 %v1720
    %1877 = vmatpush1.bf16.msra.mxu0 %v1719
    %1878 = vmatprep.subr.bf16.mxu0 %v1724
    %1879 = vmatpush1.bf16.msra.mxu0 %v1723
    %1880 = vmatprep.subr.bf16.mxu0 %v1728
    %1881 = vmatpush1.bf16.msra.mxu0 %v1727
    %1882 = vmatprep.subr.bf16.mxu0 %v1732
    %1883 = vmatpush1.bf16.msra.mxu0 %v1731
    %1884 = vmatprep.subr.bf16.mxu0 %v1736
    %1885 = vmatpush1.bf16.msra.mxu0 %v1735
    %1886 = vmatprep.subr.bf16.mxu0 %v1740
    %1887 = vmatpush1.bf16.msra.mxu0 %v1739
    %1888 = vmatprep.subr.bf16.mxu0 %v1744
    %1889 = vmatpush1.bf16.msra.mxu0 %v1743
    %1890 = vmatprep.subr.bf16.mxu0 %v1748
    %1891 = vmatpush1.bf16.msra.mxu0 %v1747
    %1892 = vmatprep.subr.bf16.mxu0 %v1752
    %1893 = vmatpush1.bf16.msra.mxu0 %v1751
    %1894 = vmatprep.subr.bf16.mxu0 %v1756
    %1895 = vmatpush1.bf16.msra.mxu0 %v1755
    %1896 = vmatprep.subr.bf16.mxu0 %v1760
    %1897 = vmatpush1.bf16.msra.mxu0 %v1759
    %1898 = vmatprep.mubr.bf16.mxu0 %v1482
    %1899 = vmatmul.mubr.bf16.gmra.mrb[0].mxu0 %v1481
    %v1900 = vpop.f32.mrb[0].mxu0
    %v1901 = vadd.f32 %v1496, %v1900
    %v1902 = vpop.f32.mrb[0].mxu0
    %v1903 = vadd.f32 %v1500, %v1902
    %v1904 = vpop.f32.mrb[0].mxu0
    %v1905 = vpop.f32.mrb[0].mxu0
    %1906 = vdwg.mxu0
    %vm1907 = vcmask 1041408
    %v1908 = vsel %vm1907, %v1860, 0.0
    %v1909 = vrot.slane %v1908, 4
    %v1910 = vadd.f32 %v1908, %v1909
    %v1911 = vrot.slane %v1910, 2
    %v1912 = vadd.f32 %v1910, %v1911
    %v1913 = vrot.slane %v1912, 1
    %v1914 = vadd.f32 %v1912, %v1913
    %v1915 = vsel %vm1907, %v1862, 0.0
    %v1916 = vrot.slane %v1915, 4
    %v1917 = vadd.f32 %v1915, %v1916
    %v1918 = vrot.slane %v1917, 2
    %v1919 = vadd.f32 %v1917, %v1918
    %v1920 = vrot.slane %v1919, 1
    %v1921 = vadd.f32 %v1919, %v1920
    %v1922 = vsel %vm1907, %v1901, 0.0
    %v1923 = vrot.slane %v1922, 4
    %v1924 = vadd.f32 %v1922, %v1923
    %v1925 = vrot.slane %v1924, 2
    %v1926 = vadd.f32 %v1924, %v1925
    %v1927 = vrot.slane %v1926, 1
    %v1928 = vadd.f32 %v1926, %v1927
    %v1929 = vsel %vm1907, %v1903, 0.0
    %v1930 = vrot.slane %v1929, 4
    %v1931 = vadd.f32 %v1929, %v1930
    %v1932 = vrot.slane %v1931, 2
    %v1933 = vadd.f32 %v1931, %v1932
    %v1934 = vrot.slane %v1933, 1
    %v1935 = vadd.f32 %v1933, %v1934
    %v1936 = vrcp.pop 2.0
    %v1937 = vmul.f32 %v1914, %v1936
    %v1938 = vmul.f32 %v1921, %v1936
    %v1939 = vmul.f32 %v1928, %v1936
    %v1940 = vmul.f32 %v1935, %v1936
    %v1941 = vmul.f32 %v1860, %v1860
    %v1942 = vmul.f32 %v1862, %v1862
    %v1943 = vmul.f32 %v1901, %v1901
    %v1944 = vmul.f32 %v1903, %v1903
    %v1945 = vsel %vm1907, %v1941, 0.0
    %v1946 = vrot.slane %v1945, 4
    %v1947 = vadd.f32 %v1945, %v1946
    %v1948 = vrot.slane %v1947, 2
    %v1949 = vadd.f32 %v1947, %v1948
    %v1950 = vrot.slane %v1949, 1
    %v1951 = vadd.f32 %v1949, %v1950
    %v1952 = vsel %vm1907, %v1942, 0.0
    %v1953 = vrot.slane %v1952, 4
    %v1954 = vadd.f32 %v1952, %v1953
    %v1955 = vrot.slane %v1954, 2
    %v1956 = vadd.f32 %v1954, %v1955
    %v1957 = vrot.slane %v1956, 1
    %v1958 = vadd.f32 %v1956, %v1957
    %v1959 = vsel %vm1907, %v1943, 0.0
    %v1960 = vrot.slane %v1959, 4
    %v1961 = vadd.f32 %v1959, %v1960
    %v1962 = vrot.slane %v1961, 2
    %v1963 = vadd.f32 %v1961, %v1962
    %v1964 = vrot.slane %v1963, 1
    %v1965 = vadd.f32 %v1963, %v1964
    %v1966 = vsel %vm1907, %v1944, 0.0
    %v1967 = vrot.slane %v1966, 4
    %v1968 = vadd.f32 %v1966, %v1967
    %v1969 = vrot.slane %v1968, 2
    %v1970 = vadd.f32 %v1968, %v1969
    %v1971 = vrot.slane %v1970, 1
    %v1972 = vadd.f32 %v1970, %v1971
    %v1973 = vmul.f32 %v1951, %v1936
    %v1974 = vmul.f32 %v1958, %v1936
    %v1975 = vmul.f32 %v1965, %v1936
    %v1976 = vmul.f32 %v1972, %v1936
    %v1977 = vlaneseq
    %v1978 = vshrl.u32 %v1977, 7
    %vm1979 = vcmp.eq.s32.totalorder %v1978, 0
    %v1980 = vsel %vm1979, %v1937, %v1973
    %v1981 = vsel %vm1979, %v1938, %v1974
    %v1982 = vsel %vm1979, %v1939, %v1975
    %v1983 = vsel %vm1979, %v1940, %v1976
    %v1984 = vld [vmem:[%s4] sm:$0xff]
    %v1985 = vld [vmem:[%s4 + $0x8] sm:$0xff]
    %v1986 = vld [vmem:[%s4 + $0x10] sm:$0xff]
    %v1987 = vld [vmem:[%s4 + $0x18] sm:$0xff]
    %v1988 = vld [vmem:[%s4 + $0x20] sm:$0xff]
    %v1989 = vld [vmem:[%s4 + $0x28] sm:$0xff]
    %v1990 = vld [vmem:[%s4 + $0x30] sm:$0xff]
    %v1991 = vld [vmem:[%s4 + $0x38] sm:$0xff]
    %v1992 = vld [vmem:[%s4 + $0x40] sm:$0xff]
    %v1993 = vld [vmem:[%s4 + $0x48] sm:$0xff]
    %v1994 = vld [vmem:[%s4 + $0x50] sm:$0xff]
    %v1995 = vld [vmem:[%s4 + $0x58] sm:$0xff]
    %v1996 = vld [vmem:[%s4 + $0x60] sm:$0xff]
    %v1997 = vld [vmem:[%s4 + $0x68] sm:$0xff]
    %v1998 = vld [vmem:[%s4 + $0x70] sm:$0xff]
    %v1999 = vld [vmem:[%s4 + $0x78] sm:$0xff]
    %v2000 = vld [vmem:[%s4 + $0x80] sm:$0xff]
    %v2001 = vld [vmem:[%s4 + $0x88] sm:$0xff]
    %v2002 = vld [vmem:[%s4 + $0x90] sm:$0xff]
    %v2003 = vld [vmem:[%s4 + $0x98] sm:$0xff]
    %v2004 = vld [vmem:[%s4 + $0xa0] sm:$0xff]
    %v2005 = vld [vmem:[%s4 + $0xa8] sm:$0xff]
    %v2006 = vld [vmem:[%s4 + $0xb0] sm:$0xff]
    %v2007 = vld [vmem:[%s4 + $0xb8] sm:$0xff]
    %v2008 = vld [vmem:[%s4 + $0xc0] sm:$0xff]
    %v2009 = vld [vmem:[%s4 + $0xc8] sm:$0xff]
    %v2010 = vld [vmem:[%s4 + $0xd0] sm:$0xff]
    %v2011 = vld [vmem:[%s4 + $0xd8] sm:$0xff]
    %v2012 = vld [vmem:[%s4 + $0xe0] sm:$0xff]
    %v2013 = vld [vmem:[%s4 + $0xe8] sm:$0xff]
    %v2014 = vld [vmem:[%s4 + $0xf0] sm:$0xff]
    %v2015 = vld [vmem:[%s4 + $0xf8] sm:$0xff]
    %v2016 = vld [vmem:[%s4 + $0x100] sm:$0xff]
    %v2017 = vld [vmem:[%s4 + $0x108] sm:$0xff]
    %v2018 = vld [vmem:[%s4 + $0x110] sm:$0xff]
    %v2019 = vld [vmem:[%s4 + $0x118] sm:$0xff]
    %v2020 = vld [vmem:[%s4 + $0x120] sm:$0xff]
    %v2021 = vld [vmem:[%s4 + $0x128] sm:$0xff]
    %v2022 = vld [vmem:[%s4 + $0x130] sm:$0xff]
    %v2023 = vld [vmem:[%s4 + $0x138] sm:$0xff]
    %v2024 = vld [vmem:[%s4 + $0x140] sm:$0xff]
    %v2025 = vld [vmem:[%s4 + $0x148] sm:$0xff]
    %v2026 = vld [vmem:[%s4 + $0x150] sm:$0xff]
    %v2027 = vld [vmem:[%s4 + $0x158] sm:$0xff]
    %v2028 = vld [vmem:[%s4 + $0x160] sm:$0xff]
    %v2029 = vld [vmem:[%s4 + $0x168] sm:$0xff]
    %v2030 = vld [vmem:[%s4 + $0x170] sm:$0xff]
    %v2031 = vld [vmem:[%s4 + $0x178] sm:$0xff]
    %v2032 = vld [vmem:[%s4 + $0x180] sm:$0xff]
    %v2033 = vld [vmem:[%s4 + $0x188] sm:$0xff]
    %v2034 = vld [vmem:[%s4 + $0x190] sm:$0xff]
    %v2035 = vld [vmem:[%s4 + $0x198] sm:$0xff]
    %v2036 = vld [vmem:[%s4 + $0x1a0] sm:$0xff]
    %v2037 = vld [vmem:[%s4 + $0x1a8] sm:$0xff]
    %v2038 = vld [vmem:[%s4 + $0x1b0] sm:$0xff]
    %v2039 = vld [vmem:[%s4 + $0x1b8] sm:$0xff]
    %v2040 = vld [vmem:[%s4 + $0x1c0] sm:$0xff]
    %v2041 = vld [vmem:[%s4 + $0x1c8] sm:$0xff]
    %v2042 = vld [vmem:[%s4 + $0x1d0] sm:$0xff]
    %v2043 = vld [vmem:[%s4 + $0x1d8] sm:$0xff]
    %v2044 = vld [vmem:[%s4 + $0x1e0] sm:$0xff]
    %v2045 = vld [vmem:[%s4 + $0x1e8] sm:$0xff]
    %v2046 = vld [vmem:[%s4 + $0x1f0] sm:$0xff]
    %v2047 = vld [vmem:[%s4 + $0x1f8] sm:$0xff]
    %2048 = vmatprep.subr.mxu0 0.0
    %2049 = vmatpush1.msra.mxu0 %v1984
    %2050 = vmatprep.subr.mxu0 0.0
    %2051 = vmatpush1.msra.mxu0 %v1985
    %2052 = vmatprep.subr.mxu0 0.0
    %2053 = vmatpush1.msra.mxu0 %v1986
    %2054 = vmatprep.subr.mxu0 0.0
    %2055 = vmatpush1.msra.mxu0 %v1987
    %2056 = vmatprep.subr.mxu0 0.0
    %2057 = vmatpush1.msra.mxu0 %v1988
    %2058 = vmatprep.subr.mxu0 0.0
    %2059 = vmatpush1.msra.mxu0 %v1989
    %2060 = vmatprep.subr.mxu0 0.0
    %2061 = vmatpush1.msra.mxu0 %v1990
    %2062 = vmatprep.subr.mxu0 0.0
    %2063 = vmatpush1.msra.mxu0 %v1991
    %2064 = vmatprep.subr.mxu0 0.0
    %2065 = vmatpush1.msra.mxu0 %v1992
    %2066 = vmatprep.subr.mxu0 0.0
    %2067 = vmatpush1.msra.mxu0 %v1993
    %2068 = vmatprep.subr.mxu0 0.0
    %2069 = vmatpush1.msra.mxu0 %v1994
    %2070 = vmatprep.subr.mxu0 0.0
    %2071 = vmatpush1.msra.mxu0 %v1995
    %2072 = vmatprep.subr.mxu0 0.0
    %2073 = vmatpush1.msra.mxu0 %v1996
    %2074 = vmatprep.subr.mxu0 0.0
    %2075 = vmatpush1.msra.mxu0 %v1997
    %2076 = vmatprep.subr.mxu0 0.0
    %2077 = vmatpush1.msra.mxu0 %v1998
    %2078 = vmatprep.subr.mxu0 0.0
    %2079 = vmatpush1.msra.mxu0 %v1999
    %2080 = vmatprep.subr.mxu0 0.0
    %2081 = vmatpush1.msra.mxu0 %v2000
    %2082 = vmatprep.subr.mxu0 0.0
    %2083 = vmatpush1.msra.mxu0 %v2001
    %2084 = vmatprep.subr.mxu0 0.0
    %2085 = vmatpush1.msra.mxu0 %v2002
    %2086 = vmatprep.subr.mxu0 0.0
    %2087 = vmatpush1.msra.mxu0 %v2003
    %2088 = vmatprep.subr.mxu0 0.0
    %2089 = vmatpush1.msra.mxu0 %v2004
    %2090 = vmatprep.subr.mxu0 0.0
    %2091 = vmatpush1.msra.mxu0 %v2005
    %2092 = vmatprep.subr.mxu0 0.0
    %2093 = vmatpush1.msra.mxu0 %v2006
    %2094 = vmatprep.subr.mxu0 0.0
    %2095 = vmatpush1.msra.mxu0 %v2007
    %2096 = vmatprep.subr.mxu0 0.0
    %2097 = vmatpush1.msra.mxu0 %v2008
    %2098 = vmatprep.subr.mxu0 0.0
    %2099 = vmatpush1.msra.mxu0 %v2009
    %2100 = vmatprep.subr.mxu0 0.0
    %2101 = vmatpush1.msra.mxu0 %v2010
    %2102 = vmatprep.subr.mxu0 0.0
    %2103 = vmatpush1.msra.mxu0 %v2011
    %2104 = vmatprep.subr.mxu0 0.0
    %2105 = vmatpush1.msra.mxu0 %v2012
    %2106 = vmatprep.subr.mxu0 0.0
    %2107 = vmatpush1.msra.mxu0 %v2013
    %2108 = vmatprep.subr.mxu0 0.0
    %2109 = vmatpush1.msra.mxu0 %v2014
    %2110 = vmatprep.subr.mxu0 0.0
    %2111 = vmatpush1.msra.mxu0 %v2015
    %2112 = vmatprep.mubr.f32.mxu0 %v1981
    %2113 = vmatmul.mubr.f32.gmra.mrb[0].mxu0 %v1980
    %v2114 = vpop.f32.mrb[0].mxu0
    %v2115 = vadd.f32 0.0, %v2114
    %v2116 = vpop.f32.mrb[0].mxu0
    %2117 = vdwg.mxu0
    %2118 = vmatprep.subr.mxu0 0.0
    %2119 = vmatpush1.msra.mxu0 %v2016
    %2120 = vmatprep.subr.mxu0 0.0
    %2121 = vmatpush1.msra.mxu0 %v2017
    %2122 = vmatprep.subr.mxu0 0.0
    %2123 = vmatpush1.msra.mxu0 %v2018
    %2124 = vmatprep.subr.mxu0 0.0
    %2125 = vmatpush1.msra.mxu0 %v2019
    %2126 = vmatprep.subr.mxu0 0.0
    %2127 = vmatpush1.msra.mxu0 %v2020
    %2128 = vmatprep.subr.mxu0 0.0
    %2129 = vmatpush1.msra.mxu0 %v2021
    %2130 = vmatprep.subr.mxu0 0.0
    %2131 = vmatpush1.msra.mxu0 %v2022
    %2132 = vmatprep.subr.mxu0 0.0
    %2133 = vmatpush1.msra.mxu0 %v2023
    %2134 = vmatprep.subr.mxu0 0.0
    %2135 = vmatpush1.msra.mxu0 %v2024
    %2136 = vmatprep.subr.mxu0 0.0
    %2137 = vmatpush1.msra.mxu0 %v2025
    %2138 = vmatprep.subr.mxu0 0.0
    %2139 = vmatpush1.msra.mxu0 %v2026
    %2140 = vmatprep.subr.mxu0 0.0
    %2141 = vmatpush1.msra.mxu0 %v2027
    %2142 = vmatprep.subr.mxu0 0.0
    %2143 = vmatpush1.msra.mxu0 %v2028
    %2144 = vmatprep.subr.mxu0 0.0
    %2145 = vmatpush1.msra.mxu0 %v2029
    %2146 = vmatprep.subr.mxu0 0.0
    %2147 = vmatpush1.msra.mxu0 %v2030
    %2148 = vmatprep.subr.mxu0 0.0
    %2149 = vmatpush1.msra.mxu0 %v2031
    %2150 = vmatprep.subr.mxu0 0.0
    %2151 = vmatpush1.msra.mxu0 %v2032
    %2152 = vmatprep.subr.mxu0 0.0
    %2153 = vmatpush1.msra.mxu0 %v2033
    %2154 = vmatprep.subr.mxu0 0.0
    %2155 = vmatpush1.msra.mxu0 %v2034
    %2156 = vmatprep.subr.mxu0 0.0
    %2157 = vmatpush1.msra.mxu0 %v2035
    %2158 = vmatprep.subr.mxu0 0.0
    %2159 = vmatpush1.msra.mxu0 %v2036
    %2160 = vmatprep.subr.mxu0 0.0
    %2161 = vmatpush1.msra.mxu0 %v2037
    %2162 = vmatprep.subr.mxu0 0.0
    %2163 = vmatpush1.msra.mxu0 %v2038
    %2164 = vmatprep.subr.mxu0 0.0
    %2165 = vmatpush1.msra.mxu0 %v2039
    %2166 = vmatprep.subr.mxu0 0.0
    %2167 = vmatpush1.msra.mxu0 %v2040
    %2168 = vmatprep.subr.mxu0 0.0
    %2169 = vmatpush1.msra.mxu0 %v2041
    %2170 = vmatprep.subr.mxu0 0.0
    %2171 = vmatpush1.msra.mxu0 %v2042
    %2172 = vmatprep.subr.mxu0 0.0
    %2173 = vmatpush1.msra.mxu0 %v2043
    %2174 = vmatprep.subr.mxu0 0.0
    %2175 = vmatpush1.msra.mxu0 %v2044
    %2176 = vmatprep.subr.mxu0 0.0
    %2177 = vmatpush1.msra.mxu0 %v2045
    %2178 = vmatprep.subr.mxu0 0.0
    %2179 = vmatpush1.msra.mxu0 %v2046
    %2180 = vmatprep.subr.mxu0 0.0
    %2181 = vmatpush1.msra.mxu0 %v2047
    %2182 = vmatprep.mubr.f32.mxu0 %v1983
    %2183 = vmatmul.mubr.f32.gmra.mrb[0].mxu0 %v1982
    %v2184 = vpop.f32.mrb[0].mxu0
    %v2185 = vadd.f32 %v2115, %v2184
    %v2186 = vpop.f32.mrb[0].mxu0
    %2187 = vdwg.mxu0
    %v2188 = vld [vmem:[#allocation8] sm:$0xff]
    %v2189 = vld [vmem:[#allocation8 + $0x8] sm:$0xff]
    %v2190 = vld [vmem:[#allocation8 + $0x10] sm:$0xff]
    %v2191 = vld [vmem:[#allocation8 + $0x18] sm:$0xff]
    %vm2192 = vcmask 64512
    %v2194 = vsel %vm2192, %v2185, 0
    %2196 = vmatprep.subr.mxu0 %v2189
    %2197 = vmatpush1.msra.mxu0 %v2188
    %2198 = vmatprep.subr.mxu0 0.0
    %2199 = vmatpush1.msra.mxu0 0.0
    %2200 = vmatprep.subr.mxu0 0.0
    %2201 = vmatpush1.msra.mxu0 0.0
    %2202 = vmatprep.subr.mxu0 0.0
    %2203 = vmatpush1.msra.mxu0 0.0
    %2204 = vmatprep.subr.mxu0 0.0
    %2205 = vmatpush1.msra.mxu0 0.0
    %2206 = vmatprep.subr.mxu0 0.0
    %2207 = vmatpush1.msra.mxu0 0.0
    %2208 = vmatprep.subr.mxu0 0.0
    %2209 = vmatpush1.msra.mxu0 0.0
    %2210 = vmatprep.subr.mxu0 0.0
    %2211 = vmatpush1.msra.mxu0 0.0
    %2212 = vmatprep.subr.mxu0 0.0
    %2213 = vmatpush1.msra.mxu0 0.0
    %2214 = vmatprep.subr.mxu0 0.0
    %2215 = vmatpush1.msra.mxu0 0.0
    %2216 = vmatprep.subr.mxu0 0.0
    %2217 = vmatpush1.msra.mxu0 0.0
    %2218 = vmatprep.subr.mxu0 0.0
    %2219 = vmatpush1.msra.mxu0 0.0
    %2220 = vmatprep.subr.mxu0 0.0
    %2221 = vmatpush1.msra.mxu0 0.0
    %2222 = vmatprep.subr.mxu0 0.0
    %2223 = vmatpush1.msra.mxu0 0.0
    %2224 = vmatprep.subr.mxu0 0.0
    %2225 = vmatpush1.msra.mxu0 0.0
    %2226 = vmatprep.subr.mxu0 0.0
    %2227 = vmatpush1.msra.mxu0 0.0
    %2228 = vmatprep.subr.mxu0 0.0
    %2229 = vmatpush1.msra.mxu0 0.0
    %2230 = vmatprep.subr.mxu0 0.0
    %2231 = vmatpush1.msra.mxu0 0.0
    %2232 = vmatprep.subr.mxu0 0.0
    %2233 = vmatpush1.msra.mxu0 0.0
    %2234 = vmatprep.subr.mxu0 0.0
    %2235 = vmatpush1.msra.mxu0 0.0
    %2236 = vmatprep.subr.mxu0 0.0
    %2237 = vmatpush1.msra.mxu0 0.0
    %2238 = vmatprep.subr.mxu0 0.0
    %2239 = vmatpush1.msra.mxu0 0.0
    %2240 = vmatprep.subr.mxu0 0.0
    %2241 = vmatpush1.msra.mxu0 0.0
    %2242 = vmatprep.subr.mxu0 0.0
    %2243 = vmatpush1.msra.mxu0 0.0
    %2244 = vmatprep.subr.mxu0 0.0
    %2245 = vmatpush1.msra.mxu0 0.0
    %2246 = vmatprep.subr.mxu0 0.0
    %2247 = vmatpush1.msra.mxu0 0.0
    %2248 = vmatprep.subr.mxu0 0.0
    %2249 = vmatpush1.msra.mxu0 0.0
    %2250 = vmatprep.subr.mxu0 0.0
    %2251 = vmatpush1.msra.mxu0 0.0
    %2252 = vmatprep.subr.mxu0 0.0
    %2253 = vmatpush1.msra.mxu0 0.0
    %2254 = vmatprep.subr.mxu0 0.0
    %2255 = vmatpush1.msra.mxu0 0.0
    %2256 = vmatprep.subr.mxu0 0.0
    %2257 = vmatpush1.msra.mxu0 0.0
    %2258 = vmatprep.subr.mxu0 0.0
    %2259 = vmatpush1.msra.mxu0 0.0
    %2260 = vmatprep.mubr.f32.mxu0 0.0
    %2261 = vmatmul.mubr.f32.gmra.mrb[0].mxu0 %v2194
    %v2262 = vpop.f32.mrb[0].mxu0
    %v2263 = vadd.f32 0.0, %v2262
    %v2264 = vpop.f32.mrb[0].mxu0
    %v2265 = vadd.f32 0.0, %v2264
    %2266 = vdwg.mxu0
    %2267 = vmatprep.subr.mxu0 %v2191
    %2268 = vmatpush1.msra.mxu0 %v2190
    %2269 = vmatprep.subr.mxu0 0.0
    %2270 = vmatpush1.msra.mxu0 0.0
    %2271 = vmatprep.subr.mxu0 0.0
    %2272 = vmatpush1.msra.mxu0 0.0
    %2273 = vmatprep.subr.mxu0 0.0
    %2274 = vmatpush1.msra.mxu0 0.0
    %2275 = vmatprep.subr.mxu0 0.0
    %2276 = vmatpush1.msra.mxu0 0.0
    %2277 = vmatprep.subr.mxu0 0.0
    %2278 = vmatpush1.msra.mxu0 0.0
    %2279 = vmatprep.subr.mxu0 0.0
    %2280 = vmatpush1.msra.mxu0 0.0
    %2281 = vmatprep.subr.mxu0 0.0
    %2282 = vmatpush1.msra.mxu0 0.0
    %2283 = vmatprep.subr.mxu0 0.0
    %2284 = vmatpush1.msra.mxu0 0.0
    %2285 = vmatprep.subr.mxu0 0.0
    %2286 = vmatpush1.msra.mxu0 0.0
    %2287 = vmatprep.subr.mxu0 0.0
    %2288 = vmatpush1.msra.mxu0 0.0
    %2289 = vmatprep.subr.mxu0 0.0
    %2290 = vmatpush1.msra.mxu0 0.0
    %2291 = vmatprep.subr.mxu0 0.0
    %2292 = vmatpush1.msra.mxu0 0.0
    %2293 = vmatprep.subr.mxu0 0.0
    %2294 = vmatpush1.msra.mxu0 0.0
    %2295 = vmatprep.subr.mxu0 0.0
    %2296 = vmatpush1.msra.mxu0 0.0
    %2297 = vmatprep.subr.mxu0 0.0
    %2298 = vmatpush1.msra.mxu0 0.0
    %2299 = vmatprep.subr.mxu0 0.0
    %2300 = vmatpush1.msra.mxu0 0.0
    %2301 = vmatprep.subr.mxu0 0.0
    %2302 = vmatpush1.msra.mxu0 0.0
    %2303 = vmatprep.subr.mxu0 0.0
    %2304 = vmatpush1.msra.mxu0 0.0
    %2305 = vmatprep.subr.mxu0 0.0
    %2306 = vmatpush1.msra.mxu0 0.0
    %2307 = vmatprep.subr.mxu0 0.0
    %2308 = vmatpush1.msra.mxu0 0.0
    %2309 = vmatprep.subr.mxu0 0.0
    %2310 = vmatpush1.msra.mxu0 0.0
    %2311 = vmatprep.subr.mxu0 0.0
    %2312 = vmatpush1.msra.mxu0 0.0
    %2313 = vmatprep.subr.mxu0 0.0
    %2314 = vmatpush1.msra.mxu0 0.0
    %2315 = vmatprep.subr.mxu0 0.0
    %2316 = vmatpush1.msra.mxu0 0.0
    %2317 = vmatprep.subr.mxu0 0.0
    %2318 = vmatpush1.msra.mxu0 0.0
    %2319 = vmatprep.subr.mxu0 0.0
    %2320 = vmatpush1.msra.mxu0 0.0
    %2321 = vmatprep.subr.mxu0 0.0
    %2322 = vmatpush1.msra.mxu0 0.0
    %2323 = vmatprep.subr.mxu0 0.0
    %2324 = vmatpush1.msra.mxu0 0.0
    %2325 = vmatprep.subr.mxu0 0.0
    %2326 = vmatpush1.msra.mxu0 0.0
    %2327 = vmatprep.subr.mxu0 0.0
    %2328 = vmatpush1.msra.mxu0 0.0
    %2329 = vmatprep.subr.mxu0 0.0
    %2330 = vmatpush1.msra.mxu0 0.0
    %2331 = vmatprep.mubr.f32.mxu0 0.0
    %2332 = vmatmul.mubr.f32.gmra.mrb[0].mxu0 %v2194
    %v2333 = vpop.f32.mrb[0].mxu0
    %v2334 = vadd.f32 0.0, %v2333
    %v2335 = vpop.f32.mrb[0].mxu0
    %v2336 = vadd.f32 0.0, %v2335
    %2337 = vdwg.mxu0
    %v2338 = vmul.f32 %v2263, %v2263
    %v2339 = vmul.f32 %v2265, %v2265
    %v2340 = vmul.f32 %v2334, %v2334
    %v2341 = vmul.f32 %v2336, %v2336
    %v2346 = vrot.slane %v2338, 7
    %v2347 = vrot.slane %v2339, 7
    %v2348 = vrot.slane %v2340, 7
    %v2349 = vrot.slane %v2341, 7
    %v2354 = vsub.f32 %v2263, %v2346
    %v2355 = vsub.f32 %v2265, %v2347
    %v2356 = vsub.f32 %v2334, %v2348
    %v2357 = vsub.f32 %v2336, %v2349
    %v2358 = vlaneseq
    %v2359 = vshrl.u32 %v2358, 7
    %v2360 = vsub.s32 0, %v2359
    %v2361 = vrot.slane %v2263, %v2360
    %v2362 = vlaneseq
    %v2363 = vshrl.u32 %v2362, 7
    %v2364 = vsub.s32 0, %v2363
    %v2365 = vrot.slane %v2265, %v2364
    %v2366 = vlaneseq
    %v2367 = vshrl.u32 %v2366, 7
    %v2368 = vsub.s32 0, %v2367
    %v2369 = vrot.slane %v2334, %v2368
    %v2370 = vlaneseq
    %v2371 = vshrl.u32 %v2370, 7
    %v2372 = vsub.s32 0, %v2371
    %v2373 = vrot.slane %v2336, %v2372
    %v2374 = vsub.f32 %v1860, %v2361
    %v2375 = vsub.f32 %v1862, %v2365
    %v2376 = vsub.f32 %v1901, %v2369
    %v2377 = vsub.f32 %v1903, %v2373
    %v2378 = vadd.f32 %v2354, 1e-05
    %v2379 = vadd.f32 %v2355, 1e-05
    %v2380 = vadd.f32 %v2356, 1e-05
    %v2381 = vadd.f32 %v2357, 1e-05
    %v2382 = vrsqrt.pop %v2378
    %v2383 = vrsqrt.pop %v2379
    %v2384 = vrsqrt.pop %v2380
    %v2385 = vrsqrt.pop %v2381
    %v2386 = vlaneseq
    %v2387 = vshrl.u32 %v2386, 7
    %v2388 = vsub.s32 1, %v2387
    %v2389 = vrot.slane %v2382, %v2388
    %v2390 = vlaneseq
    %v2391 = vshrl.u32 %v2390, 7
    %v2392 = vsub.s32 1, %v2391
    %v2393 = vrot.slane %v2383, %v2392
    %v2394 = vlaneseq
    %v2395 = vshrl.u32 %v2394, 7
    %v2396 = vsub.s32 1, %v2395
    %v2397 = vrot.slane %v2384, %v2396
    %v2398 = vlaneseq
    %v2399 = vshrl.u32 %v2398, 7
    %v2400 = vsub.s32 1, %v2399
    %v2401 = vrot.slane %v2385, %v2400
    %v2402 = vmul.f32 %v2374, %v2389
    %v2403 = vmul.f32 %v2375, %v2393
    %v2404 = vmul.f32 %v2376, %v2397
    %v2405 = vmul.f32 %v2377, %v2401
    %vm2406 = vcmp.gt.f32.partialorder %v2402, 0.0
    %vm2407 = vcmp.gt.f32.partialorder %v2403, 0.0
    %vm2408 = vcmp.gt.f32.partialorder %v2404, 0.0
    %vm2409 = vcmp.gt.f32.partialorder %v2405, 0.0
    %v2410 = vmul.f32 %v2402, 0.01
    %v2411 = vmul.f32 %v2403, 0.01
    %v2412 = vmul.f32 %v2404, 0.01
    %v2413 = vmul.f32 %v2405, 0.01
    %v2414 = vsel %vm2406, %v2402, %v2410
    %v2415 = vsel %vm2407, %v2403, %v2411
    %v2416 = vsel %vm2408, %v2404, %v2412
    %v2417 = vsel %vm2409, %v2405, %v2413
    %s2418 = smul.u32 4, 64
    %s2419 = smul.u32 %s2418, 2
    %s2420 = sshll.u32 %s2419, 4
    %2421 = dma.done [#allocation5], %s2420
    %v2422 = vld [vmem:[#allocation2] sm:$0xff]
    %v2423 = vld [vmem:[#allocation2 + $0x8] sm:$0xff]
    %v2424 = vld [vmem:[#allocation2 + $0x10] sm:$0xff]
    %v2425 = vld [vmem:[#allocation2 + $0x18] sm:$0xff]
    %v2426 = vld [vmem:[#allocation2 + $0x20] sm:$0xff]
    %v2427 = vld [vmem:[#allocation2 + $0x28] sm:$0xff]
    %v2428 = vld [vmem:[#allocation2 + $0x30] sm:$0xff]
    %v2429 = vld [vmem:[#allocation2 + $0x38] sm:$0xff]
    %v2430 = vld [vmem:[#allocation2 + $0x40] sm:$0xff]
    %v2431 = vld [vmem:[#allocation2 + $0x48] sm:$0xff]
    %v2432 = vld [vmem:[#allocation2 + $0x50] sm:$0xff]
    %v2433 = vld [vmem:[#allocation2 + $0x58] sm:$0xff]
    %v2434 = vld [vmem:[#allocation2 + $0x60] sm:$0xff]
    %v2435 = vld [vmem:[#allocation2 + $0x68] sm:$0xff]
    %v2436 = vld [vmem:[#allocation2 + $0x70] sm:$0xff]
    %v2437 = vld [vmem:[#allocation2 + $0x78] sm:$0xff]
    %v2438 = vld [vmem:[#allocation2 + $0x80] sm:$0xff]
    %v2439 = vld [vmem:[#allocation2 + $0x88] sm:$0xff]
    %v2440 = vld [vmem:[#allocation2 + $0x90] sm:$0xff]
    %v2441 = vld [vmem:[#allocation2 + $0x98] sm:$0xff]
    %v2442 = vld [vmem:[#allocation2 + $0xa0] sm:$0xff]
    %v2443 = vld [vmem:[#allocation2 + $0xa8] sm:$0xff]
    %v2444 = vld [vmem:[#allocation2 + $0xb0] sm:$0xff]
    %v2445 = vld [vmem:[#allocation2 + $0xb8] sm:$0xff]
    %v2446 = vld [vmem:[#allocation2 + $0xc0] sm:$0xff]
    %v2447 = vld [vmem:[#allocation2 + $0xc8] sm:$0xff]
    %v2448 = vld [vmem:[#allocation2 + $0xd0] sm:$0xff]
    %v2449 = vld [vmem:[#allocation2 + $0xd8] sm:$0xff]
    %v2450 = vld [vmem:[#allocation2 + $0xe0] sm:$0xff]
    %v2451 = vld [vmem:[#allocation2 + $0xe8] sm:$0xff]
    %v2452 = vld [vmem:[#allocation2 + $0xf0] sm:$0xff]
    %v2453 = vld [vmem:[#allocation2 + $0xf8] sm:$0xff]
    %v2454 = vld [vmem:[#allocation2 + $0x100] sm:$0xff]
    %v2455 = vld [vmem:[#allocation2 + $0x108] sm:$0xff]
    %v2456 = vld [vmem:[#allocation2 + $0x110] sm:$0xff]
    %v2457 = vld [vmem:[#allocation2 + $0x118] sm:$0xff]
    %v2458 = vld [vmem:[#allocation2 + $0x120] sm:$0xff]
    %v2459 = vld [vmem:[#allocation2 + $0x128] sm:$0xff]
    %v2460 = vld [vmem:[#allocation2 + $0x130] sm:$0xff]
    %v2461 = vld [vmem:[#allocation2 + $0x138] sm:$0xff]
    %v2462 = vld [vmem:[#allocation2 + $0x140] sm:$0xff]
    %v2463 = vld [vmem:[#allocation2 + $0x148] sm:$0xff]
    %v2464 = vld [vmem:[#allocation2 + $0x150] sm:$0xff]
    %v2465 = vld [vmem:[#allocation2 + $0x158] sm:$0xff]
    %v2466 = vld [vmem:[#allocation2 + $0x160] sm:$0xff]
    %v2467 = vld [vmem:[#allocation2 + $0x168] sm:$0xff]
    %v2468 = vld [vmem:[#allocation2 + $0x170] sm:$0xff]
    %v2469 = vld [vmem:[#allocation2 + $0x178] sm:$0xff]
    %v2470 = vld [vmem:[#allocation2 + $0x180] sm:$0xff]
    %v2471 = vld [vmem:[#allocation2 + $0x188] sm:$0xff]
    %v2472 = vld [vmem:[#allocation2 + $0x190] sm:$0xff]
    %v2473 = vld [vmem:[#allocation2 + $0x198] sm:$0xff]
    %v2474 = vld [vmem:[#allocation2 + $0x1a0] sm:$0xff]
    %v2475 = vld [vmem:[#allocation2 + $0x1a8] sm:$0xff]
    %v2476 = vld [vmem:[#allocation2 + $0x1b0] sm:$0xff]
    %v2477 = vld [vmem:[#allocation2 + $0x1b8] sm:$0xff]
    %v2478 = vld [vmem:[#allocation2 + $0x1c0] sm:$0xff]
    %v2479 = vld [vmem:[#allocation2 + $0x1c8] sm:$0xff]
    %v2480 = vld [vmem:[#allocation2 + $0x1d0] sm:$0xff]
    %v2481 = vld [vmem:[#allocation2 + $0x1d8] sm:$0xff]
    %v2482 = vld [vmem:[#allocation2 + $0x1e0] sm:$0xff]
    %v2483 = vld [vmem:[#allocation2 + $0x1e8] sm:$0xff]
    %v2484 = vld [vmem:[#allocation2 + $0x1f0] sm:$0xff]
    %v2485 = vld [vmem:[#allocation2 + $0x1f8] sm:$0xff]
    %v2486 = vpack.c.bf16 %v2414, %v2414
    %v2487 = vpack.c.bf16 %v2415, %v2415
    %v2488 = vpack.c.bf16 %v2416, %v2416
    %v2489 = vpack.c.bf16 %v2417, %v2417
    %v2490 = vld [vmem:[#allocation10] sm:$0x3]
    %v2492 = vlaneseq
    %v2493 = vshrl.u32 %v2492, 7
    %v2494 = vsub.s32 0, %v2493
    %v2495 = vrot.slane %v2490, %v2494
    %v2496 = vlaneseq
    %v2497 = vshrl.u32 %v2496, 7
    %v2498 = vsub.s32 1, %v2497
    %v2499 = vrot.slane %v2490, %v2498
    %2502 = vmatprep.subr.bf16.mxu0 %v2423
    %2503 = vmatpush1.bf16.msra.mxu0 %v2422
    %2504 = vmatprep.subr.bf16.mxu0 %v2425
    %2505 = vmatpush1.bf16.msra.mxu0 %v2424
    %2506 = vmatprep.subr.bf16.mxu0 %v2427
    %2507 = vmatpush1.bf16.msra.mxu0 %v2426
    %2508 = vmatprep.subr.bf16.mxu0 %v2429
    %2509 = vmatpush1.bf16.msra.mxu0 %v2428
    %2510 = vmatprep.subr.bf16.mxu0 %v2431
    %2511 = vmatpush1.bf16.msra.mxu0 %v2430
    %2512 = vmatprep.subr.bf16.mxu0 %v2433
    %2513 = vmatpush1.bf16.msra.mxu0 %v2432
    %2514 = vmatprep.subr.bf16.mxu0 %v2435
    %2515 = vmatpush1.bf16.msra.mxu0 %v2434
    %2516 = vmatprep.subr.bf16.mxu0 %v2437
    %2517 = vmatpush1.bf16.msra.mxu0 %v2436
    %2518 = vmatprep.subr.bf16.mxu0 %v2439
    %2519 = vmatpush1.bf16.msra.mxu0 %v2438
    %2520 = vmatprep.subr.bf16.mxu0 %v2441
    %2521 = vmatpush1.bf16.msra.mxu0 %v2440
    %2522 = vmatprep.subr.bf16.mxu0 %v2443
    %2523 = vmatpush1.bf16.msra.mxu0 %v2442
    %2524 = vmatprep.subr.bf16.mxu0 %v2445
    %2525 = vmatpush1.bf16.msra.mxu0 %v2444
    %2526 = vmatprep.subr.bf16.mxu0 %v2447
    %2527 = vmatpush1.bf16.msra.mxu0 %v2446
    %2528 = vmatprep.subr.bf16.mxu0 %v2449
    %2529 = vmatpush1.bf16.msra.mxu0 %v2448
    %2530 = vmatprep.subr.bf16.mxu0 %v2451
    %2531 = vmatpush1.bf16.msra.mxu0 %v2450
    %2532 = vmatprep.subr.bf16.mxu0 %v2453
    %2533 = vmatpush1.bf16.msra.mxu0 %v2452
    %2534 = vmatprep.mubr.bf16.mxu0 %v2487
    %2535 = vmatmul.mubr.bf16.gmra.mrb[0].mxu0 %v2486
    %v2536 = vpop.f32.mrb[0].mxu0
    %v2537 = vadd.f32 %v2495, %v2536
    %v2538 = vpop.f32.mrb[0].mxu0
    %v2539 = vadd.f32 %v2499, %v2538
    %v2540 = vpop.f32.mrb[0].mxu0
    %v2541 = vpop.f32.mrb[0].mxu0
    %2542 = vdwg.mxu0
    %2543 = vmatprep.subr.bf16.mxu0 %v2455
    %2544 = vmatpush1.bf16.msra.mxu0 %v2454
    %2545 = vmatprep.subr.bf16.mxu0 %v2457
    %2546 = vmatpush1.bf16.msra.mxu0 %v2456
    %2547 = vmatprep.subr.bf16.mxu0 %v2459
    %2548 = vmatpush1.bf16.msra.mxu0 %v2458
    %2549 = vmatprep.subr.bf16.mxu0 %v2461
    %2550 = vmatpush1.bf16.msra.mxu0 %v2460
    %2551 = vmatprep.subr.bf16.mxu0 %v2463
    %2552 = vmatpush1.bf16.msra.mxu0 %v2462
    %2553 = vmatprep.subr.bf16.mxu0 %v2465
    %2554 = vmatpush1.bf16.msra.mxu0 %v2464
    %2555 = vmatprep.subr.bf16.mxu0 %v2467
    %2556 = vmatpush1.bf16.msra.mxu0 %v2466
    %2557 = vmatprep.subr.bf16.mxu0 %v2469
    %2558 = vmatpush1.bf16.msra.mxu0 %v2468
    %2559 = vmatprep.subr.bf16.mxu0 %v2471
    %2560 = vmatpush1.bf16.msra.mxu0 %v2470
    %2561 = vmatprep.subr.bf16.mxu0 %v2473
    %2562 = vmatpush1.bf16.msra.mxu0 %v2472
    %2563 = vmatprep.subr.bf16.mxu0 %v2475
    %2564 = vmatpush1.bf16.msra.mxu0 %v2474
    %2565 = vmatprep.subr.bf16.mxu0 %v2477
    %2566 = vmatpush1.bf16.msra.mxu0 %v2476
    %2567 = vmatprep.subr.bf16.mxu0 %v2479
    %2568 = vmatpush1.bf16.msra.mxu0 %v2478
    %2569 = vmatprep.subr.bf16.mxu0 %v2481
    %2570 = vmatpush1.bf16.msra.mxu0 %v2480
    %2571 = vmatprep.subr.bf16.mxu0 %v2483
    %2572 = vmatpush1.bf16.msra.mxu0 %v2482
    %2573 = vmatprep.subr.bf16.mxu0 %v2485
    %2574 = vmatpush1.bf16.msra.mxu0 %v2484
    %2575 = vmatprep.mubr.bf16.mxu0 %v2489
    %2576 = vmatmul.mubr.bf16.gmra.mrb[0].mxu0 %v2488
    %v2577 = vpop.f32.mrb[0].mxu0
    %v2578 = vadd.f32 %v2537, %v2577
    %v2579 = vpop.f32.mrb[0].mxu0
    %v2580 = vadd.f32 %v2539, %v2579
    %v2581 = vpop.f32.mrb[0].mxu0
    %v2582 = vpop.f32.mrb[0].mxu0
    %2583 = vdwg.mxu0
    %v2584 = vsel %vm1907, %v2578, 0.0
    %v2585 = vrot.slane %v2584, 4
    %v2586 = vadd.f32 %v2584, %v2585
    %v2587 = vrot.slane %v2586, 2
    %v2588 = vadd.f32 %v2586, %v2587
    %v2589 = vrot.slane %v2588, 1
    %v2590 = vadd.f32 %v2588, %v2589
    %v2591 = vsel %vm1907, %v2580, 0.0
    %v2592 = vrot.slane %v2591, 4
    %v2593 = vadd.f32 %v2591, %v2592
    %v2594 = vrot.slane %v2593, 2
    %v2595 = vadd.f32 %v2593, %v2594
    %v2596 = vrot.slane %v2595, 1
    %v2597 = vadd.f32 %v2595, %v2596
    %v2598 = vmul.f32 %v2590, %v1936
    %v2599 = vmul.f32 %v2597, %v1936
    %v2600 = vmul.f32 %v2578, %v2578
    %v2601 = vmul.f32 %v2580, %v2580
    %v2602 = vsel %vm1907, %v2600, 0.0
    %v2603 = vrot.slane %v2602, 4
    %v2604 = vadd.f32 %v2602, %v2603
    %v2605 = vrot.slane %v2604, 2
    %v2606 = vadd.f32 %v2604, %v2605
    %v2607 = vrot.slane %v2606, 1
    %v2608 = vadd.f32 %v2606, %v2607
    %v2609 = vsel %vm1907, %v2601, 0.0
    %v2610 = vrot.slane %v2609, 4
    %v2611 = vadd.f32 %v2609, %v2610
    %v2612 = vrot.slane %v2611, 2
    %v2613 = vadd.f32 %v2611, %v2612
    %v2614 = vrot.slane %v2613, 1
    %v2615 = vadd.f32 %v2613, %v2614
    %v2616 = vmul.f32 %v2608, %v1936
    %v2617 = vmul.f32 %v2615, %v1936
    %v2618 = vsel %vm1979, %v2598, %v2616
    %v2619 = vsel %vm1979, %v2599, %v2617
    %v2620 = vld [vmem:[%s8] sm:$0xff]
    %v2621 = vld [vmem:[%s8 + $0x8] sm:$0xff]
    %v2622 = vld [vmem:[%s8 + $0x10] sm:$0xff]
    %v2623 = vld [vmem:[%s8 + $0x18] sm:$0xff]
    %v2624 = vld [vmem:[%s8 + $0x20] sm:$0xff]
    %v2625 = vld [vmem:[%s8 + $0x28] sm:$0xff]
    %v2626 = vld [vmem:[%s8 + $0x30] sm:$0xff]
    %v2627 = vld [vmem:[%s8 + $0x38] sm:$0xff]
    %v2628 = vld [vmem:[%s8 + $0x40] sm:$0xff]
    %v2629 = vld [vmem:[%s8 + $0x48] sm:$0xff]
    %v2630 = vld [vmem:[%s8 + $0x50] sm:$0xff]
    %v2631 = vld [vmem:[%s8 + $0x58] sm:$0xff]
    %v2632 = vld [vmem:[%s8 + $0x60] sm:$0xff]
    %v2633 = vld [vmem:[%s8 + $0x68] sm:$0xff]
    %v2634 = vld [vmem:[%s8 + $0x70] sm:$0xff]
    %v2635 = vld [vmem:[%s8 + $0x78] sm:$0xff]
    %v2636 = vld [vmem:[%s8 + $0x80] sm:$0xff]
    %v2637 = vld [vmem:[%s8 + $0x88] sm:$0xff]
    %v2638 = vld [vmem:[%s8 + $0x90] sm:$0xff]
    %v2639 = vld [vmem:[%s8 + $0x98] sm:$0xff]
    %v2640 = vld [vmem:[%s8 + $0xa0] sm:$0xff]
    %v2641 = vld [vmem:[%s8 + $0xa8] sm:$0xff]
    %v2642 = vld [vmem:[%s8 + $0xb0] sm:$0xff]
    %v2643 = vld [vmem:[%s8 + $0xb8] sm:$0xff]
    %v2644 = vld [vmem:[%s8 + $0xc0] sm:$0xff]
    %v2645 = vld [vmem:[%s8 + $0xc8] sm:$0xff]
    %v2646 = vld [vmem:[%s8 + $0xd0] sm:$0xff]
    %v2647 = vld [vmem:[%s8 + $0xd8] sm:$0xff]
    %v2648 = vld [vmem:[%s8 + $0xe0] sm:$0xff]
    %v2649 = vld [vmem:[%s8 + $0xe8] sm:$0xff]
    %v2650 = vld [vmem:[%s8 + $0xf0] sm:$0xff]
    %v2651 = vld [vmem:[%s8 + $0xf8] sm:$0xff]
    %2652 = vmatprep.subr.mxu0 0.0
    %2653 = vmatpush1.msra.mxu0 %v2620
    %2654 = vmatprep.subr.mxu0 0.0
    %2655 = vmatpush1.msra.mxu0 %v2621
    %2656 = vmatprep.subr.mxu0 0.0
    %2657 = vmatpush1.msra.mxu0 %v2622
    %2658 = vmatprep.subr.mxu0 0.0
    %2659 = vmatpush1.msra.mxu0 %v2623
    %2660 = vmatprep.subr.mxu0 0.0
    %2661 = vmatpush1.msra.mxu0 %v2624
    %2662 = vmatprep.subr.mxu0 0.0
    %2663 = vmatpush1.msra.mxu0 %v2625
    %2664 = vmatprep.subr.mxu0 0.0
    %2665 = vmatpush1.msra.mxu0 %v2626
    %2666 = vmatprep.subr.mxu0 0.0
    %2667 = vmatpush1.msra.mxu0 %v2627
    %2668 = vmatprep.subr.mxu0 0.0
    %2669 = vmatpush1.msra.mxu0 %v2628
    %2670 = vmatprep.subr.mxu0 0.0
    %2671 = vmatpush1.msra.mxu0 %v2629
    %2672 = vmatprep.subr.mxu0 0.0
    %2673 = vmatpush1.msra.mxu0 %v2630
    %2674 = vmatprep.subr.mxu0 0.0
    %2675 = vmatpush1.msra.mxu0 %v2631
    %2676 = vmatprep.subr.mxu0 0.0
    %2677 = vmatpush1.msra.mxu0 %v2632
    %2678 = vmatprep.subr.mxu0 0.0
    %2679 = vmatpush1.msra.mxu0 %v2633
    %2680 = vmatprep.subr.mxu0 0.0
    %2681 = vmatpush1.msra.mxu0 %v2634
    %2682 = vmatprep.subr.mxu0 0.0
    %2683 = vmatpush1.msra.mxu0 %v2635
    %2684 = vmatprep.subr.mxu0 0.0
    %2685 = vmatpush1.msra.mxu0 %v2636
    %2686 = vmatprep.subr.mxu0 0.0
    %2687 = vmatpush1.msra.mxu0 %v2637
    %2688 = vmatprep.subr.mxu0 0.0
    %2689 = vmatpush1.msra.mxu0 %v2638
    %2690 = vmatprep.subr.mxu0 0.0
    %2691 = vmatpush1.msra.mxu0 %v2639
    %2692 = vmatprep.subr.mxu0 0.0
    %2693 = vmatpush1.msra.mxu0 %v2640
    %2694 = vmatprep.subr.mxu0 0.0
    %2695 = vmatpush1.msra.mxu0 %v2641
    %2696 = vmatprep.subr.mxu0 0.0
    %2697 = vmatpush1.msra.mxu0 %v2642
    %2698 = vmatprep.subr.mxu0 0.0
    %2699 = vmatpush1.msra.mxu0 %v2643
    %2700 = vmatprep.subr.mxu0 0.0
    %2701 = vmatpush1.msra.mxu0 %v2644
    %2702 = vmatprep.subr.mxu0 0.0
    %2703 = vmatpush1.msra.mxu0 %v2645
    %2704 = vmatprep.subr.mxu0 0.0
    %2705 = vmatpush1.msra.mxu0 %v2646
    %2706 = vmatprep.subr.mxu0 0.0
    %2707 = vmatpush1.msra.mxu0 %v2647
    %2708 = vmatprep.subr.mxu0 0.0
    %2709 = vmatpush1.msra.mxu0 %v2648
    %2710 = vmatprep.subr.mxu0 0.0
    %2711 = vmatpush1.msra.mxu0 %v2649
    %2712 = vmatprep.subr.mxu0 0.0
    %2713 = vmatpush1.msra.mxu0 %v2650
    %2714 = vmatprep.subr.mxu0 0.0
    %2715 = vmatpush1.msra.mxu0 %v2651
    %2716 = vmatprep.mubr.f32.mxu0 %v2619
    %2717 = vmatmul.mubr.f32.gmra.mrb[0].mxu0 %v2618
    %v2718 = vpop.f32.mrb[0].mxu0
    %v2719 = vadd.f32 0.0, %v2718
    %v2720 = vpop.f32.mrb[0].mxu0
    %2721 = vdwg.mxu0
    %v2722 = vld [vmem:[#allocation11] sm:$0xff]
    %v2723 = vld [vmem:[#allocation11 + $0x8] sm:$0xff]
    %v2724 = vld [vmem:[#allocation11 + $0x10] sm:$0xff]
    %v2725 = vld [vmem:[#allocation11 + $0x18] sm:$0xff]
    %vm2726 = vcmask 130048
    %v2728 = vsel %vm2726, %v2719, 0
    %2730 = vmatprep.subr.mxu0 %v2723
    %2731 = vmatpush1.msra.mxu0 %v2722
    %2732 = vmatprep.subr.mxu0 %v2725
    %2733 = vmatpush1.msra.mxu0 %v2724
    %2734 = vmatprep.subr.mxu0 0.0
    %2735 = vmatpush1.msra.mxu0 0.0
    %2736 = vmatprep.subr.mxu0 0.0
    %2737 = vmatpush1.msra.mxu0 0.0
    %2738 = vmatprep.subr.mxu0 0.0
    %2739 = vmatpush1.msra.mxu0 0.0
    %2740 = vmatprep.subr.mxu0 0.0
    %2741 = vmatpush1.msra.mxu0 0.0
    %2742 = vmatprep.subr.mxu0 0.0
    %2743 = vmatpush1.msra.mxu0 0.0
    %2744 = vmatprep.subr.mxu0 0.0
    %2745 = vmatpush1.msra.mxu0 0.0
    %2746 = vmatprep.subr.mxu0 0.0
    %2747 = vmatpush1.msra.mxu0 0.0
    %2748 = vmatprep.subr.mxu0 0.0
    %2749 = vmatpush1.msra.mxu0 0.0
    %2750 = vmatprep.subr.mxu0 0.0
    %2751 = vmatpush1.msra.mxu0 0.0
    %2752 = vmatprep.subr.mxu0 0.0
    %2753 = vmatpush1.msra.mxu0 0.0
    %2754 = vmatprep.subr.mxu0 0.0
    %2755 = vmatpush1.msra.mxu0 0.0
    %2756 = vmatprep.subr.mxu0 0.0
    %2757 = vmatpush1.msra.mxu0 0.0
    %2758 = vmatprep.subr.mxu0 0.0
    %2759 = vmatpush1.msra.mxu0 0.0
    %2760 = vmatprep.subr.mxu0 0.0
    %2761 = vmatpush1.msra.mxu0 0.0
    %2762 = vmatprep.subr.mxu0 0.0
    %2763 = vmatpush1.msra.mxu0 0.0
    %2764 = vmatprep.subr.mxu0 0.0
    %2765 = vmatpush1.msra.mxu0 0.0
    %2766 = vmatprep.subr.mxu0 0.0
    %2767 = vmatpush1.msra.mxu0 0.0
    %2768 = vmatprep.subr.mxu0 0.0
    %2769 = vmatpush1.msra.mxu0 0.0
    %2770 = vmatprep.subr.mxu0 0.0
    %2771 = vmatpush1.msra.mxu0 0.0
    %2772 = vmatprep.subr.mxu0 0.0
    %2773 = vmatpush1.msra.mxu0 0.0
    %2774 = vmatprep.subr.mxu0 0.0
    %2775 = vmatpush1.msra.mxu0 0.0
    %2776 = vmatprep.subr.mxu0 0.0
    %2777 = vmatpush1.msra.mxu0 0.0
    %2778 = vmatprep.subr.mxu0 0.0
    %2779 = vmatpush1.msra.mxu0 0.0
    %2780 = vmatprep.subr.mxu0 0.0
    %2781 = vmatpush1.msra.mxu0 0.0
    %2782 = vmatprep.subr.mxu0 0.0
    %2783 = vmatpush1.msra.mxu0 0.0
    %2784 = vmatprep.subr.mxu0 0.0
    %2785 = vmatpush1.msra.mxu0 0.0
    %2786 = vmatprep.subr.mxu0 0.0
    %2787 = vmatpush1.msra.mxu0 0.0
    %2788 = vmatprep.subr.mxu0 0.0
    %2789 = vmatpush1.msra.mxu0 0.0
    %2790 = vmatprep.subr.mxu0 0.0
    %2791 = vmatpush1.msra.mxu0 0.0
    %2792 = vmatprep.subr.mxu0 0.0
    %2793 = vmatpush1.msra.mxu0 0.0
    %2794 = vmatprep.mubr.f32.mxu0 0.0
    %2795 = vmatmul.mubr.f32.gmra.mrb[0].mxu0 %v2728
    %v2796 = vpop.f32.mrb[0].mxu0
    %v2797 = vadd.f32 0.0, %v2796
    %v2798 = vpop.f32.mrb[0].mxu0
    %v2799 = vadd.f32 0.0, %v2798
    %2800 = vdwg.mxu0
    %v2801 = vmul.f32 %v2797, %v2797
    %v2802 = vmul.f32 %v2799, %v2799
    %v2805 = vrot.slane %v2801, 7
    %v2806 = vrot.slane %v2802, 7
    %v2809 = vsub.f32 %v2797, %v2805
    %v2810 = vsub.f32 %v2799, %v2806
    %v2811 = vlaneseq
    %v2812 = vshrl.u32 %v2811, 7
    %v2813 = vsub.s32 0, %v2812
    %v2814 = vrot.slane %v2797, %v2813
    %v2815 = vlaneseq
    %v2816 = vshrl.u32 %v2815, 7
    %v2817 = vsub.s32 0, %v2816
    %v2818 = vrot.slane %v2799, %v2817
    %v2819 = vsub.f32 %v2578, %v2814
    %v2820 = vsub.f32 %v2580, %v2818
    %v2821 = vadd.f32 %v2809, 1e-05
    %v2822 = vadd.f32 %v2810, 1e-05
    %v2823 = vrsqrt.pop %v2821
    %v2824 = vrsqrt.pop %v2822
    %v2825 = vlaneseq
    %v2826 = vshrl.u32 %v2825, 7
    %v2827 = vsub.s32 1, %v2826
    %v2828 = vrot.slane %v2823, %v2827
    %v2829 = vlaneseq
    %v2830 = vshrl.u32 %v2829, 7
    %v2831 = vsub.s32 1, %v2830
    %v2832 = vrot.slane %v2824, %v2831
    %v2833 = vmul.f32 %v2819, %v2828
    %v2834 = vmul.f32 %v2820, %v2832
    %vm2835 = vcmp.gt.f32.partialorder %v2833, 0.0
    %vm2836 = vcmp.gt.f32.partialorder %v2834, 0.0
    %v2837 = vmul.f32 %v2833, 0.01
    %v2838 = vmul.f32 %v2834, 0.01
    %v2839 = vsel %vm2835, %v2833, %v2837
    %v2840 = vsel %vm2836, %v2834, %v2838
    %v2841 = vpack.c.bf16 %v2839, %v2839
    %v2842 = vpack.c.bf16 %v2840, %v2840
    %v2843 = vld [vmem:[%s10] sm:$0xf]
    %v2844 = vld [vmem:[%s10 + $0x4] sm:$0xf]
    %v2845 = vld [vmem:[%s10 + $0x8] sm:$0xf]
    %v2846 = vld [vmem:[%s10 + $0xc] sm:$0xf]
    %v2847 = vld [vmem:[%s10 + $0x10] sm:$0xf]
    %v2848 = vld [vmem:[%s10 + $0x14] sm:$0xf]
    %v2849 = vld [vmem:[%s10 + $0x18] sm:$0xf]
    %v2850 = vld [vmem:[%s10 + $0x1c] sm:$0xf]
    %v2851 = vld [vmem:[%s10 + $0x20] sm:$0xf]
    %v2852 = vld [vmem:[%s10 + $0x24] sm:$0xf]
    %v2853 = vld [vmem:[%s10 + $0x28] sm:$0xf]
    %v2854 = vld [vmem:[%s10 + $0x2c] sm:$0xf]
    %v2855 = vld [vmem:[%s10 + $0x30] sm:$0xf]
    %v2856 = vld [vmem:[%s10 + $0x34] sm:$0xf]
    %v2857 = vld [vmem:[%s10 + $0x38] sm:$0xf]
    %v2858 = vld [vmem:[%s10 + $0x3c] sm:$0xf]
    %v2859 = vld [vmem:[%s10 + $0x40] sm:$0xf]
    %v2860 = vld [vmem:[%s10 + $0x44] sm:$0xf]
    %v2861 = vld [vmem:[%s10 + $0x48] sm:$0xf]
    %v2862 = vld [vmem:[%s10 + $0x4c] sm:$0xf]
    %v2863 = vld [vmem:[%s10 + $0x50] sm:$0xf]
    %v2864 = vld [vmem:[%s10 + $0x54] sm:$0xf]
    %v2865 = vld [vmem:[%s10 + $0x58] sm:$0xf]
    %v2866 = vld [vmem:[%s10 + $0x5c] sm:$0xf]
    %v2867 = vld [vmem:[%s10 + $0x60] sm:$0xf]
    %v2868 = vld [vmem:[%s10 + $0x64] sm:$0xf]
    %v2869 = vld [vmem:[%s10 + $0x68] sm:$0xf]
    %v2870 = vld [vmem:[%s10 + $0x6c] sm:$0xf]
    %v2871 = vld [vmem:[%s10 + $0x70] sm:$0xf]
    %v2872 = vld [vmem:[%s10 + $0x74] sm:$0xf]
    %v2873 = vld [vmem:[%s10 + $0x78] sm:$0xf]
    %v2874 = vld [vmem:[%s10 + $0x7c] sm:$0xf]
    %v2875 = vld [vmem:[#allocation13] sm:$0x1]
    %v2877 = vlaneseq
    %v2878 = vshrl.u32 %v2877, 7
    %v2879 = vsub.s32 0, %v2878
    %v2880 = vrot.slane %v2875, %v2879
    %v2914 = vunpack.c.l.b16 %v2843
    %v2915 = vunpack.c.l.b16 %v2844
    %v2916 = vunpack.c.l.b16 %v2845
    %v2917 = vunpack.c.l.b16 %v2846
    %v2918 = vunpack.c.l.b16 %v2847
    %v2919 = vunpack.c.l.b16 %v2848
    %v2920 = vunpack.c.l.b16 %v2849
    %v2921 = vunpack.c.l.b16 %v2850
    %v2922 = vunpack.c.l.b16 %v2851
    %v2923 = vunpack.c.l.b16 %v2852
    %v2924 = vunpack.c.l.b16 %v2853
    %v2925 = vunpack.c.l.b16 %v2854
    %v2926 = vunpack.c.l.b16 %v2855
    %v2927 = vunpack.c.l.b16 %v2856
    %v2928 = vunpack.c.l.b16 %v2857
    %v2929 = vunpack.c.l.b16 %v2858
    %v2930 = vunpack.c.l.b16 %v2859
    %v2931 = vunpack.c.l.b16 %v2860
    %v2932 = vunpack.c.l.b16 %v2861
    %v2933 = vunpack.c.l.b16 %v2862
    %v2934 = vunpack.c.l.b16 %v2863
    %v2935 = vunpack.c.l.b16 %v2864
    %v2936 = vunpack.c.l.b16 %v2865
    %v2937 = vunpack.c.l.b16 %v2866
    %v2938 = vunpack.c.l.b16 %v2867
    %v2939 = vunpack.c.l.b16 %v2868
    %v2940 = vunpack.c.l.b16 %v2869
    %v2941 = vunpack.c.l.b16 %v2870
    %v2942 = vunpack.c.l.b16 %v2871
    %v2943 = vunpack.c.l.b16 %v2872
    %v2944 = vunpack.c.l.b16 %v2873
    %v2945 = vunpack.c.l.b16 %v2874
    %v2946 = vpack.c.b16 %v2915, %v2914
    %v2947 = vpack.c.b16 %v2917, %v2916
    %v2948 = vpack.c.b16 %v2919, %v2918
    %v2949 = vpack.c.b16 %v2921, %v2920
    %v2950 = vpack.c.b16 %v2923, %v2922
    %v2951 = vpack.c.b16 %v2925, %v2924
    %v2952 = vpack.c.b16 %v2927, %v2926
    %v2953 = vpack.c.b16 %v2929, %v2928
    %v2954 = vpack.c.b16 %v2931, %v2930
    %v2955 = vpack.c.b16 %v2933, %v2932
    %v2956 = vpack.c.b16 %v2935, %v2934
    %v2957 = vpack.c.b16 %v2937, %v2936
    %v2958 = vpack.c.b16 %v2939, %v2938
    %v2959 = vpack.c.b16 %v2941, %v2940
    %v2960 = vpack.c.b16 %v2943, %v2942
    %v2961 = vpack.c.b16 %v2945, %v2944
    %2978 = vmatprep.subr.bf16.mxu0 0
    %2979 = vmatpush1.bf16.msra.mxu0 %v2946
    %2980 = vmatprep.subr.bf16.mxu0 0
    %2981 = vmatpush1.bf16.msra.mxu0 %v2947
    %2982 = vmatprep.subr.bf16.mxu0 0
    %2983 = vmatpush1.bf16.msra.mxu0 %v2948
    %2984 = vmatprep.subr.bf16.mxu0 0
    %2985 = vmatpush1.bf16.msra.mxu0 %v2949
    %2986 = vmatprep.subr.bf16.mxu0 0
    %2987 = vmatpush1.bf16.msra.mxu0 %v2950
    %2988 = vmatprep.subr.bf16.mxu0 0
    %2989 = vmatpush1.bf16.msra.mxu0 %v2951
    %2990 = vmatprep.subr.bf16.mxu0 0
    %2991 = vmatpush1.bf16.msra.mxu0 %v2952
    %2992 = vmatprep.subr.bf16.mxu0 0
    %2993 = vmatpush1.bf16.msra.mxu0 %v2953
    %2994 = vmatprep.subr.bf16.mxu0 0
    %2995 = vmatpush1.bf16.msra.mxu0 %v2954
    %2996 = vmatprep.subr.bf16.mxu0 0
    %2997 = vmatpush1.bf16.msra.mxu0 %v2955
    %2998 = vmatprep.subr.bf16.mxu0 0
    %2999 = vmatpush1.bf16.msra.mxu0 %v2956
    %3000 = vmatprep.subr.bf16.mxu0 0
    %3001 = vmatpush1.bf16.msra.mxu0 %v2957
    %3002 = vmatprep.subr.bf16.mxu0 0
    %3003 = vmatpush1.bf16.msra.mxu0 %v2958
    %3004 = vmatprep.subr.bf16.mxu0 0
    %3005 = vmatpush1.bf16.msra.mxu0 %v2959
    %3006 = vmatprep.subr.bf16.mxu0 0
    %3007 = vmatpush1.bf16.msra.mxu0 %v2960
    %3008 = vmatprep.subr.bf16.mxu0 0
    %3009 = vmatpush1.bf16.msra.mxu0 %v2961
    %3010 = vmatprep.mubr.bf16.mxu0 %v2842
    %3011 = vmatmul.mubr.bf16.gmra.mrb[0].mxu0 %v2841
    %v3012 = vpop.f32.mrb[0].mxu0
    %v3013 = vadd.f32 %v2880, %v3012
    %v3014 = vpop.f32.mrb[0].mxu0
    %v3015 = vpop.f32.mrb[0].mxu0
    %v3016 = vpop.f32.mrb[0].mxu0
    %3017 = vdwg.mxu0
    %v3018 = vpack.c.bf16 %v3013, %v3013
    %v3019 = vld [vmem:[#allocation14] sm:$0xf]
    %v3020 = vld [vmem:[#allocation14 + $0x4] sm:$0xf]
    %v3021 = vld [vmem:[#allocation14 + $0x8] sm:$0xf]
    %v3022 = vld [vmem:[#allocation14 + $0xc] sm:$0xf]
    %v3023 = vld [vmem:[#allocation14 + $0x10] sm:$0xf]
    %v3024 = vld [vmem:[#allocation14 + $0x14] sm:$0xf]
    %v3025 = vld [vmem:[#allocation14 + $0x18] sm:$0xf]
    %v3026 = vld [vmem:[#allocation14 + $0x1c] sm:$0xf]
    %v3027 = vld [vmem:[#allocation14 + $0x20] sm:$0xf]
    %v3028 = vld [vmem:[#allocation14 + $0x24] sm:$0xf]
    %v3029 = vld [vmem:[#allocation14 + $0x28] sm:$0xf]
    %v3030 = vld [vmem:[#allocation14 + $0x2c] sm:$0xf]
    %v3031 = vld [vmem:[#allocation14 + $0x30] sm:$0xf]
    %v3032 = vld [vmem:[#allocation14 + $0x34] sm:$0xf]
    %v3033 = vld [vmem:[#allocation14 + $0x38] sm:$0xf]
    %v3034 = vld [vmem:[#allocation14 + $0x3c] sm:$0xf]
    %v3035 = vld [vmem:[#allocation16] sm:$0x1]
    %v3037 = vlaneseq
    %v3038 = vshrl.u32 %v3037, 7
    %v3039 = vsub.s32 0, %v3038
    %v3040 = vrot.slane %v3035, %v3039
    %v3058 = vunpack.c.l.b16 %v3019
    %v3059 = vunpack.c.l.b16 %v3020
    %v3060 = vunpack.c.l.b16 %v3021
    %v3061 = vunpack.c.l.b16 %v3022
    %v3062 = vunpack.c.l.b16 %v3023
    %v3063 = vunpack.c.l.b16 %v3024
    %v3064 = vunpack.c.l.b16 %v3025
    %v3065 = vunpack.c.l.b16 %v3026
    %v3066 = vunpack.c.l.b16 %v3027
    %v3067 = vunpack.c.l.b16 %v3028
    %v3068 = vunpack.c.l.b16 %v3029
    %v3069 = vunpack.c.l.b16 %v3030
    %v3070 = vunpack.c.l.b16 %v3031
    %v3071 = vunpack.c.l.b16 %v3032
    %v3072 = vunpack.c.l.b16 %v3033
    %v3073 = vunpack.c.l.b16 %v3034
    %v3074 = vpack.c.b16 %v3059, %v3058
    %v3075 = vpack.c.b16 %v3061, %v3060
    %v3076 = vpack.c.b16 %v3063, %v3062
    %v3077 = vpack.c.b16 %v3065, %v3064
    %v3078 = vpack.c.b16 %v3067, %v3066
    %v3079 = vpack.c.b16 %v3069, %v3068
    %v3080 = vpack.c.b16 %v3071, %v3070
    %v3081 = vpack.c.b16 %v3073, %v3072
    %3090 = vmatprep.subr.bf16.mxu0 0
    %3091 = vmatpush1.bf16.msra.mxu0 %v3074
    %3092 = vmatprep.subr.bf16.mxu0 0
    %3093 = vmatpush1.bf16.msra.mxu0 %v3075
    %3094 = vmatprep.subr.bf16.mxu0 0
    %3095 = vmatpush1.bf16.msra.mxu0 %v3076
    %3096 = vmatprep.subr.bf16.mxu0 0
    %3097 = vmatpush1.bf16.msra.mxu0 %v3077
    %3098 = vmatprep.subr.bf16.mxu0 0
    %3099 = vmatpush1.bf16.msra.mxu0 %v3078
    %3100 = vmatprep.subr.bf16.mxu0 0
    %3101 = vmatpush1.bf16.msra.mxu0 %v3079
    %3102 = vmatprep.subr.bf16.mxu0 0
    %3103 = vmatpush1.bf16.msra.mxu0 %v3080
    %3104 = vmatprep.subr.bf16.mxu0 0
    %3105 = vmatpush1.bf16.msra.mxu0 %v3081
    %3106 = vmatprep.subr.bf16.mxu0 0
    %3107 = vmatpush1.bf16.msra.mxu0 0
    %3108 = vmatprep.subr.bf16.mxu0 0
    %3109 = vmatpush1.bf16.msra.mxu0 0
    %3110 = vmatprep.subr.bf16.mxu0 0
    %3111 = vmatpush1.bf16.msra.mxu0 0
    %3112 = vmatprep.subr.bf16.mxu0 0
    %3113 = vmatpush1.bf16.msra.mxu0 0
    %3114 = vmatprep.subr.bf16.mxu0 0
    %3115 = vmatpush1.bf16.msra.mxu0 0
    %3116 = vmatprep.subr.bf16.mxu0 0
    %3117 = vmatpush1.bf16.msra.mxu0 0
    %3118 = vmatprep.subr.bf16.mxu0 0
    %3119 = vmatpush1.bf16.msra.mxu0 0
    %3120 = vmatprep.subr.bf16.mxu0 0
    %3121 = vmatpush1.bf16.msra.mxu0 0
    %3122 = vmatprep.mubr.bf16.mxu0 0
    %3123 = vmatmul.mubr.bf16.gmra.mrb[0].mxu0 %v3018
    %v3124 = vpop.f32.mrb[0].mxu0
    %v3125 = vadd.f32 %v3040, %v3124
    %v3126 = vpop.f32.mrb[0].mxu0
    %v3127 = vpop.f32.mrb[0].mxu0
    %v3128 = vpop.f32.mrb[0].mxu0
    %3129 = vdwg.mxu0
    %3130 = vst [vmem:[%s27] sm:$0x3] %v3125
    %v3131 = vmul.f32 %v3125, 0.5
    %v3132 = vmul.f32 %v3131, 1.442695
    %v3133 = vpow.pop %v3132
    %v3134 = vld [vmem:[%s1] sm:$0x3]
    %3136 = vrot.lane.b32.xlu0 %v3134, 8
    %v3137 = vpop.permute.xlu0 %3136
    %v3139 = vmul.f32 %v3133, %v3137
    %3141 = vrot.lane.b32.xlu0 %v3139, 120
    %v3142 = vpop.permute.xlu0 %3141
    %v3144 = vadd.f32 %v3125, %v3142
    %v3145 = vpack.c.bf16 %v3144, %v3144
    %v3146 = vld [vmem:[#allocation17] sm:$0xf]
    %v3147 = vld [vmem:[#allocation19] sm:$0x1]
    %v3149 = vlaneseq
    %v3150 = vshrl.u32 %v3149, 7
    %v3151 = vsub.s32 0, %v3150
    %v3152 = vrot.slane %v3147, %v3151
    %v3155 = vsel %vm2192, %v3145, 0
    %vm3157 = vcmask 1043456
    %v3159 = vsel %vm3157, %v3146, 0
    %3161 = vmatprep.subr.bf16.mxu0 0
    %3162 = vmatpush1.bf16.msra.mxu0 %v3159
    %3163 = vmatprep.subr.bf16.mxu0 0
    %3164 = vmatpush1.bf16.msra.mxu0 0
    %3165 = vmatprep.subr.bf16.mxu0 0
    %3166 = vmatpush1.bf16.msra.mxu0 0
    %3167 = vmatprep.subr.bf16.mxu0 0
    %3168 = vmatpush1.bf16.msra.mxu0 0
    %3169 = vmatprep.subr.bf16.mxu0 0
    %3170 = vmatpush1.bf16.msra.mxu0 0
    %3171 = vmatprep.subr.bf16.mxu0 0
    %3172 = vmatpush1.bf16.msra.mxu0 0
    %3173 = vmatprep.subr.bf16.mxu0 0
    %3174 = vmatpush1.bf16.msra.mxu0 0
    %3175 = vmatprep.subr.bf16.mxu0 0
    %3176 = vmatpush1.bf16.msra.mxu0 0
    %3177 = vmatprep.subr.bf16.mxu0 0
    %3178 = vmatpush1.bf16.msra.mxu0 0
    %3179 = vmatprep.subr.bf16.mxu0 0
    %3180 = vmatpush1.bf16.msra.mxu0 0
    %3181 = vmatprep.subr.bf16.mxu0 0
    %3182 = vmatpush1.bf16.msra.mxu0 0
    %3183 = vmatprep.subr.bf16.mxu0 0
    %3184 = vmatpush1.bf16.msra.mxu0 0
    %3185 = vmatprep.subr.bf16.mxu0 0
    %3186 = vmatpush1.bf16.msra.mxu0 0
    %3187 = vmatprep.subr.bf16.mxu0 0
    %3188 = vmatpush1.bf16.msra.mxu0 0
    %3189 = vmatprep.subr.bf16.mxu0 0
    %3190 = vmatpush1.bf16.msra.mxu0 0
    %3191 = vmatprep.subr.bf16.mxu0 0
    %3192 = vmatpush1.bf16.msra.mxu0 0
    %3193 = vmatprep.mubr.bf16.mxu0 0
    %3194 = vmatmul.mubr.bf16.gmra.mrb[0].mxu0 %v3155
    %v3195 = vpop.f32.mrb[0].mxu0
    %v3196 = vadd.f32 %v3152, %v3195
    %v3197 = vpop.f32.mrb[0].mxu0
    %v3198 = vpop.f32.mrb[0].mxu0
    %v3199 = vpop.f32.mrb[0].mxu0
    %3200 = vdwg.mxu0
    %vm3201 = vcmp.gt.f32.partialorder %v3196, 0.0
    %v3202 = vmul.f32 %v3196, 0.01
    %v3203 = vsel %vm3201, %v3196, %v3202
    %v3204 = vpack.c.bf16 %v3203, %v3203
    %v3205 = vld [vmem:[#allocation20] sm:$0xff]
    %v3206 = vld [vmem:[#allocation20 + $0x8] sm:$0xff]
    %v3207 = vld [vmem:[#allocation20 + $0x10] sm:$0xff]
    %v3208 = vld [vmem:[#allocation20 + $0x18] sm:$0xff]
    %v3209 = vld [vmem:[#allocation20 + $0x20] sm:$0xff]
    %v3210 = vld [vmem:[#allocation20 + $0x28] sm:$0xff]
    %v3211 = vld [vmem:[#allocation20 + $0x30] sm:$0xff]
    %v3212 = vld [vmem:[#allocation20 + $0x38] sm:$0xff]
    %v3213 = vld [vmem:[#allocation20 + $0x40] sm:$0xff]
    %v3214 = vld [vmem:[#allocation20 + $0x48] sm:$0xff]
    %v3215 = vld [vmem:[#allocation20 + $0x50] sm:$0xff]
    %v3216 = vld [vmem:[#allocation20 + $0x58] sm:$0xff]
    %v3217 = vld [vmem:[#allocation20 + $0x60] sm:$0xff]
    %v3218 = vld [vmem:[#allocation20 + $0x68] sm:$0xff]
    %v3219 = vld [vmem:[#allocation20 + $0x70] sm:$0xff]
    %v3220 = vld [vmem:[#allocation20 + $0x78] sm:$0xff]
    %v3221 = vld [vmem:[#allocation22] sm:$0x3]
    %v3223 = vlaneseq
    %v3224 = vshrl.u32 %v3223, 7
    %v3225 = vsub.s32 0, %v3224
    %v3226 = vrot.slane %v3221, %v3225
    %v3227 = vlaneseq
    %v3228 = vshrl.u32 %v3227, 7
    %v3229 = vsub.s32 1, %v3228
    %v3230 = vrot.slane %v3221, %v3229
    %v3249 = vunpack.c.l.b16 %v3205
    %v3250 = vunpack.c.h.b16 %v3205
    %v3251 = vunpack.c.l.b16 %v3206
    %v3252 = vunpack.c.h.b16 %v3206
    %v3253 = vunpack.c.l.b16 %v3207
    %v3254 = vunpack.c.h.b16 %v3207
    %v3255 = vunpack.c.l.b16 %v3208
    %v3256 = vunpack.c.h.b16 %v3208
    %v3257 = vunpack.c.l.b16 %v3209
    %v3258 = vunpack.c.h.b16 %v3209
    %v3259 = vunpack.c.l.b16 %v3210
    %v3260 = vunpack.c.h.b16 %v3210
    %v3261 = vunpack.c.l.b16 %v3211
    %v3262 = vunpack.c.h.b16 %v3211
    %v3263 = vunpack.c.l.b16 %v3212
    %v3264 = vunpack.c.h.b16 %v3212
    %v3265 = vunpack.c.l.b16 %v3213
    %v3266 = vunpack.c.h.b16 %v3213
    %v3267 = vunpack.c.l.b16 %v3214
    %v3268 = vunpack.c.h.b16 %v3214
    %v3269 = vunpack.c.l.b16 %v3215
    %v3270 = vunpack.c.h.b16 %v3215
    %v3271 = vunpack.c.l.b16 %v3216
    %v3272 = vunpack.c.h.b16 %v3216
    %v3273 = vunpack.c.l.b16 %v3217
    %v3274 = vunpack.c.h.b16 %v3217
    %v3275 = vunpack.c.l.b16 %v3218
    %v3276 = vunpack.c.h.b16 %v3218
    %v3277 = vunpack.c.l.b16 %v3219
    %v3278 = vunpack.c.h.b16 %v3219
    %v3279 = vunpack.c.l.b16 %v3220
    %v3280 = vunpack.c.h.b16 %v3220
    %v3281 = vpack.c.b16 %v3251, %v3249
    %v3282 = vpack.c.b16 %v3252, %v3250
    %v3283 = vpack.c.b16 %v3255, %v3253
    %v3284 = vpack.c.b16 %v3256, %v3254
    %v3285 = vpack.c.b16 %v3259, %v3257
    %v3286 = vpack.c.b16 %v3260, %v3258
    %v3287 = vpack.c.b16 %v3263, %v3261
    %v3288 = vpack.c.b16 %v3264, %v3262
    %v3289 = vpack.c.b16 %v3267, %v3265
    %v3290 = vpack.c.b16 %v3268, %v3266
    %v3291 = vpack.c.b16 %v3271, %v3269
    %v3292 = vpack.c.b16 %v3272, %v3270
    %v3293 = vpack.c.b16 %v3275, %v3273
    %v3294 = vpack.c.b16 %v3276, %v3274
    %v3295 = vpack.c.b16 %v3279, %v3277
    %v3296 = vpack.c.b16 %v3280, %v3278
    %3313 = vmatprep.subr.bf16.mxu0 %v3282
    %3314 = vmatpush1.bf16.msra.mxu0 %v3281
    %3315 = vmatprep.subr.bf16.mxu0 %v3284
    %3316 = vmatpush1.bf16.msra.mxu0 %v3283
    %3317 = vmatprep.subr.bf16.mxu0 %v3286
    %3318 = vmatpush1.bf16.msra.mxu0 %v3285
    %3319 = vmatprep.subr.bf16.mxu0 %v3288
    %3320 = vmatpush1.bf16.msra.mxu0 %v3287
    %3321 = vmatprep.subr.bf16.mxu0 %v3290
    %3322 = vmatpush1.bf16.msra.mxu0 %v3289
    %3323 = vmatprep.subr.bf16.mxu0 %v3292
    %3324 = vmatpush1.bf16.msra.mxu0 %v3291
    %3325 = vmatprep.subr.bf16.mxu0 %v3294
    %3326 = vmatpush1.bf16.msra.mxu0 %v3293
    %3327 = vmatprep.subr.bf16.mxu0 %v3296
    %3328 = vmatpush1.bf16.msra.mxu0 %v3295
    %3329 = vmatprep.subr.bf16.mxu0 0
    %3330 = vmatpush1.bf16.msra.mxu0 0
    %3331 = vmatprep.subr.bf16.mxu0 0
    %3332 = vmatpush1.bf16.msra.mxu0 0
    %3333 = vmatprep.subr.bf16.mxu0 0
    %3334 = vmatpush1.bf16.msra.mxu0 0
    %3335 = vmatprep.subr.bf16.mxu0 0
    %3336 = vmatpush1.bf16.msra.mxu0 0
    %3337 = vmatprep.subr.bf16.mxu0 0
    %3338 = vmatpush1.bf16.msra.mxu0 0
    %3339 = vmatprep.subr.bf16.mxu0 0
    %3340 = vmatpush1.bf16.msra.mxu0 0
    %3341 = vmatprep.subr.bf16.mxu0 0
    %3342 = vmatpush1.bf16.msra.mxu0 0
    %3343 = vmatprep.subr.bf16.mxu0 0
    %3344 = vmatpush1.bf16.msra.mxu0 0
    %3345 = vmatprep.mubr.bf16.mxu0 0
    %3346 = vmatmul.mubr.bf16.gmra.mrb[0].mxu0 %v3204
    %v3347 = vpop.f32.mrb[0].mxu0
    %v3348 = vadd.f32 %v3226, %v3347
    %v3349 = vpop.f32.mrb[0].mxu0
    %v3350 = vadd.f32 %v3230, %v3349
    %v3351 = vpop.f32.mrb[0].mxu0
    %v3352 = vpop.f32.mrb[0].mxu0
    %3353 = vdwg.mxu0
    %vm3354 = vcmp.gt.f32.partialorder %v3348, 0.0
    %vm3355 = vcmp.gt.f32.partialorder %v3350, 0.0
    %v3356 = vmul.f32 %v3348, 0.01
    %v3357 = vmul.f32 %v3350, 0.01
    %v3358 = vsel %vm3354, %v3348, %v3356
    %v3359 = vsel %vm3355, %v3350, %v3357
    %s3360 = smul.u32 4, 32
    %s3361 = smul.u32 %s3360, 4
    %s3362 = sshll.u32 %s3361, 4
    %3363 = dma.done %s808, %s3362
    %v3364 = vld [vmem:[#allocation3] sm:$0xff]
    %v3365 = vld [vmem:[#allocation3 + $0x8] sm:$0xff]
    %v3366 = vld [vmem:[#allocation3 + $0x10] sm:$0xff]
    %v3367 = vld [vmem:[#allocation3 + $0x18] sm:$0xff]
    %v3368 = vld [vmem:[#allocation3 + $0x20] sm:$0xff]
    %v3369 = vld [vmem:[#allocation3 + $0x28] sm:$0xff]
    %v3370 = vld [vmem:[#allocation3 + $0x30] sm:$0xff]
    %v3371 = vld [vmem:[#allocation3 + $0x38] sm:$0xff]
    %v3372 = vld [vmem:[#allocation3 + $0x40] sm:$0xff]
    %v3373 = vld [vmem:[#allocation3 + $0x48] sm:$0xff]
    %v3374 = vld [vmem:[#allocation3 + $0x50] sm:$0xff]
    %v3375 = vld [vmem:[#allocation3 + $0x58] sm:$0xff]
    %v3376 = vld [vmem:[#allocation3 + $0x60] sm:$0xff]
    %v3377 = vld [vmem:[#allocation3 + $0x68] sm:$0xff]
    %v3378 = vld [vmem:[#allocation3 + $0x70] sm:$0xff]
    %v3379 = vld [vmem:[#allocation3 + $0x78] sm:$0xff]
    %v3380 = vld [vmem:[#allocation3 + $0x80] sm:$0xff]
    %v3381 = vld [vmem:[#allocation3 + $0x88] sm:$0xff]
    %v3382 = vld [vmem:[#allocation3 + $0x90] sm:$0xff]
    %v3383 = vld [vmem:[#allocation3 + $0x98] sm:$0xff]
    %v3384 = vld [vmem:[#allocation3 + $0xa0] sm:$0xff]
    %v3385 = vld [vmem:[#allocation3 + $0xa8] sm:$0xff]
    %v3386 = vld [vmem:[#allocation3 + $0xb0] sm:$0xff]
    %v3387 = vld [vmem:[#allocation3 + $0xb8] sm:$0xff]
    %v3388 = vld [vmem:[#allocation3 + $0xc0] sm:$0xff]
    %v3389 = vld [vmem:[#allocation3 + $0xc8] sm:$0xff]
    %v3390 = vld [vmem:[#allocation3 + $0xd0] sm:$0xff]
    %v3391 = vld [vmem:[#allocation3 + $0xd8] sm:$0xff]
    %v3392 = vld [vmem:[#allocation3 + $0xe0] sm:$0xff]
    %v3393 = vld [vmem:[#allocation3 + $0xe8] sm:$0xff]
    %v3394 = vld [vmem:[#allocation3 + $0xf0] sm:$0xff]
    %v3395 = vld [vmem:[#allocation3 + $0xf8] sm:$0xff]
    %v3396 = vld [vmem:[#allocation3 + $0x100] sm:$0xff]
    %v3397 = vld [vmem:[#allocation3 + $0x108] sm:$0xff]
    %v3398 = vld [vmem:[#allocation3 + $0x110] sm:$0xff]
    %v3399 = vld [vmem:[#allocation3 + $0x118] sm:$0xff]
    %v3400 = vld [vmem:[#allocation3 + $0x120] sm:$0xff]
    %v3401 = vld [vmem:[#allocation3 + $0x128] sm:$0xff]
    %v3402 = vld [vmem:[#allocation3 + $0x130] sm:$0xff]
    %v3403 = vld [vmem:[#allocation3 + $0x138] sm:$0xff]
    %v3404 = vld [vmem:[#allocation3 + $0x140] sm:$0xff]
    %v3405 = vld [vmem:[#allocation3 + $0x148] sm:$0xff]
    %v3406 = vld [vmem:[#allocation3 + $0x150] sm:$0xff]
    %v3407 = vld [vmem:[#allocation3 + $0x158] sm:$0xff]
    %v3408 = vld [vmem:[#allocation3 + $0x160] sm:$0xff]
    %v3409 = vld [vmem:[#allocation3 + $0x168] sm:$0xff]
    %v3410 = vld [vmem:[#allocation3 + $0x170] sm:$0xff]
    %v3411 = vld [vmem:[#allocation3 + $0x178] sm:$0xff]
    %v3412 = vld [vmem:[#allocation3 + $0x180] sm:$0xff]
    %v3413 = vld [vmem:[#allocation3 + $0x188] sm:$0xff]
    %v3414 = vld [vmem:[#allocation3 + $0x190] sm:$0xff]
    %v3415 = vld [vmem:[#allocation3 + $0x198] sm:$0xff]
    %v3416 = vld [vmem:[#allocation3 + $0x1a0] sm:$0xff]
    %v3417 = vld [vmem:[#allocation3 + $0x1a8] sm:$0xff]
    %v3418 = vld [vmem:[#allocation3 + $0x1b0] sm:$0xff]
    %v3419 = vld [vmem:[#allocation3 + $0x1b8] sm:$0xff]
    %v3420 = vld [vmem:[#allocation3 + $0x1c0] sm:$0xff]
    %v3421 = vld [vmem:[#allocation3 + $0x1c8] sm:$0xff]
    %v3422 = vld [vmem:[#allocation3 + $0x1d0] sm:$0xff]
    %v3423 = vld [vmem:[#allocation3 + $0x1d8] sm:$0xff]
    %v3424 = vld [vmem:[#allocation3 + $0x1e0] sm:$0xff]
    %v3425 = vld [vmem:[#allocation3 + $0x1e8] sm:$0xff]
    %v3426 = vld [vmem:[#allocation3 + $0x1f0] sm:$0xff]
    %v3427 = vld [vmem:[#allocation3 + $0x1f8] sm:$0xff]
    %v3428 = vpack.c.bf16 %v3358, %v3358
    %v3429 = vpack.c.bf16 %v3359, %v3359
    %v3430 = vld [vmem:[#allocation23] sm:$0xf]
    %v3432 = vlaneseq
    %v3433 = vshrl.u32 %v3432, 7
    %v3434 = vsub.s32 0, %v3433
    %v3435 = vrot.slane %v3430, %v3434
    %v3436 = vlaneseq
    %v3437 = vshrl.u32 %v3436, 7
    %v3438 = vsub.s32 1, %v3437
    %v3439 = vrot.slane %v3430, %v3438
    %v3440 = vlaneseq
    %v3441 = vshrl.u32 %v3440, 7
    %v3442 = vsub.s32 2, %v3441
    %v3443 = vrot.slane %v3430, %v3442
    %v3444 = vlaneseq
    %v3445 = vshrl.u32 %v3444, 7
    %v3446 = vsub.s32 3, %v3445
    %v3447 = vrot.slane %v3430, %v3446
    %3452 = vmatprep.subr.bf16.mxu0 %v3365
    %3453 = vmatpush1.bf16.msra.mxu0 %v3364
    %3454 = vmatprep.subr.bf16.mxu0 %v3369
    %3455 = vmatpush1.bf16.msra.mxu0 %v3368
    %3456 = vmatprep.subr.bf16.mxu0 %v3373
    %3457 = vmatpush1.bf16.msra.mxu0 %v3372
    %3458 = vmatprep.subr.bf16.mxu0 %v3377
    %3459 = vmatpush1.bf16.msra.mxu0 %v3376
    %3460 = vmatprep.subr.bf16.mxu0 %v3381
    %3461 = vmatpush1.bf16.msra.mxu0 %v3380
    %3462 = vmatprep.subr.bf16.mxu0 %v3385
    %3463 = vmatpush1.bf16.msra.mxu0 %v3384
    %3464 = vmatprep.subr.bf16.mxu0 %v3389
    %3465 = vmatpush1.bf16.msra.mxu0 %v3388
    %3466 = vmatprep.subr.bf16.mxu0 %v3393
    %3467 = vmatpush1.bf16.msra.mxu0 %v3392
    %3468 = vmatprep.subr.bf16.mxu0 %v3397
    %3469 = vmatpush1.bf16.msra.mxu0 %v3396
    %3470 = vmatprep.subr.bf16.mxu0 %v3401
    %3471 = vmatpush1.bf16.msra.mxu0 %v3400
    %3472 = vmatprep.subr.bf16.mxu0 %v3405
    %3473 = vmatpush1.bf16.msra.mxu0 %v3404
    %3474 = vmatprep.subr.bf16.mxu0 %v3409
    %3475 = vmatpush1.bf16.msra.mxu0 %v3408
    %3476 = vmatprep.subr.bf16.mxu0 %v3413
    %3477 = vmatpush1.bf16.msra.mxu0 %v3412
    %3478 = vmatprep.subr.bf16.mxu0 %v3417
    %3479 = vmatpush1.bf16.msra.mxu0 %v3416
    %3480 = vmatprep.subr.bf16.mxu0 %v3421
    %3481 = vmatpush1.bf16.msra.mxu0 %v3420
    %3482 = vmatprep.subr.bf16.mxu0 %v3425
    %3483 = vmatpush1.bf16.msra.mxu0 %v3424
    %3484 = vmatprep.mubr.bf16.mxu0 %v3429
    %3485 = vmatmul.mubr.bf16.gmra.mrb[0].mxu0 %v3428
    %v3486 = vpop.f32.mrb[0].mxu0
    %v3487 = vadd.f32 %v3435, %v3486
    %v3488 = vpop.f32.mrb[0].mxu0
    %v3489 = vadd.f32 %v3439, %v3488
    %v3490 = vpop.f32.mrb[0].mxu0
    %v3491 = vpop.f32.mrb[0].mxu0
    %3492 = vdwg.mxu0
    %3493 = vmatprep.subr.bf16.mxu0 %v3367
    %3494 = vmatpush1.bf16.msra.mxu0 %v3366
    %3495 = vmatprep.subr.bf16.mxu0 %v3371
    %3496 = vmatpush1.bf16.msra.mxu0 %v3370
    %3497 = vmatprep.subr.bf16.mxu0 %v3375
    %3498 = vmatpush1.bf16.msra.mxu0 %v3374
    %3499 = vmatprep.subr.bf16.mxu0 %v3379
    %3500 = vmatpush1.bf16.msra.mxu0 %v3378
    %3501 = vmatprep.subr.bf16.mxu0 %v3383
    %3502 = vmatpush1.bf16.msra.mxu0 %v3382
    %3503 = vmatprep.subr.bf16.mxu0 %v3387
    %3504 = vmatpush1.bf16.msra.mxu0 %v3386
    %3505 = vmatprep.subr.bf16.mxu0 %v3391
    %3506 = vmatpush1.bf16.msra.mxu0 %v3390
    %3507 = vmatprep.subr.bf16.mxu0 %v3395
    %3508 = vmatpush1.bf16.msra.mxu0 %v3394
    %3509 = vmatprep.subr.bf16.mxu0 %v3399
    %3510 = vmatpush1.bf16.msra.mxu0 %v3398
    %3511 = vmatprep.subr.bf16.mxu0 %v3403
    %3512 = vmatpush1.bf16.msra.mxu0 %v3402
    %3513 = vmatprep.subr.bf16.mxu0 %v3407
    %3514 = vmatpush1.bf16.msra.mxu0 %v3406
    %3515 = vmatprep.subr.bf16.mxu0 %v3411
    %3516 = vmatpush1.bf16.msra.mxu0 %v3410
    %3517 = vmatprep.subr.bf16.mxu0 %v3415
    %3518 = vmatpush1.bf16.msra.mxu0 %v3414
    %3519 = vmatprep.subr.bf16.mxu0 %v3419
    %3520 = vmatpush1.bf16.msra.mxu0 %v3418
    %3521 = vmatprep.subr.bf16.mxu0 %v3423
    %3522 = vmatpush1.bf16.msra.mxu0 %v3422
    %3523 = vmatprep.subr.bf16.mxu0 %v3427
    %3524 = vmatpush1.bf16.msra.mxu0 %v3426
    %3525 = vmatprep.mubr.bf16.mxu0 %v3429
    %3526 = vmatmul.mubr.bf16.gmra.mrb[0].mxu0 %v3428
    %v3527 = vpop.f32.mrb[0].mxu0
    %v3528 = vadd.f32 %v3443, %v3527
    %v3529 = vpop.f32.mrb[0].mxu0
    %v3530 = vadd.f32 %v3447, %v3529
    %v3531 = vpop.f32.mrb[0].mxu0
    %v3532 = vpop.f32.mrb[0].mxu0
    %3533 = vdwg.mxu0
    %v3534 = vsel %vm1907, %v3487, 0.0
    %v3535 = vrot.slane %v3534, 4
    %v3536 = vadd.f32 %v3534, %v3535
    %v3537 = vrot.slane %v3536, 2
    %v3538 = vadd.f32 %v3536, %v3537
    %v3539 = vrot.slane %v3538, 1
    %v3540 = vadd.f32 %v3538, %v3539
    %v3541 = vsel %vm1907, %v3489, 0.0
    %v3542 = vrot.slane %v3541, 4
    %v3543 = vadd.f32 %v3541, %v3542
    %v3544 = vrot.slane %v3543, 2
    %v3545 = vadd.f32 %v3543, %v3544
    %v3546 = vrot.slane %v3545, 1
    %v3547 = vadd.f32 %v3545, %v3546
    %v3548 = vsel %vm1907, %v3528, 0.0
    %v3549 = vrot.slane %v3548, 4
    %v3550 = vadd.f32 %v3548, %v3549
    %v3551 = vrot.slane %v3550, 2
    %v3552 = vadd.f32 %v3550, %v3551
    %v3553 = vrot.slane %v3552, 1
    %v3554 = vadd.f32 %v3552, %v3553
    %v3555 = vsel %vm1907, %v3530, 0.0
    %v3556 = vrot.slane %v3555, 4
    %v3557 = vadd.f32 %v3555, %v3556
    %v3558 = vrot.slane %v3557, 2
    %v3559 = vadd.f32 %v3557, %v3558
    %v3560 = vrot.slane %v3559, 1
    %v3561 = vadd.f32 %v3559, %v3560
    %v3562 = vmul.f32 %v3540, %v1936
    %v3563 = vmul.f32 %v3547, %v1936
    %v3564 = vmul.f32 %v3554, %v1936
    %v3565 = vmul.f32 %v3561, %v1936
    %v3566 = vmul.f32 %v3487, %v3487
    %v3567 = vmul.f32 %v3489, %v3489
    %v3568 = vmul.f32 %v3528, %v3528
    %v3569 = vmul.f32 %v3530, %v3530
    %v3570 = vsel %vm1907, %v3566, 0.0
    %v3571 = vrot.slane %v3570, 4
    %v3572 = vadd.f32 %v3570, %v3571
    %v3573 = vrot.slane %v3572, 2
    %v3574 = vadd.f32 %v3572, %v3573
    %v3575 = vrot.slane %v3574, 1
    %v3576 = vadd.f32 %v3574, %v3575
    %v3577 = vsel %vm1907, %v3567, 0.0
    %v3578 = vrot.slane %v3577, 4
    %v3579 = vadd.f32 %v3577, %v3578
    %v3580 = vrot.slane %v3579, 2
    %v3581 = vadd.f32 %v3579, %v3580
    %v3582 = vrot.slane %v3581, 1
    %v3583 = vadd.f32 %v3581, %v3582
    %v3584 = vsel %vm1907, %v3568, 0.0
    %v3585 = vrot.slane %v3584, 4
    %v3586 = vadd.f32 %v3584, %v3585
    %v3587 = vrot.slane %v3586, 2
    %v3588 = vadd.f32 %v3586, %v3587
    %v3589 = vrot.slane %v3588, 1
    %v3590 = vadd.f32 %v3588, %v3589
    %v3591 = vsel %vm1907, %v3569, 0.0
    %v3592 = vrot.slane %v3591, 4
    %v3593 = vadd.f32 %v3591, %v3592
    %v3594 = vrot.slane %v3593, 2
    %v3595 = vadd.f32 %v3593, %v3594
    %v3596 = vrot.slane %v3595, 1
    %v3597 = vadd.f32 %v3595, %v3596
    %v3598 = vmul.f32 %v3576, %v1936
    %v3599 = vmul.f32 %v3583, %v1936
    %v3600 = vmul.f32 %v3590, %v1936
    %v3601 = vmul.f32 %v3597, %v1936
    %v3602 = vsel %vm1979, %v3562, %v3598
    %v3603 = vsel %vm1979, %v3563, %v3599
    %v3604 = vsel %vm1979, %v3564, %v3600
    %v3605 = vsel %vm1979, %v3565, %v3601
    %v3606 = vld [vmem:[%s20] sm:$0xff]
    %v3607 = vld [vmem:[%s20 + $0x8] sm:$0xff]
    %v3608 = vld [vmem:[%s20 + $0x10] sm:$0xff]
    %v3609 = vld [vmem:[%s20 + $0x18] sm:$0xff]
    %v3610 = vld [vmem:[%s20 + $0x20] sm:$0xff]
    %v3611 = vld [vmem:[%s20 + $0x28] sm:$0xff]
    %v3612 = vld [vmem:[%s20 + $0x30] sm:$0xff]
    %v3613 = vld [vmem:[%s20 + $0x38] sm:$0xff]
    %v3614 = vld [vmem:[%s20 + $0x40] sm:$0xff]
    %v3615 = vld [vmem:[%s20 + $0x48] sm:$0xff]
    %v3616 = vld [vmem:[%s20 + $0x50] sm:$0xff]
    %v3617 = vld [vmem:[%s20 + $0x58] sm:$0xff]
    %v3618 = vld [vmem:[%s20 + $0x60] sm:$0xff]
    %v3619 = vld [vmem:[%s20 + $0x68] sm:$0xff]
    %v3620 = vld [vmem:[%s20 + $0x70] sm:$0xff]
    %v3621 = vld [vmem:[%s20 + $0x78] sm:$0xff]
    %v3622 = vld [vmem:[%s20 + $0x80] sm:$0xff]
    %v3623 = vld [vmem:[%s20 + $0x88] sm:$0xff]
    %v3624 = vld [vmem:[%s20 + $0x90] sm:$0xff]
    %v3625 = vld [vmem:[%s20 + $0x98] sm:$0xff]
    %v3626 = vld [vmem:[%s20 + $0xa0] sm:$0xff]
    %v3627 = vld [vmem:[%s20 + $0xa8] sm:$0xff]
    %v3628 = vld [vmem:[%s20 + $0xb0] sm:$0xff]
    %v3629 = vld [vmem:[%s20 + $0xb8] sm:$0xff]
    %v3630 = vld [vmem:[%s20 + $0xc0] sm:$0xff]
    %v3631 = vld [vmem:[%s20 + $0xc8] sm:$0xff]
    %v3632 = vld [vmem:[%s20 + $0xd0] sm:$0xff]
    %v3633 = vld [vmem:[%s20 + $0xd8] sm:$0xff]
    %v3634 = vld [vmem:[%s20 + $0xe0] sm:$0xff]
    %v3635 = vld [vmem:[%s20 + $0xe8] sm:$0xff]
    %v3636 = vld [vmem:[%s20 + $0xf0] sm:$0xff]
    %v3637 = vld [vmem:[%s20 + $0xf8] sm:$0xff]
    %v3638 = vld [vmem:[%s20 + $0x100] sm:$0xff]
    %v3639 = vld [vmem:[%s20 + $0x108] sm:$0xff]
    %v3640 = vld [vmem:[%s20 + $0x110] sm:$0xff]
    %v3641 = vld [vmem:[%s20 + $0x118] sm:$0xff]
    %v3642 = vld [vmem:[%s20 + $0x120] sm:$0xff]
    %v3643 = vld [vmem:[%s20 + $0x128] sm:$0xff]
    %v3644 = vld [vmem:[%s20 + $0x130] sm:$0xff]
    %v3645 = vld [vmem:[%s20 + $0x138] sm:$0xff]
    %v3646 = vld [vmem:[%s20 + $0x140] sm:$0xff]
    %v3647 = vld [vmem:[%s20 + $0x148] sm:$0xff]
    %v3648 = vld [vmem:[%s20 + $0x150] sm:$0xff]
    %v3649 = vld [vmem:[%s20 + $0x158] sm:$0xff]
    %v3650 = vld [vmem:[%s20 + $0x160] sm:$0xff]
    %v3651 = vld [vmem:[%s20 + $0x168] sm:$0xff]
    %v3652 = vld [vmem:[%s20 + $0x170] sm:$0xff]
    %v3653 = vld [vmem:[%s20 + $0x178] sm:$0xff]
    %v3654 = vld [vmem:[%s20 + $0x180] sm:$0xff]
    %v3655 = vld [vmem:[%s20 + $0x188] sm:$0xff]
    %v3656 = vld [vmem:[%s20 + $0x190] sm:$0xff]
    %v3657 = vld [vmem:[%s20 + $0x198] sm:$0xff]
    %v3658 = vld [vmem:[%s20 + $0x1a0] sm:$0xff]
    %v3659 = vld [vmem:[%s20 + $0x1a8] sm:$0xff]
    %v3660 = vld [vmem:[%s20 + $0x1b0] sm:$0xff]
    %v3661 = vld [vmem:[%s20 + $0x1b8] sm:$0xff]
    %v3662 = vld [vmem:[%s20 + $0x1c0] sm:$0xff]
    %v3663 = vld [vmem:[%s20 + $0x1c8] sm:$0xff]
    %v3664 = vld [vmem:[%s20 + $0x1d0] sm:$0xff]
    %v3665 = vld [vmem:[%s20 + $0x1d8] sm:$0xff]
    %v3666 = vld [vmem:[%s20 + $0x1e0] sm:$0xff]
    %v3667 = vld [vmem:[%s20 + $0x1e8] sm:$0xff]
    %v3668 = vld [vmem:[%s20 + $0x1f0] sm:$0xff]
    %v3669 = vld [vmem:[%s20 + $0x1f8] sm:$0xff]
    %3670 = vmatprep.subr.mxu0 0.0
    %3671 = vmatpush1.msra.mxu0 %v3606
    %3672 = vmatprep.subr.mxu0 0.0
    %3673 = vmatpush1.msra.mxu0 %v3607
    %3674 = vmatprep.subr.mxu0 0.0
    %3675 = vmatpush1.msra.mxu0 %v3608
    %3676 = vmatprep.subr.mxu0 0.0
    %3677 = vmatpush1.msra.mxu0 %v3609
    %3678 = vmatprep.subr.mxu0 0.0
    %3679 = vmatpush1.msra.mxu0 %v3610
    %3680 = vmatprep.subr.mxu0 0.0
    %3681 = vmatpush1.msra.mxu0 %v3611
    %3682 = vmatprep.subr.mxu0 0.0
    %3683 = vmatpush1.msra.mxu0 %v3612
    %3684 = vmatprep.subr.mxu0 0.0
    %3685 = vmatpush1.msra.mxu0 %v3613
    %3686 = vmatprep.subr.mxu0 0.0
    %3687 = vmatpush1.msra.mxu0 %v3614
    %3688 = vmatprep.subr.mxu0 0.0
    %3689 = vmatpush1.msra.mxu0 %v3615
    %3690 = vmatprep.subr.mxu0 0.0
    %3691 = vmatpush1.msra.mxu0 %v3616
    %3692 = vmatprep.subr.mxu0 0.0
    %3693 = vmatpush1.msra.mxu0 %v3617
    %3694 = vmatprep.subr.mxu0 0.0
    %3695 = vmatpush1.msra.mxu0 %v3618
    %3696 = vmatprep.subr.mxu0 0.0
    %3697 = vmatpush1.msra.mxu0 %v3619
    %3698 = vmatprep.subr.mxu0 0.0
    %3699 = vmatpush1.msra.mxu0 %v3620
    %3700 = vmatprep.subr.mxu0 0.0
    %3701 = vmatpush1.msra.mxu0 %v3621
    %3702 = vmatprep.subr.mxu0 0.0
    %3703 = vmatpush1.msra.mxu0 %v3622
    %3704 = vmatprep.subr.mxu0 0.0
    %3705 = vmatpush1.msra.mxu0 %v3623
    %3706 = vmatprep.subr.mxu0 0.0
    %3707 = vmatpush1.msra.mxu0 %v3624
    %3708 = vmatprep.subr.mxu0 0.0
    %3709 = vmatpush1.msra.mxu0 %v3625
    %3710 = vmatprep.subr.mxu0 0.0
    %3711 = vmatpush1.msra.mxu0 %v3626
    %3712 = vmatprep.subr.mxu0 0.0
    %3713 = vmatpush1.msra.mxu0 %v3627
    %3714 = vmatprep.subr.mxu0 0.0
    %3715 = vmatpush1.msra.mxu0 %v3628
    %3716 = vmatprep.subr.mxu0 0.0
    %3717 = vmatpush1.msra.mxu0 %v3629
    %3718 = vmatprep.subr.mxu0 0.0
    %3719 = vmatpush1.msra.mxu0 %v3630
    %3720 = vmatprep.subr.mxu0 0.0
    %3721 = vmatpush1.msra.mxu0 %v3631
    %3722 = vmatprep.subr.mxu0 0.0
    %3723 = vmatpush1.msra.mxu0 %v3632
    %3724 = vmatprep.subr.mxu0 0.0
    %3725 = vmatpush1.msra.mxu0 %v3633
    %3726 = vmatprep.subr.mxu0 0.0
    %3727 = vmatpush1.msra.mxu0 %v3634
    %3728 = vmatprep.subr.mxu0 0.0
    %3729 = vmatpush1.msra.mxu0 %v3635
    %3730 = vmatprep.subr.mxu0 0.0
    %3731 = vmatpush1.msra.mxu0 %v3636
    %3732 = vmatprep.subr.mxu0 0.0
    %3733 = vmatpush1.msra.mxu0 %v3637
    %3734 = vmatprep.mubr.f32.mxu0 %v3603
    %3735 = vmatmul.mubr.f32.gmra.mrb[0].mxu0 %v3602
    %v3736 = vpop.f32.mrb[0].mxu0
    %v3737 = vadd.f32 0.0, %v3736
    %v3738 = vpop.f32.mrb[0].mxu0
    %3739 = vdwg.mxu0
    %3740 = vmatprep.subr.mxu0 0.0
    %3741 = vmatpush1.msra.mxu0 %v3638
    %3742 = vmatprep.subr.mxu0 0.0
    %3743 = vmatpush1.msra.mxu0 %v3639
    %3744 = vmatprep.subr.mxu0 0.0
    %3745 = vmatpush1.msra.mxu0 %v3640
    %3746 = vmatprep.subr.mxu0 0.0
    %3747 = vmatpush1.msra.mxu0 %v3641
    %3748 = vmatprep.subr.mxu0 0.0
    %3749 = vmatpush1.msra.mxu0 %v3642
    %3750 = vmatprep.subr.mxu0 0.0
    %3751 = vmatpush1.msra.mxu0 %v3643
    %3752 = vmatprep.subr.mxu0 0.0
    %3753 = vmatpush1.msra.mxu0 %v3644
    %3754 = vmatprep.subr.mxu0 0.0
    %3755 = vmatpush1.msra.mxu0 %v3645
    %3756 = vmatprep.subr.mxu0 0.0
    %3757 = vmatpush1.msra.mxu0 %v3646
    %3758 = vmatprep.subr.mxu0 0.0
    %3759 = vmatpush1.msra.mxu0 %v3647
    %3760 = vmatprep.subr.mxu0 0.0
    %3761 = vmatpush1.msra.mxu0 %v3648
    %3762 = vmatprep.subr.mxu0 0.0
    %3763 = vmatpush1.msra.mxu0 %v3649
    %3764 = vmatprep.subr.mxu0 0.0
    %3765 = vmatpush1.msra.mxu0 %v3650
    %3766 = vmatprep.subr.mxu0 0.0
    %3767 = vmatpush1.msra.mxu0 %v3651
    %3768 = vmatprep.subr.mxu0 0.0
    %3769 = vmatpush1.msra.mxu0 %v3652
    %3770 = vmatprep.subr.mxu0 0.0
    %3771 = vmatpush1.msra.mxu0 %v3653
    %3772 = vmatprep.subr.mxu0 0.0
    %3773 = vmatpush1.msra.mxu0 %v3654
    %3774 = vmatprep.subr.mxu0 0.0
    %3775 = vmatpush1.msra.mxu0 %v3655
    %3776 = vmatprep.subr.mxu0 0.0
    %3777 = vmatpush1.msra.mxu0 %v3656
    %3778 = vmatprep.subr.mxu0 0.0
    %3779 = vmatpush1.msra.mxu0 %v3657
    %3780 = vmatprep.subr.mxu0 0.0
    %3781 = vmatpush1.msra.mxu0 %v3658
    %3782 = vmatprep.subr.mxu0 0.0
    %3783 = vmatpush1.msra.mxu0 %v3659
    %3784 = vmatprep.subr.mxu0 0.0
    %3785 = vmatpush1.msra.mxu0 %v3660
    %3786 = vmatprep.subr.mxu0 0.0
    %3787 = vmatpush1.msra.mxu0 %v3661
    %3788 = vmatprep.subr.mxu0 0.0
    %3789 = vmatpush1.msra.mxu0 %v3662
    %3790 = vmatprep.subr.mxu0 0.0
    %3791 = vmatpush1.msra.mxu0 %v3663
    %3792 = vmatprep.subr.mxu0 0.0
    %3793 = vmatpush1.msra.mxu0 %v3664
    %3794 = vmatprep.subr.mxu0 0.0
    %3795 = vmatpush1.msra.mxu0 %v3665
    %3796 = vmatprep.subr.mxu0 0.0
    %3797 = vmatpush1.msra.mxu0 %v3666
    %3798 = vmatprep.subr.mxu0 0.0
    %3799 = vmatpush1.msra.mxu0 %v3667
    %3800 = vmatprep.subr.mxu0 0.0
    %3801 = vmatpush1.msra.mxu0 %v3668
    %3802 = vmatprep.subr.mxu0 0.0
    %3803 = vmatpush1.msra.mxu0 %v3669
    %3804 = vmatprep.mubr.f32.mxu0 %v3605
    %3805 = vmatmul.mubr.f32.gmra.mrb[0].mxu0 %v3604
    %v3806 = vpop.f32.mrb[0].mxu0
    %v3807 = vadd.f32 %v3737, %v3806
    %v3808 = vpop.f32.mrb[0].mxu0
    %3809 = vdwg.mxu0
    %v3810 = vld [vmem:[%s21] sm:$0xff]
    %v3811 = vld [vmem:[%s21 + $0x8] sm:$0xff]
    %v3812 = vld [vmem:[%s21 + $0x10] sm:$0xff]
    %v3813 = vld [vmem:[%s21 + $0x18] sm:$0xff]
    %v3815 = vsel %vm2192, %v3807, 0
    %3817 = vmatprep.subr.mxu0 %v3811
    %3818 = vmatpush1.msra.mxu0 %v3810
    %3819 = vmatprep.subr.mxu0 0.0
    %3820 = vmatpush1.msra.mxu0 0.0
    %3821 = vmatprep.subr.mxu0 0.0
    %3822 = vmatpush1.msra.mxu0 0.0
    %3823 = vmatprep.subr.mxu0 0.0
    %3824 = vmatpush1.msra.mxu0 0.0
    %3825 = vmatprep.subr.mxu0 0.0
    %3826 = vmatpush1.msra.mxu0 0.0
    %3827 = vmatprep.subr.mxu0 0.0
    %3828 = vmatpush1.msra.mxu0 0.0
    %3829 = vmatprep.subr.mxu0 0.0
    %3830 = vmatpush1.msra.mxu0 0.0
    %3831 = vmatprep.subr.mxu0 0.0
    %3832 = vmatpush1.msra.mxu0 0.0
    %3833 = vmatprep.subr.mxu0 0.0
    %3834 = vmatpush1.msra.mxu0 0.0
    %3835 = vmatprep.subr.mxu0 0.0
    %3836 = vmatpush1.msra.mxu0 0.0
    %3837 = vmatprep.subr.mxu0 0.0
    %3838 = vmatpush1.msra.mxu0 0.0
    %3839 = vmatprep.subr.mxu0 0.0
    %3840 = vmatpush1.msra.mxu0 0.0
    %3841 = vmatprep.subr.mxu0 0.0
    %3842 = vmatpush1.msra.mxu0 0.0
    %3843 = vmatprep.subr.mxu0 0.0
    %3844 = vmatpush1.msra.mxu0 0.0
    %3845 = vmatprep.subr.mxu0 0.0
    %3846 = vmatpush1.msra.mxu0 0.0
    %3847 = vmatprep.subr.mxu0 0.0
    %3848 = vmatpush1.msra.mxu0 0.0
    %3849 = vmatprep.subr.mxu0 0.0
    %3850 = vmatpush1.msra.mxu0 0.0
    %3851 = vmatprep.subr.mxu0 0.0
    %3852 = vmatpush1.msra.mxu0 0.0
    %3853 = vmatprep.subr.mxu0 0.0
    %3854 = vmatpush1.msra.mxu0 0.0
    %3855 = vmatprep.subr.mxu0 0.0
    %3856 = vmatpush1.msra.mxu0 0.0
    %3857 = vmatprep.subr.mxu0 0.0
    %3858 = vmatpush1.msra.mxu0 0.0
    %3859 = vmatprep.subr.mxu0 0.0
    %3860 = vmatpush1.msra.mxu0 0.0
    %3861 = vmatprep.subr.mxu0 0.0
    %3862 = vmatpush1.msra.mxu0 0.0
    %3863 = vmatprep.subr.mxu0 0.0
    %3864 = vmatpush1.msra.mxu0 0.0
    %3865 = vmatprep.subr.mxu0 0.0
    %3866 = vmatpush1.msra.mxu0 0.0
    %3867 = vmatprep.subr.mxu0 0.0
    %3868 = vmatpush1.msra.mxu0 0.0
    %3869 = vmatprep.subr.mxu0 0.0
    %3870 = vmatpush1.msra.mxu0 0.0
    %3871 = vmatprep.subr.mxu0 0.0
    %3872 = vmatpush1.msra.mxu0 0.0
    %3873 = vmatprep.subr.mxu0 0.0
    %3874 = vmatpush1.msra.mxu0 0.0
    %3875 = vmatprep.subr.mxu0 0.0
    %3876 = vmatpush1.msra.mxu0 0.0
    %3877 = vmatprep.subr.mxu0 0.0
    %3878 = vmatpush1.msra.mxu0 0.0
    %3879 = vmatprep.subr.mxu0 0.0
    %3880 = vmatpush1.msra.mxu0 0.0
    %3881 = vmatprep.mubr.f32.mxu0 0.0
    %3882 = vmatmul.mubr.f32.gmra.mrb[0].mxu0 %v3815
    %v3883 = vpop.f32.mrb[0].mxu0
    %v3884 = vadd.f32 0.0, %v3883
    %v3885 = vpop.f32.mrb[0].mxu0
    %v3886 = vadd.f32 0.0, %v3885
    %3887 = vdwg.mxu0
    %3888 = vmatprep.subr.mxu0 %v3813
    %3889 = vmatpush1.msra.mxu0 %v3812
    %3890 = vmatprep.subr.mxu0 0.0
    %3891 = vmatpush1.msra.mxu0 0.0
    %3892 = vmatprep.subr.mxu0 0.0
    %3893 = vmatpush1.msra.mxu0 0.0
    %3894 = vmatprep.subr.mxu0 0.0
    %3895 = vmatpush1.msra.mxu0 0.0
    %3896 = vmatprep.subr.mxu0 0.0
    %3897 = vmatpush1.msra.mxu0 0.0
    %3898 = vmatprep.subr.mxu0 0.0
    %3899 = vmatpush1.msra.mxu0 0.0
    %3900 = vmatprep.subr.mxu0 0.0
    %3901 = vmatpush1.msra.mxu0 0.0
    %3902 = vmatprep.subr.mxu0 0.0
    %3903 = vmatpush1.msra.mxu0 0.0
    %3904 = vmatprep.subr.mxu0 0.0
    %3905 = vmatpush1.msra.mxu0 0.0
    %3906 = vmatprep.subr.mxu0 0.0
    %3907 = vmatpush1.msra.mxu0 0.0
    %3908 = vmatprep.subr.mxu0 0.0
    %3909 = vmatpush1.msra.mxu0 0.0
    %3910 = vmatprep.subr.mxu0 0.0
    %3911 = vmatpush1.msra.mxu0 0.0
    %3912 = vmatprep.subr.mxu0 0.0
    %3913 = vmatpush1.msra.mxu0 0.0
    %3914 = vmatprep.subr.mxu0 0.0
    %3915 = vmatpush1.msra.mxu0 0.0
    %3916 = vmatprep.subr.mxu0 0.0
    %3917 = vmatpush1.msra.mxu0 0.0
    %3918 = vmatprep.subr.mxu0 0.0
    %3919 = vmatpush1.msra.mxu0 0.0
    %3920 = vmatprep.subr.mxu0 0.0
    %3921 = vmatpush1.msra.mxu0 0.0
    %3922 = vmatprep.subr.mxu0 0.0
    %3923 = vmatpush1.msra.mxu0 0.0
    %3924 = vmatprep.subr.mxu0 0.0
    %3925 = vmatpush1.msra.mxu0 0.0
    %3926 = vmatprep.subr.mxu0 0.0
    %3927 = vmatpush1.msra.mxu0 0.0
    %3928 = vmatprep.subr.mxu0 0.0
    %3929 = vmatpush1.msra.mxu0 0.0
    %3930 = vmatprep.subr.mxu0 0.0
    %3931 = vmatpush1.msra.mxu0 0.0
    %3932 = vmatprep.subr.mxu0 0.0
    %3933 = vmatpush1.msra.mxu0 0.0
    %3934 = vmatprep.subr.mxu0 0.0
    %3935 = vmatpush1.msra.mxu0 0.0
    %3936 = vmatprep.subr.mxu0 0.0
    %3937 = vmatpush1.msra.mxu0 0.0
    %3938 = vmatprep.subr.mxu0 0.0
    %3939 = vmatpush1.msra.mxu0 0.0
    %3940 = vmatprep.subr.mxu0 0.0
    %3941 = vmatpush1.msra.mxu0 0.0
    %3942 = vmatprep.subr.mxu0 0.0
    %3943 = vmatpush1.msra.mxu0 0.0
    %3944 = vmatprep.subr.mxu0 0.0
    %3945 = vmatpush1.msra.mxu0 0.0
    %3946 = vmatprep.subr.mxu0 0.0
    %3947 = vmatpush1.msra.mxu0 0.0
    %3948 = vmatprep.subr.mxu0 0.0
    %3949 = vmatpush1.msra.mxu0 0.0
    %3950 = vmatprep.subr.mxu0 0.0
    %3951 = vmatpush1.msra.mxu0 0.0
    %3952 = vmatprep.mubr.f32.mxu0 0.0
    %3953 = vmatmul.mubr.f32.gmra.mrb[0].mxu0 %v3815
    %v3954 = vpop.f32.mrb[0].mxu0
    %v3955 = vadd.f32 0.0, %v3954
    %v3956 = vpop.f32.mrb[0].mxu0
    %v3957 = vadd.f32 0.0, %v3956
    %3958 = vdwg.mxu0
    %v3959 = vmul.f32 %v3884, %v3884
    %v3960 = vmul.f32 %v3886, %v3886
    %v3961 = vmul.f32 %v3955, %v3955
    %v3962 = vmul.f32 %v3957, %v3957
    %v3967 = vrot.slane %v3959, 7
    %v3968 = vrot.slane %v3960, 7
    %v3969 = vrot.slane %v3961, 7
    %v3970 = vrot.slane %v3962, 7
    %v3975 = vsub.f32 %v3884, %v3967
    %v3976 = vsub.f32 %v3886, %v3968
    %v3977 = vsub.f32 %v3955, %v3969
    %v3978 = vsub.f32 %v3957, %v3970
    %v3979 = vlaneseq
    %v3980 = vshrl.u32 %v3979, 7
    %v3981 = vsub.s32 0, %v3980
    %v3982 = vrot.slane %v3884, %v3981
    %v3983 = vlaneseq
    %v3984 = vshrl.u32 %v3983, 7
    %v3985 = vsub.s32 0, %v3984
    %v3986 = vrot.slane %v3886, %v3985
    %v3987 = vlaneseq
    %v3988 = vshrl.u32 %v3987, 7
    %v3989 = vsub.s32 0, %v3988
    %v3990 = vrot.slane %v3955, %v3989
    %v3991 = vlaneseq
    %v3992 = vshrl.u32 %v3991, 7
    %v3993 = vsub.s32 0, %v3992
    %v3994 = vrot.slane %v3957, %v3993
    %v3995 = vsub.f32 %v3487, %v3982
    %v3996 = vsub.f32 %v3489, %v3986
    %v3997 = vsub.f32 %v3528, %v3990
    %v3998 = vsub.f32 %v3530, %v3994
    %v3999 = vadd.f32 %v3975, 1e-05
    %v4000 = vadd.f32 %v3976, 1e-05
    %v4001 = vadd.f32 %v3977, 1e-05
    %v4002 = vadd.f32 %v3978, 1e-05
    %v4003 = vrsqrt.pop %v3999
    %v4004 = vrsqrt.pop %v4000
    %v4005 = vrsqrt.pop %v4001
    %v4006 = vrsqrt.pop %v4002
    %v4007 = vlaneseq
    %v4008 = vshrl.u32 %v4007, 7
    %v4009 = vsub.s32 1, %v4008
    %v4010 = vrot.slane %v4003, %v4009
    %v4011 = vlaneseq
    %v4012 = vshrl.u32 %v4011, 7
    %v4013 = vsub.s32 1, %v4012
    %v4014 = vrot.slane %v4004, %v4013
    %v4015 = vlaneseq
    %v4016 = vshrl.u32 %v4015, 7
    %v4017 = vsub.s32 1, %v4016
    %v4018 = vrot.slane %v4005, %v4017
    %v4019 = vlaneseq
    %v4020 = vshrl.u32 %v4019, 7
    %v4021 = vsub.s32 1, %v4020
    %v4022 = vrot.slane %v4006, %v4021
    %v4023 = vmul.f32 %v3995, %v4010
    %v4024 = vmul.f32 %v3996, %v4014
    %v4025 = vmul.f32 %v3997, %v4018
    %v4026 = vmul.f32 %v3998, %v4022
    %v4027 = vtanh.pop %v4023
    %v4028 = vtanh.pop %v4024
    %v4029 = vtanh.pop %v4025
    %v4030 = vtanh.pop %v4026
    %s4031 = sshll.u32 %s2419, 4
    %4032 = dma.done %s1369, %s4031
    %v4033 = vld [vmem:[#allocation4] sm:$0xff]
    %v4034 = vld [vmem:[#allocation4 + $0x8] sm:$0xff]
    %v4035 = vld [vmem:[#allocation4 + $0x10] sm:$0xff]
    %v4036 = vld [vmem:[#allocation4 + $0x18] sm:$0xff]
    %v4037 = vld [vmem:[#allocation4 + $0x20] sm:$0xff]
    %v4038 = vld [vmem:[#allocation4 + $0x28] sm:$0xff]
    %v4039 = vld [vmem:[#allocation4 + $0x30] sm:$0xff]
    %v4040 = vld [vmem:[#allocation4 + $0x38] sm:$0xff]
    %v4041 = vld [vmem:[#allocation4 + $0x40] sm:$0xff]
    %v4042 = vld [vmem:[#allocation4 + $0x48] sm:$0xff]
    %v4043 = vld [vmem:[#allocation4 + $0x50] sm:$0xff]
    %v4044 = vld [vmem:[#allocation4 + $0x58] sm:$0xff]
    %v4045 = vld [vmem:[#allocation4 + $0x60] sm:$0xff]
    %v4046 = vld [vmem:[#allocation4 + $0x68] sm:$0xff]
    %v4047 = vld [vmem:[#allocation4 + $0x70] sm:$0xff]
    %v4048 = vld [vmem:[#allocation4 + $0x78] sm:$0xff]
    %v4049 = vld [vmem:[#allocation4 + $0x80] sm:$0xff]
    %v4050 = vld [vmem:[#allocation4 + $0x88] sm:$0xff]
    %v4051 = vld [vmem:[#allocation4 + $0x90] sm:$0xff]
    %v4052 = vld [vmem:[#allocation4 + $0x98] sm:$0xff]
    %v4053 = vld [vmem:[#allocation4 + $0xa0] sm:$0xff]
    %v4054 = vld [vmem:[#allocation4 + $0xa8] sm:$0xff]
    %v4055 = vld [vmem:[#allocation4 + $0xb0] sm:$0xff]
    %v4056 = vld [vmem:[#allocation4 + $0xb8] sm:$0xff]
    %v4057 = vld [vmem:[#allocation4 + $0xc0] sm:$0xff]
    %v4058 = vld [vmem:[#allocation4 + $0xc8] sm:$0xff]
    %v4059 = vld [vmem:[#allocation4 + $0xd0] sm:$0xff]
    %v4060 = vld [vmem:[#allocation4 + $0xd8] sm:$0xff]
    %v4061 = vld [vmem:[#allocation4 + $0xe0] sm:$0xff]
    %v4062 = vld [vmem:[#allocation4 + $0xe8] sm:$0xff]
    %v4063 = vld [vmem:[#allocation4 + $0xf0] sm:$0xff]
    %v4064 = vld [vmem:[#allocation4 + $0xf8] sm:$0xff]
    %v4065 = vld [vmem:[#allocation4 + $0x100] sm:$0xff]
    %v4066 = vld [vmem:[#allocation4 + $0x108] sm:$0xff]
    %v4067 = vld [vmem:[#allocation4 + $0x110] sm:$0xff]
    %v4068 = vld [vmem:[#allocation4 + $0x118] sm:$0xff]
    %v4069 = vld [vmem:[#allocation4 + $0x120] sm:$0xff]
    %v4070 = vld [vmem:[#allocation4 + $0x128] sm:$0xff]
    %v4071 = vld [vmem:[#allocation4 + $0x130] sm:$0xff]
    %v4072 = vld [vmem:[#allocation4 + $0x138] sm:$0xff]
    %v4073 = vld [vmem:[#allocation4 + $0x140] sm:$0xff]
    %v4074 = vld [vmem:[#allocation4 + $0x148] sm:$0xff]
    %v4075 = vld [vmem:[#allocation4 + $0x150] sm:$0xff]
    %v4076 = vld [vmem:[#allocation4 + $0x158] sm:$0xff]
    %v4077 = vld [vmem:[#allocation4 + $0x160] sm:$0xff]
    %v4078 = vld [vmem:[#allocation4 + $0x168] sm:$0xff]
    %v4079 = vld [vmem:[#allocation4 + $0x170] sm:$0xff]
    %v4080 = vld [vmem:[#allocation4 + $0x178] sm:$0xff]
    %v4081 = vld [vmem:[#allocation4 + $0x180] sm:$0xff]
    %v4082 = vld [vmem:[#allocation4 + $0x188] sm:$0xff]
    %v4083 = vld [vmem:[#allocation4 + $0x190] sm:$0xff]
    %v4084 = vld [vmem:[#allocation4 + $0x198] sm:$0xff]
    %v4085 = vld [vmem:[#allocation4 + $0x1a0] sm:$0xff]
    %v4086 = vld [vmem:[#allocation4 + $0x1a8] sm:$0xff]
    %v4087 = vld [vmem:[#allocation4 + $0x1b0] sm:$0xff]
    %v4088 = vld [vmem:[#allocation4 + $0x1b8] sm:$0xff]
    %v4089 = vld [vmem:[#allocation4 + $0x1c0] sm:$0xff]
    %v4090 = vld [vmem:[#allocation4 + $0x1c8] sm:$0xff]
    %v4091 = vld [vmem:[#allocation4 + $0x1d0] sm:$0xff]
    %v4092 = vld [vmem:[#allocation4 + $0x1d8] sm:$0xff]
    %v4093 = vld [vmem:[#allocation4 + $0x1e0] sm:$0xff]
    %v4094 = vld [vmem:[#allocation4 + $0x1e8] sm:$0xff]
    %v4095 = vld [vmem:[#allocation4 + $0x1f0] sm:$0xff]
    %v4096 = vld [vmem:[#allocation4 + $0x1f8] sm:$0xff]
    %v4097 = vpack.c.bf16 %v4027, %v4027
    %v4098 = vpack.c.bf16 %v4028, %v4028
    %v4099 = vpack.c.bf16 %v4029, %v4029
    %v4100 = vpack.c.bf16 %v4030, %v4030
    %v4101 = vld [vmem:[#allocation25] sm:$0x3]
    %v4103 = vlaneseq
    %v4104 = vshrl.u32 %v4103, 7
    %v4105 = vsub.s32 0, %v4104
    %v4106 = vrot.slane %v4101, %v4105
    %v4107 = vlaneseq
    %v4108 = vshrl.u32 %v4107, 7
    %v4109 = vsub.s32 1, %v4108
    %v4110 = vrot.slane %v4101, %v4109
    %4113 = vmatprep.subr.bf16.mxu0 %v4034
    %4114 = vmatpush1.bf16.msra.mxu0 %v4033
    %4115 = vmatprep.subr.bf16.mxu0 %v4036
    %4116 = vmatpush1.bf16.msra.mxu0 %v4035
    %4117 = vmatprep.subr.bf16.mxu0 %v4038
    %4118 = vmatpush1.bf16.msra.mxu0 %v4037
    %4119 = vmatprep.subr.bf16.mxu0 %v4040
    %4120 = vmatpush1.bf16.msra.mxu0 %v4039
    %4121 = vmatprep.subr.bf16.mxu0 %v4042
    %4122 = vmatpush1.bf16.msra.mxu0 %v4041
    %4123 = vmatprep.subr.bf16.mxu0 %v4044
    %4124 = vmatpush1.bf16.msra.mxu0 %v4043
    %4125 = vmatprep.subr.bf16.mxu0 %v4046
    %4126 = vmatpush1.bf16.msra.mxu0 %v4045
    %4127 = vmatprep.subr.bf16.mxu0 %v4048
    %4128 = vmatpush1.bf16.msra.mxu0 %v4047
    %4129 = vmatprep.subr.bf16.mxu0 %v4050
    %4130 = vmatpush1.bf16.msra.mxu0 %v4049
    %4131 = vmatprep.subr.bf16.mxu0 %v4052
    %4132 = vmatpush1.bf16.msra.mxu0 %v4051
    %4133 = vmatprep.subr.bf16.mxu0 %v4054
    %4134 = vmatpush1.bf16.msra.mxu0 %v4053
    %4135 = vmatprep.subr.bf16.mxu0 %v4056
    %4136 = vmatpush1.bf16.msra.mxu0 %v4055
    %4137 = vmatprep.subr.bf16.mxu0 %v4058
    %4138 = vmatpush1.bf16.msra.mxu0 %v4057
    %4139 = vmatprep.subr.bf16.mxu0 %v4060
    %4140 = vmatpush1.bf16.msra.mxu0 %v4059
    %4141 = vmatprep.subr.bf16.mxu0 %v4062
    %4142 = vmatpush1.bf16.msra.mxu0 %v4061
    %4143 = vmatprep.subr.bf16.mxu0 %v4064
    %4144 = vmatpush1.bf16.msra.mxu0 %v4063
    %4145 = vmatprep.mubr.bf16.mxu0 %v4098
    %4146 = vmatmul.mubr.bf16.gmra.mrb[0].mxu0 %v4097
    %v4147 = vpop.f32.mrb[0].mxu0
    %v4148 = vadd.f32 %v4106, %v4147
    %v4149 = vpop.f32.mrb[0].mxu0
    %v4150 = vadd.f32 %v4110, %v4149
    %v4151 = vpop.f32.mrb[0].mxu0
    %v4152 = vpop.f32.mrb[0].mxu0
    %4153 = vdwg.mxu0
    %4154 = vmatprep.subr.bf16.mxu0 %v4066
    %4155 = vmatpush1.bf16.msra.mxu0 %v4065
    %4156 = vmatprep.subr.bf16.mxu0 %v4068
    %4157 = vmatpush1.bf16.msra.mxu0 %v4067
    %4158 = vmatprep.subr.bf16.mxu0 %v4070
    %4159 = vmatpush1.bf16.msra.mxu0 %v4069
    %4160 = vmatprep.subr.bf16.mxu0 %v4072
    %4161 = vmatpush1.bf16.msra.mxu0 %v4071
    %4162 = vmatprep.subr.bf16.mxu0 %v4074
    %4163 = vmatpush1.bf16.msra.mxu0 %v4073
    %4164 = vmatprep.subr.bf16.mxu0 %v4076
    %4165 = vmatpush1.bf16.msra.mxu0 %v4075
    %4166 = vmatprep.subr.bf16.mxu0 %v4078
    %4167 = vmatpush1.bf16.msra.mxu0 %v4077
    %4168 = vmatprep.subr.bf16.mxu0 %v4080
    %4169 = vmatpush1.bf16.msra.mxu0 %v4079
    %4170 = vmatprep.subr.bf16.mxu0 %v4082
    %4171 = vmatpush1.bf16.msra.mxu0 %v4081
    %4172 = vmatprep.subr.bf16.mxu0 %v4084
    %4173 = vmatpush1.bf16.msra.mxu0 %v4083
    %4174 = vmatprep.subr.bf16.mxu0 %v4086
    %4175 = vmatpush1.bf16.msra.mxu0 %v4085
    %4176 = vmatprep.subr.bf16.mxu0 %v4088
    %4177 = vmatpush1.bf16.msra.mxu0 %v4087
    %4178 = vmatprep.subr.bf16.mxu0 %v4090
    %4179 = vmatpush1.bf16.msra.mxu0 %v4089
    %4180 = vmatprep.subr.bf16.mxu0 %v4092
    %4181 = vmatpush1.bf16.msra.mxu0 %v4091
    %4182 = vmatprep.subr.bf16.mxu0 %v4094
    %4183 = vmatpush1.bf16.msra.mxu0 %v4093
    %4184 = vmatprep.subr.bf16.mxu0 %v4096
    %4185 = vmatpush1.bf16.msra.mxu0 %v4095
    %4186 = vmatprep.mubr.bf16.mxu0 %v4100
    %4187 = vmatmul.mubr.bf16.gmra.mrb[0].mxu0 %v4099
    %v4188 = vpop.f32.mrb[0].mxu0
    %v4189 = vadd.f32 %v4148, %v4188
    %v4190 = vpop.f32.mrb[0].mxu0
    %v4191 = vadd.f32 %v4150, %v4190
    %v4192 = vpop.f32.mrb[0].mxu0
    %v4193 = vpop.f32.mrb[0].mxu0
    %4194 = vdwg.mxu0
    %v4195 = vsel %vm1907, %v4189, 0.0
    %v4196 = vrot.slane %v4195, 4
    %v4197 = vadd.f32 %v4195, %v4196
    %v4198 = vrot.slane %v4197, 2
    %v4199 = vadd.f32 %v4197, %v4198
    %v4200 = vrot.slane %v4199, 1
    %v4201 = vadd.f32 %v4199, %v4200
    %v4202 = vsel %vm1907, %v4191, 0.0
    %v4203 = vrot.slane %v4202, 4
    %v4204 = vadd.f32 %v4202, %v4203
    %v4205 = vrot.slane %v4204, 2
    %v4206 = vadd.f32 %v4204, %v4205
    %v4207 = vrot.slane %v4206, 1
    %v4208 = vadd.f32 %v4206, %v4207
    %v4209 = vmul.f32 %v4201, %v1936
    %v4210 = vmul.f32 %v4208, %v1936
    %v4211 = vmul.f32 %v4189, %v4189
    %v4212 = vmul.f32 %v4191, %v4191
    %v4213 = vsel %vm1907, %v4211, 0.0
    %v4214 = vrot.slane %v4213, 4
    %v4215 = vadd.f32 %v4213, %v4214
    %v4216 = vrot.slane %v4215, 2
    %v4217 = vadd.f32 %v4215, %v4216
    %v4218 = vrot.slane %v4217, 1
    %v4219 = vadd.f32 %v4217, %v4218
    %v4220 = vsel %vm1907, %v4212, 0.0
    %v4221 = vrot.slane %v4220, 4
    %v4222 = vadd.f32 %v4220, %v4221
    %v4223 = vrot.slane %v4222, 2
    %v4224 = vadd.f32 %v4222, %v4223
    %v4225 = vrot.slane %v4224, 1
    %v4226 = vadd.f32 %v4224, %v4225
    %v4227 = vmul.f32 %v4219, %v1936
    %v4228 = vmul.f32 %v4226, %v1936
    %v4229 = vsel %vm1979, %v4209, %v4227
    %v4230 = vsel %vm1979, %v4210, %v4228
    %v4231 = vld [vmem:[%s24] sm:$0xff]
    %v4232 = vld [vmem:[%s24 + $0x8] sm:$0xff]
    %v4233 = vld [vmem:[%s24 + $0x10] sm:$0xff]
    %v4234 = vld [vmem:[%s24 + $0x18] sm:$0xff]
    %v4235 = vld [vmem:[%s24 + $0x20] sm:$0xff]
    %v4236 = vld [vmem:[%s24 + $0x28] sm:$0xff]
    %v4237 = vld [vmem:[%s24 + $0x30] sm:$0xff]
    %v4238 = vld [vmem:[%s24 + $0x38] sm:$0xff]
    %v4239 = vld [vmem:[%s24 + $0x40] sm:$0xff]
    %v4240 = vld [vmem:[%s24 + $0x48] sm:$0xff]
    %v4241 = vld [vmem:[%s24 + $0x50] sm:$0xff]
    %v4242 = vld [vmem:[%s24 + $0x58] sm:$0xff]
    %v4243 = vld [vmem:[%s24 + $0x60] sm:$0xff]
    %v4244 = vld [vmem:[%s24 + $0x68] sm:$0xff]
    %v4245 = vld [vmem:[%s24 + $0x70] sm:$0xff]
    %v4246 = vld [vmem:[%s24 + $0x78] sm:$0xff]
    %v4247 = vld [vmem:[%s24 + $0x80] sm:$0xff]
    %v4248 = vld [vmem:[%s24 + $0x88] sm:$0xff]
    %v4249 = vld [vmem:[%s24 + $0x90] sm:$0xff]
    %v4250 = vld [vmem:[%s24 + $0x98] sm:$0xff]
    %v4251 = vld [vmem:[%s24 + $0xa0] sm:$0xff]
    %v4252 = vld [vmem:[%s24 + $0xa8] sm:$0xff]
    %v4253 = vld [vmem:[%s24 + $0xb0] sm:$0xff]
    %v4254 = vld [vmem:[%s24 + $0xb8] sm:$0xff]
    %v4255 = vld [vmem:[%s24 + $0xc0] sm:$0xff]
    %v4256 = vld [vmem:[%s24 + $0xc8] sm:$0xff]
    %v4257 = vld [vmem:[%s24 + $0xd0] sm:$0xff]
    %v4258 = vld [vmem:[%s24 + $0xd8] sm:$0xff]
    %v4259 = vld [vmem:[%s24 + $0xe0] sm:$0xff]
    %v4260 = vld [vmem:[%s24 + $0xe8] sm:$0xff]
    %v4261 = vld [vmem:[%s24 + $0xf0] sm:$0xff]
    %v4262 = vld [vmem:[%s24 + $0xf8] sm:$0xff]
    %4263 = vmatprep.subr.mxu0 0.0
    %4264 = vmatpush1.msra.mxu0 %v4231
    %4265 = vmatprep.subr.mxu0 0.0
    %4266 = vmatpush1.msra.mxu0 %v4232
    %4267 = vmatprep.subr.mxu0 0.0
    %4268 = vmatpush1.msra.mxu0 %v4233
    %4269 = vmatprep.subr.mxu0 0.0
    %4270 = vmatpush1.msra.mxu0 %v4234
    %4271 = vmatprep.subr.mxu0 0.0
    %4272 = vmatpush1.msra.mxu0 %v4235
    %4273 = vmatprep.subr.mxu0 0.0
    %4274 = vmatpush1.msra.mxu0 %v4236
    %4275 = vmatprep.subr.mxu0 0.0
    %4276 = vmatpush1.msra.mxu0 %v4237
    %4277 = vmatprep.subr.mxu0 0.0
    %4278 = vmatpush1.msra.mxu0 %v4238
    %4279 = vmatprep.subr.mxu0 0.0
    %4280 = vmatpush1.msra.mxu0 %v4239
    %4281 = vmatprep.subr.mxu0 0.0
    %4282 = vmatpush1.msra.mxu0 %v4240
    %4283 = vmatprep.subr.mxu0 0.0
    %4284 = vmatpush1.msra.mxu0 %v4241
    %4285 = vmatprep.subr.mxu0 0.0
    %4286 = vmatpush1.msra.mxu0 %v4242
    %4287 = vmatprep.subr.mxu0 0.0
    %4288 = vmatpush1.msra.mxu0 %v4243
    %4289 = vmatprep.subr.mxu0 0.0
    %4290 = vmatpush1.msra.mxu0 %v4244
    %4291 = vmatprep.subr.mxu0 0.0
    %4292 = vmatpush1.msra.mxu0 %v4245
    %4293 = vmatprep.subr.mxu0 0.0
    %4294 = vmatpush1.msra.mxu0 %v4246
    %4295 = vmatprep.subr.mxu0 0.0
    %4296 = vmatpush1.msra.mxu0 %v4247
    %4297 = vmatprep.subr.mxu0 0.0
    %4298 = vmatpush1.msra.mxu0 %v4248
    %4299 = vmatprep.subr.mxu0 0.0
    %4300 = vmatpush1.msra.mxu0 %v4249
    %4301 = vmatprep.subr.mxu0 0.0
    %4302 = vmatpush1.msra.mxu0 %v4250
    %4303 = vmatprep.subr.mxu0 0.0
    %4304 = vmatpush1.msra.mxu0 %v4251
    %4305 = vmatprep.subr.mxu0 0.0
    %4306 = vmatpush1.msra.mxu0 %v4252
    %4307 = vmatprep.subr.mxu0 0.0
    %4308 = vmatpush1.msra.mxu0 %v4253
    %4309 = vmatprep.subr.mxu0 0.0
    %4310 = vmatpush1.msra.mxu0 %v4254
    %4311 = vmatprep.subr.mxu0 0.0
    %4312 = vmatpush1.msra.mxu0 %v4255
    %4313 = vmatprep.subr.mxu0 0.0
    %4314 = vmatpush1.msra.mxu0 %v4256
    %4315 = vmatprep.subr.mxu0 0.0
    %4316 = vmatpush1.msra.mxu0 %v4257
    %4317 = vmatprep.subr.mxu0 0.0
    %4318 = vmatpush1.msra.mxu0 %v4258
    %4319 = vmatprep.subr.mxu0 0.0
    %4320 = vmatpush1.msra.mxu0 %v4259
    %4321 = vmatprep.subr.mxu0 0.0
    %4322 = vmatpush1.msra.mxu0 %v4260
    %4323 = vmatprep.subr.mxu0 0.0
    %4324 = vmatpush1.msra.mxu0 %v4261
    %4325 = vmatprep.subr.mxu0 0.0
    %4326 = vmatpush1.msra.mxu0 %v4262
    %4327 = vmatprep.mubr.f32.mxu0 %v4230
    %4328 = vmatmul.mubr.f32.gmra.mrb[0].mxu0 %v4229
    %v4329 = vpop.f32.mrb[0].mxu0
    %v4330 = vadd.f32 0.0, %v4329
    %v4331 = vpop.f32.mrb[0].mxu0
    %4332 = vdwg.mxu0
    %v4333 = vld [vmem:[#allocation26] sm:$0x3]
    %v4335 = vlaneseq
    %v4336 = vshrl.u32 %v4335, 7
    %v4337 = vsub.s32 0, %v4336
    %v4338 = vrot.slane %v4333, %v4337
    %v4339 = vlaneseq
    %v4340 = vshrl.u32 %v4339, 7
    %v4341 = vsub.s32 1, %v4340
    %v4342 = vrot.slane %v4333, %v4341
    %vm4343 = vcmask 7168
    %v4345 = vsel %vm4343, %v4330, 0
    %vm4347 = vcmask 1040384
    %v4348 = vsel %vm4347, %v4338, 0
    %v4350 = vsel %vm4347, %v4342, 0
    %4352 = vmatprep.subr.mxu0 %v4350
    %4353 = vmatpush1.msra.mxu0 %v4348
    %4354 = vmatprep.subr.mxu0 0.0
    %4355 = vmatpush1.msra.mxu0 0.0
    %4356 = vmatprep.subr.mxu0 0.0
    %4357 = vmatpush1.msra.mxu0 0.0
    %4358 = vmatprep.subr.mxu0 0.0
    %4359 = vmatpush1.msra.mxu0 0.0
    %4360 = vmatprep.subr.mxu0 0.0
    %4361 = vmatpush1.msra.mxu0 0.0
    %4362 = vmatprep.subr.mxu0 0.0
    %4363 = vmatpush1.msra.mxu0 0.0
    %4364 = vmatprep.subr.mxu0 0.0
    %4365 = vmatpush1.msra.mxu0 0.0
    %4366 = vmatprep.subr.mxu0 0.0
    %4367 = vmatpush1.msra.mxu0 0.0
    %4368 = vmatprep.subr.mxu0 0.0
    %4369 = vmatpush1.msra.mxu0 0.0
    %4370 = vmatprep.subr.mxu0 0.0
    %4371 = vmatpush1.msra.mxu0 0.0
    %4372 = vmatprep.subr.mxu0 0.0
    %4373 = vmatpush1.msra.mxu0 0.0
    %4374 = vmatprep.subr.mxu0 0.0
    %4375 = vmatpush1.msra.mxu0 0.0
    %4376 = vmatprep.subr.mxu0 0.0
    %4377 = vmatpush1.msra.mxu0 0.0
    %4378 = vmatprep.subr.mxu0 0.0
    %4379 = vmatpush1.msra.mxu0 0.0
    %4380 = vmatprep.subr.mxu0 0.0
    %4381 = vmatpush1.msra.mxu0 0.0
    %4382 = vmatprep.subr.mxu0 0.0
    %4383 = vmatpush1.msra.mxu0 0.0
    %4384 = vmatprep.subr.mxu0 0.0
    %4385 = vmatpush1.msra.mxu0 0.0
    %4386 = vmatprep.subr.mxu0 0.0
    %4387 = vmatpush1.msra.mxu0 0.0
    %4388 = vmatprep.subr.mxu0 0.0
    %4389 = vmatpush1.msra.mxu0 0.0
    %4390 = vmatprep.subr.mxu0 0.0
    %4391 = vmatpush1.msra.mxu0 0.0
    %4392 = vmatprep.subr.mxu0 0.0
    %4393 = vmatpush1.msra.mxu0 0.0
    %4394 = vmatprep.subr.mxu0 0.0
    %4395 = vmatpush1.msra.mxu0 0.0
    %4396 = vmatprep.subr.mxu0 0.0
    %4397 = vmatpush1.msra.mxu0 0.0
    %4398 = vmatprep.subr.mxu0 0.0
    %4399 = vmatpush1.msra.mxu0 0.0
    %4400 = vmatprep.subr.mxu0 0.0
    %4401 = vmatpush1.msra.mxu0 0.0
    %4402 = vmatprep.subr.mxu0 0.0
    %4403 = vmatpush1.msra.mxu0 0.0
    %4404 = vmatprep.subr.mxu0 0.0
    %4405 = vmatpush1.msra.mxu0 0.0
    %4406 = vmatprep.subr.mxu0 0.0
    %4407 = vmatpush1.msra.mxu0 0.0
    %4408 = vmatprep.subr.mxu0 0.0
    %4409 = vmatpush1.msra.mxu0 0.0
    %4410 = vmatprep.subr.mxu0 0.0
    %4411 = vmatpush1.msra.mxu0 0.0
    %4412 = vmatprep.subr.mxu0 0.0
    %4413 = vmatpush1.msra.mxu0 0.0
    %4414 = vmatprep.subr.mxu0 0.0
    %4415 = vmatpush1.msra.mxu0 0.0
    %4416 = vmatprep.mubr.f32.mxu0 0.0
    %4417 = vmatmul.mubr.f32.gmra.mrb[0].mxu0 %v4345
    %v4418 = vpop.f32.mrb[0].mxu0
    %v4419 = vadd.f32 0.0, %v4418
    %v4420 = vpop.f32.mrb[0].mxu0
    %v4421 = vadd.f32 0.0, %v4420
    %4422 = vdwg.mxu0
    %v4423 = vmul.f32 %v4419, %v4419
    %v4424 = vmul.f32 %v4421, %v4421
    %v4427 = vrot.slane %v4423, 7
    %v4428 = vrot.slane %v4424, 7
    %v4431 = vsub.f32 %v4419, %v4427
    %v4432 = vsub.f32 %v4421, %v4428
    %v4433 = vlaneseq
    %v4434 = vshrl.u32 %v4433, 7
    %v4435 = vsub.s32 0, %v4434
    %v4436 = vrot.slane %v4419, %v4435
    %v4437 = vlaneseq
    %v4438 = vshrl.u32 %v4437, 7
    %v4439 = vsub.s32 0, %v4438
    %v4440 = vrot.slane %v4421, %v4439
    %v4441 = vsub.f32 %v4189, %v4436
    %v4442 = vsub.f32 %v4191, %v4440
    %v4443 = vadd.f32 %v4431, 1e-05
    %v4444 = vadd.f32 %v4432, 1e-05
    %v4445 = vrsqrt.pop %v4443
    %v4446 = vrsqrt.pop %v4444
    %v4447 = vlaneseq
    %v4448 = vshrl.u32 %v4447, 7
    %v4449 = vsub.s32 1, %v4448
    %v4450 = vrot.slane %v4445, %v4449
    %v4451 = vlaneseq
    %v4452 = vshrl.u32 %v4451, 7
    %v4453 = vsub.s32 1, %v4452
    %v4454 = vrot.slane %v4446, %v4453
    %v4455 = vmul.f32 %v4441, %v4450
    %v4456 = vmul.f32 %v4442, %v4454
    %v4457 = vtanh.pop %v4455
    %v4458 = vtanh.pop %v4456
    %v4461 = vcombine.low %v4457, %v4458
    %v4463 = vunpack.c.l.s4 1983009808
    %v4464 = vunpack.c.0.s8 %v4463
    %v4465 = vlaneseq
    %v4466 = vshrl.u32 %v4465, 7
    %v4467 = vsub.s32 %v4464, %v4466
    %v4468 = vrot.slane %v4461, %v4467
    %4470 = vst [vmem:[%s26] sm:$0xf] %v4468
    // Predicated region
    $region224: #{forward.1} parent=1 // pred_check
      _
    $region225: #{forward.1} parent=1 // pred_check_branch
      %4472 = sbr.rel (0) target = $region227
    $region226: #{forward.1} parent=1 // pred_region
      _
    $region227: #{forward.1} parent=1 // pred_fallthru
      _
    // Predicated region
    $region228: #{forward.1} parent=1 // pred_check
      _
    $region229: #{forward.1} parent=1 // pred_check_branch
      %4474 = sbr.rel (0) target = $region231
    $region230: #{forward.1} parent=1 // pred_region
      _
    $region231: #{forward.1} parent=1 // pred_fallthru
      _
    // Predicated region
    $region232: #{forward.1} parent=1 // pred_check
      _
    $region233: #{forward.1} parent=1 // pred_check_branch
      %4476 = sbr.rel (0) target = $region235
    $region234: #{forward.1} parent=1 // pred_region
      _
    $region235: #{forward.1} parent=1 // pred_fallthru
      _
    // Predicated region
    $region236: #{forward.1} parent=1 // pred_check
      _
    $region237: #{forward.1} parent=1 // pred_check_branch
      %4478 = sbr.rel (0) target = $region239
    $region238: #{forward.1} parent=1 // pred_region
      _
    $region239: #{forward.1} parent=1 // pred_fallthru
      _
    %4479 = vsyncpa [#allocation7], 1
    %4480 = vsyncpa [#allocation9], 1
    %4481 = vsyncpa [#allocation12], 1
    %4482 = vsyncpa [#allocation15], 1
    %4483 = vsyncpa [#allocation18], 1
    %4484 = vsyncpa [#allocation21], 1
    %4485 = vsyncpa [#allocation24], 1
    %4486 = vsyncpa [#allocation27], 1
  %4487 = vsyncmov [#allocation5]
  %s4488 = vpop.sfrf %4487
  %p4489 = scmp.eq.s32.totalorder %s4488, 0
  %p4490 = pneg %p4489
  %4492 = shalt.err (%p4490)
  %s4493 = scalar_lea.sflag [#allocation5], 1
  %4494 = vsyncmov %s4493
  %s4495 = vpop.sfrf %4494
  %p4496 = scmp.eq.s32.totalorder %s4495, 0
  %p4497 = pneg %p4496
  %4499 = shalt.err (%p4497)
  %s4500 = scalar_lea.sflag [#allocation5], 2
  %4501 = vsyncmov %s4500
  %s4502 = vpop.sfrf %4501
  %p4503 = scmp.eq.s32.totalorder %s4502, 0
  %p4504 = pneg %p4503
  %4506 = shalt.err (%p4504)

</llo_original>
